<compile_context>
chip_gen: v5e
topology: v5e:2x2
jax: 0.10.0
libtpu: 0.0.40
codegen_flags: <defaults>
</compile_context>

<pallas_src>
import jax
import jax.numpy as jnp
from jax.experimental import pallas as pl
from jax.experimental.pallas import tpu as pltpu


def mlp_kernel(x_ref, w1_ref, b1_ref, w2_ref, b2_ref, o_ref):
    # Hidden layer: recomputed every tile (at small B this is ~1 MFLOP, fully
    # hidden under the W2 tile DMA).  No cross-step state => 'parallel' grid.
    x = x_ref[...].astype(w1_ref.dtype)
    h = jnp.dot(x, w1_ref[...], preferred_element_type=jnp.float32)
    h = jnp.maximum(h + b1_ref[...], 0.0)                  # bias add / ReLU in f32

    # Second Linear on the current output-column tile (lane-dense store).
    o = jnp.dot(h.astype(w2_ref.dtype), w2_ref[...],
                preferred_element_type=jnp.float32) + b2_ref[...]
    o_ref[...] = o.astype(o_ref.dtype)


def prepare_params(params, output_channels, output_length, weight_dtype=jnp.bfloat16):
    """One-time prep (outside the per-call path, so it never costs HBM traffic
    at inference time): pad W2/b2 columns to a lane-aligned width, pick the
    column tile, and cast the streamed weights to bf16."""
    out_dim = output_channels * output_length
    hidden = params["w1_t"].shape[1]
    assert params["w2_t"].shape == (hidden, out_dim)

    # Pad columns up to a multiple of 128 (handles the module's default
    # C*L = 8000), then pick the largest column tile <= 1024 (<= ~2 MiB/block
    # in bf16, safe for v7x's smaller VMEM) that divides the padded width.
    padded = ((out_dim + 127) // 128) * 128
    n128 = padded // 128
    tile_n = 128 * max(d for d in range(1, 9) if n128 % d == 0)
    pad = padded - out_dim

    return {
        "w1_t": params["w1_t"].astype(weight_dtype),
        "b1": params["b1"].astype(jnp.float32),
        "w2_t": jnp.pad(params["w2_t"], ((0, 0), (0, pad))).astype(weight_dtype),
        "b2": jnp.pad(params["b2"], ((0, 0), (0, pad))).astype(jnp.float32),
        "out_dim": out_dim,
        "tile_n": tile_n,
    }


def describe_resize(x, prep, output_channels, output_length):
    """x: (B, D_in) float32. Returns (B, output_channels, output_length) f32."""
    B, D_in = x.shape
    w1, b1, w2, b2 = prep["w1_t"], prep["b1"], prep["w2_t"], prep["b2"]
    H = w1.shape[1]
    padded = w2.shape[1]
    out_dim = prep["out_dim"]
    tile_n = prep["tile_n"]
    n_tiles = padded // tile_n

    # Advisory cost hint: memory-bound (streams ~|W1|+|W2| bytes, tiny FLOPs).
    nbytes = lambda a: a.size * a.dtype.itemsize
    cost = pl.CostEstimate(
        flops=2 * B * H * (D_in * n_tiles + padded),
        transcendentals=0,
        bytes_accessed=nbytes(x) + nbytes(w1) + nbytes(b1) + nbytes(w2)
        + nbytes(b2) + B * padded * 4,
    )

    # NOTE: if B ever grows past toy sizes, add a 'parallel' batch grid axis
    # with 128/256-row tiles; at B=2 the kernel is HBM-bound, so a single row
    # block is intentional.
    flat = pl.pallas_call(
        mlp_kernel,
        out_shape=jax.ShapeDtypeStruct((B, padded), jnp.float32),
        grid_spec=pltpu.PrefetchScalarGridSpec(
            num_scalar_prefetch=0,
            grid=(n_tiles,),
            in_specs=[
                # Constant-index (resident) inputs: fetched once.  With bf16
                # weights the whole double-buffered working set is ~7 MiB —
                # under every generation's default scoped-VMEM limit — so we
                # keep default buffering for portability (pl.Buffered(1) here /
                # pl.Buffered(3) on the W2 stream is an optional further trim).
                pl.BlockSpec((B, D_in), lambda j: (0, 0)),     # x
                pl.BlockSpec((D_in, H), lambda j: (0, 0)),     # W1^T
                pl.BlockSpec((1, H), lambda j: (0, 0)),        # b1
                # Streaming column tiles (advance with the grid).
                pl.BlockSpec((H, tile_n), lambda j: (0, j)),   # W2^T tile
                pl.BlockSpec((1, tile_n), lambda j: (0, j)),   # b2 tile
            ],
            out_specs=pl.BlockSpec((B, tile_n), lambda j: (0, j)),
        ),
        compiler_params=pltpu.CompilerParams(
            # Output tiles are independent -> megacore-shardable on v7x.
            dimension_semantics=("parallel",),
            vmem_limit_bytes=32 * 1024 * 1024,
        ),
        cost_estimate=cost,
    )(x, w1, b1, w2, b2)

    # Drop the column padding, then the module's .view(-1, C, L): free reshape.
    return flat[:, :out_dim].reshape(B, output_channels, output_length)


def reference(x, params, output_channels, output_length):
    """Pure-JAX f32 mirror of the PyTorch forward pass."""
    h = jnp.maximum(x @ params["w1_t"] + params["b1"], 0.0)
    y = h @ params["w2_t"] + params["b2"]
    return y.reshape(-1, output_channels, output_length)


def init_params(key, input_dim, hidden, out_dim):
    k1, k2, k3, k4 = jax.random.split(key, 4)
    f32 = jnp.float32
    return {
        # Linear weights stored pre-transposed as (in, out): y = x @ W_t + b.
        "w1_t": jax.random.normal(k1, (input_dim, hidden), f32) / jnp.sqrt(f32(input_dim)),
        "b1": jax.random.normal(k2, (1, hidden), f32) * 0.01,
        "w2_t": jax.random.normal(k3, (hidden, out_dim), f32) / jnp.sqrt(f32(hidden)),
        "b2": jax.random.normal(k4, (1, out_dim), f32) * 0.01,
    }


if __name__ == "__main__":
    B = 2
    input_dim = 256          # small stand-in for the default 768
    hidden = 1024            # hard-coded in the PyTorch module
    output_channels = 8
    output_length = 250      # small stand-in for 1000; C*L = 2000 is NOT a
                             # multiple of 128 -> exercises the pad/slice path
                             # and a multi-tile grid (2048 padded / 1024 tile).
    out_dim = output_channels * output_length

    key = jax.random.PRNGKey(0)
    kx, kp = jax.random.split(key)
    x = jax.random.normal(kx, (B, input_dim), jnp.float32)
    params = init_params(kp, input_dim, hidden, out_dim)
    prep = prepare_params(params, output_channels, output_length)

    out = jax.block_until_ready(
        describe_resize(x, prep, output_channels, output_length))
    ref = jax.block_until_ready(
        reference(x, params, output_channels, output_length))

    assert out.shape == (B, output_channels, output_length)
    # bf16 weight streaming vs the f32 reference: allow bf16-level tolerance.
    assert jnp.allclose(out, ref, rtol=3e-2, atol=3e-2), float(jnp.max(jnp.abs(out - ref)))
    print("KERNEL_OK")
</pallas_src>

<mosaic_0001>
module attributes {stable_mosaic.version = 11 : i64} {
  func.func @mlp_kernel(%arg0: i32, %arg1: memref<2x256xf32, #tpu.memory_space<vmem>>, %arg2: memref<256x1024xbf16, #tpu.memory_space<vmem>>, %arg3: memref<1x1024xf32, #tpu.memory_space<vmem>>, %arg4: memref<1024x1024xbf16, #tpu.memory_space<vmem>>, %arg5: memref<1x1024xf32, #tpu.memory_space<vmem>>, %arg6: memref<2x1024xf32, #tpu.memory_space<vmem>>) attributes {dimension_semantics = [#tpu.dimension_semantics<parallel>], iteration_bounds = array<i64: 2>, scalar_prefetch = 0 : i64, scratch_operands = 0 : i64, tpu.core_type = #tpu.core_type<tc>, window_params = [{pipeline_mode = #tpu.pipeline_mode<synchronous>, transform_indices = @transform_0, window_bounds = array<i64: 2, 256>}, {pipeline_mode = #tpu.pipeline_mode<synchronous>, transform_indices = @transform_1, window_bounds = array<i64: 256, 1024>}, {pipeline_mode = #tpu.pipeline_mode<synchronous>, transform_indices = @transform_2, window_bounds = array<i64: 1, 1024>}, {transform_indices = @transform_3, window_bounds = array<i64: 1024, 1024>}, {transform_indices = @transform_4, window_bounds = array<i64: 1, 1024>}, {transform_indices = @transform_5, window_bounds = array<i64: 2, 1024>}]} {
    %c0 = arith.constant 0 : index
    %c0_0 = arith.constant 0 : index
    %0 = vector.load %arg1[%c0, %c0_0] : memref<2x256xf32, #tpu.memory_space<vmem>>, vector<2x256xf32>
    %1 = arith.truncf %0 : vector<2x256xf32> to vector<2x256xbf16>
    %c0_1 = arith.constant 0 : index
    %c0_2 = arith.constant 0 : index
    %2 = vector.load %arg2[%c0_1, %c0_2] : memref<256x1024xbf16, #tpu.memory_space<vmem>>, vector<256x1024xbf16>
    %cst = arith.constant dense<0.000000e+00> : vector<2x1024xf32>
    %3 = tpu.matmul %1, %2, %cst {dimension_numbers = #tpu.dot_dimension_numbers<[1], [0], [0], [1], [0, 0, 1, 1], [], []>} : vector<2x256xbf16>, vector<256x1024xbf16>, vector<2x1024xf32> -> vector<2x1024xf32>
    %c0_3 = arith.constant 0 : index
    %c0_4 = arith.constant 0 : index
    %4 = vector.load %arg3[%c0_3, %c0_4] : memref<1x1024xf32, #tpu.memory_space<vmem>>, vector<1x1024xf32>
    %5 = vector.broadcast %4 : vector<1x1024xf32> to vector<2x1024xf32>
    %6 = arith.addf %3, %5 : vector<2x1024xf32>
    %cst_5 = arith.constant 0.000000e+00 : f32
    %7 = vector.broadcast %cst_5 : f32 to vector<2x1024xf32>
    %8 = arith.maximumf %6, %7 : vector<2x1024xf32>
    %9 = arith.truncf %8 : vector<2x1024xf32> to vector<2x1024xbf16>
    %c0_6 = arith.constant 0 : index
    %c0_7 = arith.constant 0 : index
    %10 = vector.load %arg4[%c0_6, %c0_7] : memref<1024x1024xbf16, #tpu.memory_space<vmem>>, vector<1024x1024xbf16>
    %cst_8 = arith.constant dense<0.000000e+00> : vector<2x1024xf32>
    %11 = tpu.matmul %9, %10, %cst_8 {dimension_numbers = #tpu.dot_dimension_numbers<[1], [0], [0], [1], [0, 0, 1, 1], [], []>} : vector<2x1024xbf16>, vector<1024x1024xbf16>, vector<2x1024xf32> -> vector<2x1024xf32>
    %c0_9 = arith.constant 0 : index
    %c0_10 = arith.constant 0 : index
    %12 = vector.load %arg5[%c0_9, %c0_10] : memref<1x1024xf32, #tpu.memory_space<vmem>>, vector<1x1024xf32>
    %13 = vector.broadcast %12 : vector<1x1024xf32> to vector<2x1024xf32>
    %14 = arith.addf %11, %13 : vector<2x1024xf32>
    %c0_11 = arith.constant 0 : index
    %c0_12 = arith.constant 0 : index
    %15 = vector.load %arg6[%c0_11, %c0_12] : memref<2x1024xf32, #tpu.memory_space<vmem>>, vector<2x1024xf32>
    tpu.vector_store %arg6[%c0_11, %c0_12], %14 {strides = array<i32>} : memref<2x1024xf32, #tpu.memory_space<vmem>>, vector<2x1024xf32>,
    return
  }
  func.func @transform_0(%arg0: i32) -> (i32, i32) {
    %c0_i32 = arith.constant 0 : i32
    %c0_i32_0 = arith.constant 0 : i32
    %c0_i32_1 = arith.constant 0 : i32
    return %c0_i32, %c0_i32_0 : i32, i32
  }
  func.func @transform_1(%arg0: i32) -> (i32, i32) {
    %c0_i32 = arith.constant 0 : i32
    %c0_i32_0 = arith.constant 0 : i32
    %c0_i32_1 = arith.constant 0 : i32
    return %c0_i32, %c0_i32_0 : i32, i32
  }
  func.func @transform_2(%arg0: i32) -> (i32, i32) {
    %c0_i32 = arith.constant 0 : i32
    %c0_i32_0 = arith.constant 0 : i32
    %c0_i32_1 = arith.constant 0 : i32
    return %c0_i32, %c0_i32_0 : i32, i32
  }
  func.func @transform_3(%arg0: i32) -> (i32, i32) {
    %c0_i32 = arith.constant 0 : i32
    %c0_i32_0 = arith.constant 0 : i32
    return %c0_i32, %arg0 : i32, i32
  }
  func.func @transform_4(%arg0: i32) -> (i32, i32) {
    %c0_i32 = arith.constant 0 : i32
    %c0_i32_0 = arith.constant 0 : i32
    return %c0_i32, %arg0 : i32, i32
  }
  func.func @transform_5(%arg0: i32) -> (i32, i32) {
    %c0_i32 = arith.constant 0 : i32
    %c0_i32_0 = arith.constant 0 : i32
    return %c0_i32, %arg0 : i32, i32
  }
}

</mosaic_0001>

<llo_original>
// kernel: tpu_custom_call.1
$region0: #{tpu_custom_call.1}
  #allocation0 [shape = 'u32[]', space=smem, size = 0x4, offset = 0x4, fixed_abs, tag = 'smem constant byte address 0x4 - core index']
  #allocation1 [shape = 'u32[72,128]{1,0:T(1,128)}', space=vmem, size = 0x9000, scoped, tag = 'internal scratch']
  %s0 = inlined_call_operand.hbm [shape: f32[2,256], index: 0, kind: input, shape index: {}]
  %s1 = inlined_call_operand.hbm [shape: bf16[256,1024], index: 1, kind: input, shape index: {}]
  %s2 = inlined_call_operand.hbm [shape: f32[1,1024], index: 2, kind: input, shape index: {}]
  %s3 = inlined_call_operand.hbm [shape: bf16[1024,2048], index: 3, kind: input, shape index: {}]
  %s4 = inlined_call_operand.hbm [shape: f32[1,2048], index: 4, kind: input, shape index: {}]
  %s5 = inlined_call_operand.hbm [shape: f32[2,2048], index: 5, kind: output, shape index: {}]
  %s6 = sld [smem:[#allocation0]]
  $region73: #{tpu_custom_call.1} parent=0
    _
  %s8 = ssub.s32 1, %s6
  %s9 = scalar_select 0, %s8, %s6
  $region1: #{tpu_custom_call.1} parent=0
    #allocation2 [shape = 'u8[2048]{0}', space=vmem, size = 0x800, scoped, tag = 'input window, operand 0, single buffered']
    #allocation3 [shape = 's32[2]{0}', space=sflag, size = 0x8, scoped, tag = 'scoped memory for tpu_custom_call.1']
    #allocation4 [shape = 's32[2]{0}', space=sflag, size = 0x8, scoped, tag = 'scoped memory for tpu_custom_call.1']
    #allocation5 [shape = 'u8[524288]{0}', space=vmem, size = 0x80000, scoped, tag = 'input window, operand 1, single buffered']
    #allocation6 [shape = 's32[1]{0}', space=sflag, size = 0x4, scoped, tag = 'scoped memory for tpu_custom_call.1']
    #allocation7 [shape = 'u8[4096]{0}', space=vmem, size = 0x1000, scoped, tag = 'input window, operand 2, single buffered']
    #allocation8 [shape = 'u8[4194304]{0}', space=vmem, size = 0x400000, scoped, tag = 'input window, operand 3']
    #allocation9 [shape = 's32[2]{0}', space=sflag, size = 0x8, scoped, tag = 'scoped memory for tpu_custom_call.1']
    #allocation10 [shape = 'u8[8192]{0}', space=vmem, size = 0x2000, scoped, tag = 'input window, operand 4']
    #allocation11 [shape = 'u8[16384]{0}', space=vmem, size = 0x4000, scoped, tag = 'output window, operand 0']
    %10 = vsyncpa [#allocation3], 0
    %11 = vsyncpa [#allocation6], 0
    %12 = vsyncpa [#allocation9], 0
    %s13 = scalar_lea.sflag [#allocation9], 1
    %14 = vsyncpa %s13, 0
    %15 = vsyncpa [#allocation4], 0
    %s16 = scalar_lea.sflag [#allocation4], 1
    %17 = vsyncpa %s16, 0
    loop: start=0, step=1, limit=4
    $region2: #{tpu_custom_call.1} parent=1 // loop_pre_header
      _
    $region3: #{tpu_custom_call.1} parent=1 // loop_header
      %s19 = sphi 0, %s23
      %p20 = scmp.ge.s32.totalorder %s19, 4
      %s27 = sphi 0, %s27
      %s29 = sphi 0, %s27
      %s30 = sphi 0, %s29
      %s44 = sphi 0, %s30
      %s48 = sphi 0, %s48
      %s50 = sphi 0, %s48
      %s51 = sphi 0, %s50
      %s65 = sphi 0, %s51
      %s69 = sphi 0, %s69
      %s71 = sphi 0, %s69
      %s72 = sphi 0, %s71
      %s86 = sphi 0, %s72
      %s92 = sphi 0, %s94
      %s95 = sphi 0, %s92
      %s96 = sphi 0, %s95
      %s112 = sphi 0, %s96
      %s118 = sphi 0, %s120
      %s121 = sphi 0, %s118
      %s122 = sphi 0, %s121
      %s138 = sphi 0, %s122
      %s144 = sphi 0, %s146
      %s147 = sphi 0, %s144
      %s148 = sphi 0, %s147
      %s164 = sphi 0, %s148
    $region4: #{tpu_custom_call.1} parent=1 // loop_header_branch
      %22 = sbr.rel (%p20) target = $region8
    $region5: #{tpu_custom_call.1} parent=1 // loop_body
      %s24 = ssub.s32 %s19, 1
      %s25 = ssub.s32 %s19, 2
      %s26 = sadd.s32 %s19, 1
      %s28 = sadd.s32 %s27, 1
      %p31 = scmp.eq.s32.totalorder %s19, 1
      %p32 = scmp.ne.s32.totalorder %s27, %s29
      %p33 = scmp.eq.s32.totalorder %s19, 0
      %p34 = por %p32, %p33
      %p35 = scmp.ne.s32.totalorder %s27, %s29
      %p36 = scmp.eq.s32.totalorder %s24, 1
      %p37 = por %p35, %p36
      %p38 = scmp.ne.s32.totalorder %s29, %s30
      %p39 = scmp.eq.s32.totalorder %s24, 0
      %p40 = por %p38, %p39
      %p41 = scmp.ne.s32.totalorder %s29, %s30
      %p42 = scmp.eq.s32.totalorder %s25, 1
      %p43 = por %p41, %p42
      %p45 = scmp.ne.s32.totalorder %s30, %s44
      %p46 = scmp.eq.s32.totalorder %s25, 0
      %p47 = por %p45, %p46
      %s49 = sadd.s32 %s48, 1
      %p52 = scmp.eq.s32.totalorder %s19, 1
      %p53 = scmp.ne.s32.totalorder %s48, %s50
      %p54 = scmp.eq.s32.totalorder %s19, 0
      %p55 = por %p53, %p54
      %p56 = scmp.ne.s32.totalorder %s48, %s50
      %p57 = scmp.eq.s32.totalorder %s24, 1
      %p58 = por %p56, %p57
      %p59 = scmp.ne.s32.totalorder %s50, %s51
      %p60 = scmp.eq.s32.totalorder %s24, 0
      %p61 = por %p59, %p60
      %p62 = scmp.ne.s32.totalorder %s50, %s51
      %p63 = scmp.eq.s32.totalorder %s25, 1
      %p64 = por %p62, %p63
      %p66 = scmp.ne.s32.totalorder %s51, %s65
      %p67 = scmp.eq.s32.totalorder %s25, 0
      %p68 = por %p66, %p67
      %s70 = sadd.s32 %s69, 1
      %p73 = scmp.eq.s32.totalorder %s19, 1
      %p74 = scmp.ne.s32.totalorder %s69, %s71
      %p75 = scmp.eq.s32.totalorder %s19, 0
      %p76 = por %p74, %p75
      %p77 = scmp.ne.s32.totalorder %s69, %s71
      %p78 = scmp.eq.s32.totalorder %s24, 1
      %p79 = por %p77, %p78
      %p80 = scmp.ne.s32.totalorder %s71, %s72
      %p81 = scmp.eq.s32.totalorder %s24, 0
      %p82 = por %p80, %p81
      %p83 = scmp.ne.s32.totalorder %s71, %s72
      %p84 = scmp.eq.s32.totalorder %s25, 1
      %p85 = por %p83, %p84
      %p87 = scmp.ne.s32.totalorder %s72, %s86
      %p88 = scmp.eq.s32.totalorder %s25, 0
      %p89 = por %p87, %p88
      %s90 = ssub.s32 %s19, %s26
      %p91 = scmp.eq.s32.totalorder %s90, 0
      %s93 = sadd.s32 %s92, 1
      %s94 = scalar_select %p91, %s92, %s93
      %p97 = pneg %p91
      %p98 = scmp.eq.s32.totalorder %s19, 1
      %p99 = por %p97, %p98
      %p100 = scmp.ne.s32.totalorder %s92, %s95
      %p101 = scmp.eq.s32.totalorder %s19, 0
      %p102 = por %p100, %p101
      %p103 = scmp.ne.s32.totalorder %s92, %s95
      %p104 = scmp.eq.s32.totalorder %s24, 1
      %p105 = por %p103, %p104
      %p106 = scmp.ne.s32.totalorder %s95, %s96
      %p107 = scmp.eq.s32.totalorder %s24, 0
      %p108 = por %p106, %p107
      %p109 = scmp.ne.s32.totalorder %s95, %s96
      %p110 = scmp.eq.s32.totalorder %s25, 1
      %p111 = por %p109, %p110
      %p113 = scmp.ne.s32.totalorder %s96, %s112
      %p114 = scmp.eq.s32.totalorder %s25, 0
      %p115 = por %p113, %p114
      %s116 = ssub.s32 %s19, %s26
      %p117 = scmp.eq.s32.totalorder %s116, 0
      %s119 = sadd.s32 %s118, 1
      %s120 = scalar_select %p117, %s118, %s119
      %p123 = pneg %p117
      %p124 = scmp.eq.s32.totalorder %s19, 1
      %p125 = por %p123, %p124
      %p126 = scmp.ne.s32.totalorder %s118, %s121
      %p127 = scmp.eq.s32.totalorder %s19, 0
      %p128 = por %p126, %p127
      %p129 = scmp.ne.s32.totalorder %s118, %s121
      %p130 = scmp.eq.s32.totalorder %s24, 1
      %p131 = por %p129, %p130
      %p132 = scmp.ne.s32.totalorder %s121, %s122
      %p133 = scmp.eq.s32.totalorder %s24, 0
      %p134 = por %p132, %p133
      %p135 = scmp.ne.s32.totalorder %s121, %s122
      %p136 = scmp.eq.s32.totalorder %s25, 1
      %p137 = por %p135, %p136
      %p139 = scmp.ne.s32.totalorder %s122, %s138
      %p140 = scmp.eq.s32.totalorder %s25, 0
      %p141 = por %p139, %p140
      %s142 = ssub.s32 %s19, %s26
      %p143 = scmp.eq.s32.totalorder %s142, 0
      %s145 = sadd.s32 %s144, 1
      %s146 = scalar_select %p143, %s144, %s145
      %p149 = pneg %p143
      %p150 = scmp.eq.s32.totalorder %s19, 1
      %p151 = por %p149, %p150
      %p152 = scmp.ne.s32.totalorder %s144, %s147
      %p153 = scmp.eq.s32.totalorder %s19, 0
      %p154 = por %p152, %p153
      %p155 = scmp.ne.s32.totalorder %s144, %s147
      %p156 = scmp.eq.s32.totalorder %s24, 1
      %p157 = por %p155, %p156
      %p158 = scmp.ne.s32.totalorder %s147, %s148
      %p159 = scmp.eq.s32.totalorder %s24, 0
      %p160 = por %p158, %p159
      %p161 = scmp.ne.s32.totalorder %s147, %s148
      %p162 = scmp.eq.s32.totalorder %s25, 1
      %p163 = por %p161, %p162
      %p165 = scmp.ne.s32.totalorder %s148, %s164
      %p166 = scmp.eq.s32.totalorder %s25, 0
      %p167 = por %p165, %p166
      %p168 = scmp.le.s32.totalorder 1, %s19
      %p169 = scmp.lt.s32.totalorder %s19, 3
      %p170 = pnand %p168, %p169
      %p171 = pneg %p170
      // Predicated region
      $region9: #{tpu_custom_call.1} parent=5 // pred_check
        _
      $region10: #{tpu_custom_call.1} parent=5 // pred_check_branch
        %173 = sbr.rel (%p170) target = $region12
      $region11: #{tpu_custom_call.1} parent=5 // pred_region
        %s174 = ssub.s32 %s19, 1
        // Predicated region
        $region13: #{tpu_custom_call.1} parent=11 // pred_check
          %p175 = pneg %p40
        $region14: #{tpu_custom_call.1} parent=11 // pred_check_branch
          %177 = sbr.rel (%p175) target = $region16
        $region15: #{tpu_custom_call.1} parent=11 // pred_region
          %179 = vsyncadd [#allocation3], 0
          %s181 = sshll.u32 %s0, 4
          %s182 = int_to_ptr.hbm [resolvable:$true] %s181
          %s183 = sshll.u32 [#allocation2], 4
          %s184 = int_to_ptr.vmem [resolvable:$true] %s183
          %186 = dma.hbm_to_vmem [thread:$0]  %s182, 64, %s184, [#allocation3]
        $region16: #{tpu_custom_call.1} parent=11 // pred_fallthru
          _
        // Predicated region
        $region17: #{tpu_custom_call.1} parent=11 // pred_check
          %p187 = pneg %p61
        $region18: #{tpu_custom_call.1} parent=11 // pred_check_branch
          %189 = sbr.rel (%p187) target = $region20
        $region19: #{tpu_custom_call.1} parent=11 // pred_region
          %191 = vsyncadd [#allocation6], 0
          %s192 = sshll.u32 %s1, 4
          %s193 = int_to_ptr.hbm [resolvable:$true] %s192
          %s194 = sshll.u32 [#allocation5], 4
          %s195 = int_to_ptr.vmem [resolvable:$true] %s194
          %200 = dma.hbm_to_vmem [thread:$0]  %s193, 16384, %s195, [#allocation6], 512, 512, 32
        $region20: #{tpu_custom_call.1} parent=11 // pred_fallthru
          _
        // Predicated region
        $region21: #{tpu_custom_call.1} parent=11 // pred_check
          %p201 = pneg %p82
        $region22: #{tpu_custom_call.1} parent=11 // pred_check_branch
          %203 = sbr.rel (%p201) target = $region24
        $region23: #{tpu_custom_call.1} parent=11 // pred_region
          %205 = vsyncadd [#allocation6], 0
          %s207 = sshll.u32 %s2, 4
          %s208 = int_to_ptr.hbm [resolvable:$true] %s207
          %s209 = sshll.u32 [#allocation7], 4
          %s210 = int_to_ptr.vmem [resolvable:$true] %s209
          %212 = dma.hbm_to_vmem [thread:$0]  %s208, 128, %s210, [#allocation6]
        $region24: #{tpu_custom_call.1} parent=11 // pred_fallthru
          _
      $region12: #{tpu_custom_call.1} parent=5 // pred_fallthru
        _
      %p213 = scmp.lt.s32.totalorder %s19, 2
      // Predicated region
      $region25: #{tpu_custom_call.1} parent=5 // pred_check
        %p214 = pneg %p213
      $region26: #{tpu_custom_call.1} parent=5 // pred_check_branch
        %216 = sbr.rel (%p214) target = $region28
      $region27: #{tpu_custom_call.1} parent=5 // pred_region
        // Predicated region
        $region29: #{tpu_custom_call.1} parent=27 // pred_check
          %p217 = pneg %p102
        $region30: #{tpu_custom_call.1} parent=27 // pred_check_branch
          %219 = sbr.rel (%p217) target = $region32
        $region31: #{tpu_custom_call.1} parent=27 // pred_region
          %s220 = sand.u32 %s19, 1
          %s221 = scalar_lea.sflag [#allocation9], %s220
          %s222 = sand.u32 %s92, 1
          %s223 = smul.addr %s222, 4096
          %s224 = scalar_lea.vmem [#allocation8], %s223
          %s225 = smul.u32 8, %s19
          %227 = vsyncadd %s221, 0
          %s228 = smul.addr %s225, 4
          %s229 = scalar_lea.hbm %s3, %s228
          %s230 = sshll.u32 %s229, 4
          %s231 = int_to_ptr.hbm [resolvable:$true] %s230
          %s232 = sshll.u32 %s224, 4
          %s233 = int_to_ptr.vmem [resolvable:$true] %s232
          %238 = dma.hbm_to_vmem [thread:$0]  %s231, 65536, %s233, %s221, 1024, 512, 32
        $region32: #{tpu_custom_call.1} parent=27 // pred_fallthru
          _
        // Predicated region
        $region33: #{tpu_custom_call.1} parent=27 // pred_check
          %p239 = pneg %p128
        $region34: #{tpu_custom_call.1} parent=27 // pred_check_branch
          %241 = sbr.rel (%p239) target = $region36
        $region35: #{tpu_custom_call.1} parent=27 // pred_region
          %s242 = sand.u32 %s19, 1
          %s243 = scalar_lea.sflag [#allocation9], %s242
          %s244 = sand.u32 %s118, 1
          %s245 = smul.addr %s244, 8
          %s246 = scalar_lea.vmem [#allocation10], %s245
          %s247 = smul.u32 8, %s19
          %249 = vsyncadd %s243, 0
          %s250 = scalar_lea.hbm %s4, %s247
          %s252 = sshll.u32 %s250, 4
          %s253 = int_to_ptr.hbm [resolvable:$true] %s252
          %s254 = sshll.u32 %s246, 4
          %s255 = int_to_ptr.vmem [resolvable:$true] %s254
          %257 = dma.hbm_to_vmem [thread:$0]  %s253, 128, %s255, %s243
        $region36: #{tpu_custom_call.1} parent=27 // pred_fallthru
          _
      $region28: #{tpu_custom_call.1} parent=5 // pred_fallthru
        _
      %p258 = scmp.le.s32.totalorder 1, %s19
      %p259 = scmp.lt.s32.totalorder %s19, 3
      %p260 = pnand %p258, %p259
      %p261 = pneg %p260
      // Predicated region
      $region37: #{tpu_custom_call.1} parent=5 // pred_check
        _
      $region38: #{tpu_custom_call.1} parent=5 // pred_check_branch
        %263 = sbr.rel (%p260) target = $region40
      $region39: #{tpu_custom_call.1} parent=5 // pred_region
        %s264 = ssub.s32 %s19, 1
        // Predicated region
        $region41: #{tpu_custom_call.1} parent=39 // pred_check
          %p265 = pneg %p40
        $region42: #{tpu_custom_call.1} parent=39 // pred_check_branch
          %267 = sbr.rel (%p265) target = $region44
        $region43: #{tpu_custom_call.1} parent=39 // pred_region
          %269 = dma.done [#allocation3], 64
        $region44: #{tpu_custom_call.1} parent=39 // pred_fallthru
          _
        // Predicated region
        $region45: #{tpu_custom_call.1} parent=39 // pred_check
          %p270 = pneg %p61
        $region46: #{tpu_custom_call.1} parent=39 // pred_check_branch
          %272 = sbr.rel (%p270) target = $region48
        $region47: #{tpu_custom_call.1} parent=39 // pred_region
          %274 = dma.done [#allocation6], 16384
        $region48: #{tpu_custom_call.1} parent=39 // pred_fallthru
          _
        // Predicated region
        $region49: #{tpu_custom_call.1} parent=39 // pred_check
          %p275 = pneg %p82
        $region50: #{tpu_custom_call.1} parent=39 // pred_check_branch
          %277 = sbr.rel (%p275) target = $region52
        $region51: #{tpu_custom_call.1} parent=39 // pred_region
          %279 = dma.done [#allocation6], 128
        $region52: #{tpu_custom_call.1} parent=39 // pred_fallthru
          _
        %s280 = sand.u32 %s24, 1
        %s281 = scalar_lea.sflag [#allocation9], %s280
        %s282 = sand.u32 %s95, 1
        %s283 = smul.addr %s282, 4096
        %s284 = scalar_lea.vmem [#allocation8], %s283
        // Predicated region
        $region53: #{tpu_custom_call.1} parent=39 // pred_check
          %p285 = pneg %p108
        $region54: #{tpu_custom_call.1} parent=39 // pred_check_branch
          %287 = sbr.rel (%p285) target = $region56
        $region55: #{tpu_custom_call.1} parent=39 // pred_region
          %289 = dma.done %s281, 65536
        $region56: #{tpu_custom_call.1} parent=39 // pred_fallthru
          _
        %s290 = sand.u32 %s24, 1
        %s291 = scalar_lea.sflag [#allocation9], %s290
        %s292 = sand.u32 %s121, 1
        %s293 = smul.addr %s292, 8
        %s294 = scalar_lea.vmem [#allocation10], %s293
        // Predicated region
        $region57: #{tpu_custom_call.1} parent=39 // pred_check
          %p295 = pneg %p134
        $region58: #{tpu_custom_call.1} parent=39 // pred_check_branch
          %297 = sbr.rel (%p295) target = $region60
        $region59: #{tpu_custom_call.1} parent=39 // pred_region
          %299 = dma.done %s291, 128
        $region60: #{tpu_custom_call.1} parent=39 // pred_fallthru
          _
        %p300 = pneg %p40
        %p301 = pneg %p37
        %p302 = pneg %p61
        %p303 = pneg %p58
        %p304 = pneg %p82
        %p305 = pneg %p79
        %s306 = sand.u32 %s24, 1
        %s307 = scalar_lea.sflag [#allocation9], %s306
        %s308 = sand.u32 %s95, 1
        %s309 = smul.addr %s308, 4096
        %s310 = scalar_lea.vmem [#allocation8], %s309
        %p311 = pneg %p108
        %p312 = pneg %p105
        %s313 = sand.u32 %s24, 1
        %s314 = scalar_lea.sflag [#allocation9], %s313
        %s315 = sand.u32 %s121, 1
        %s316 = smul.addr %s315, 8
        %s317 = scalar_lea.vmem [#allocation10], %s316
        %p318 = pneg %p134
        %p319 = pneg %p131
        %p320 = pneg %p160
        %p321 = pneg %p157
        %s322 = sand.u32 %s147, 1
        %s323 = scalar_lea.sflag [#allocation4], %s322
        %s324 = sand.u32 %s147, 1
        %s325 = smul.addr %s324, 16
        %s326 = scalar_lea.vmem [#allocation11], %s325
        %s327 = smul.u32 8, %s24
        %s328 = smul.u32 8, %s24
        %s329 = smul.u32 8, %s24
        %v330 = vld [vmem:[#allocation2] sm:$0xf]
        %332 = vst [vmem:[#allocation1] ss:$4 sm:$0xff] %v330
        %v333 = vld.sshfl [vmem:[#allocation1] sm:$0xff pattern:$0x73625140]
        %v334 = vld.sshfl [vmem:[#allocation1 + $0x8] sm:$0xff pattern:$0x73625140]
        %v337 = vpack.c.bf16 %v333, %v333
        %v338 = vpack.c.bf16 %v334, %v334
        %v339 = vld [vmem:[#allocation5] sm:$0xff]
        %v340 = vld [vmem:[#allocation5 + $0x8] sm:$0xff]
        %v341 = vld [vmem:[#allocation5 + $0x10] sm:$0xff]
        %v342 = vld [vmem:[#allocation5 + $0x18] sm:$0xff]
        %v343 = vld [vmem:[#allocation5 + $0x20] sm:$0xff]
        %v344 = vld [vmem:[#allocation5 + $0x28] sm:$0xff]
        %v345 = vld [vmem:[#allocation5 + $0x30] sm:$0xff]
        %v346 = vld [vmem:[#allocation5 + $0x38] sm:$0xff]
        %v347 = vld [vmem:[#allocation5 + $0x40] sm:$0xff]
        %v348 = vld [vmem:[#allocation5 + $0x48] sm:$0xff]
        %v349 = vld [vmem:[#allocation5 + $0x50] sm:$0xff]
        %v350 = vld [vmem:[#allocation5 + $0x58] sm:$0xff]
        %v351 = vld [vmem:[#allocation5 + $0x60] sm:$0xff]
        %v352 = vld [vmem:[#allocation5 + $0x68] sm:$0xff]
        %v353 = vld [vmem:[#allocation5 + $0x70] sm:$0xff]
        %v354 = vld [vmem:[#allocation5 + $0x78] sm:$0xff]
        %v355 = vld [vmem:[#allocation5 + $0x80] sm:$0xff]
        %v356 = vld [vmem:[#allocation5 + $0x88] sm:$0xff]
        %v357 = vld [vmem:[#allocation5 + $0x90] sm:$0xff]
        %v358 = vld [vmem:[#allocation5 + $0x98] sm:$0xff]
        %v359 = vld [vmem:[#allocation5 + $0xa0] sm:$0xff]
        %v360 = vld [vmem:[#allocation5 + $0xa8] sm:$0xff]
        %v361 = vld [vmem:[#allocation5 + $0xb0] sm:$0xff]
        %v362 = vld [vmem:[#allocation5 + $0xb8] sm:$0xff]
        %v363 = vld [vmem:[#allocation5 + $0xc0] sm:$0xff]
        %v364 = vld [vmem:[#allocation5 + $0xc8] sm:$0xff]
        %v365 = vld [vmem:[#allocation5 + $0xd0] sm:$0xff]
        %v366 = vld [vmem:[#allocation5 + $0xd8] sm:$0xff]
        %v367 = vld [vmem:[#allocation5 + $0xe0] sm:$0xff]
        %v368 = vld [vmem:[#allocation5 + $0xe8] sm:$0xff]
        %v369 = vld [vmem:[#allocation5 + $0xf0] sm:$0xff]
        %v370 = vld [vmem:[#allocation5 + $0xf8] sm:$0xff]
        %v371 = vld [vmem:[#allocation5 + $0x100] sm:$0xff]
        %v372 = vld [vmem:[#allocation5 + $0x108] sm:$0xff]
        %v373 = vld [vmem:[#allocation5 + $0x110] sm:$0xff]
        %v374 = vld [vmem:[#allocation5 + $0x118] sm:$0xff]
        %v375 = vld [vmem:[#allocation5 + $0x120] sm:$0xff]
        %v376 = vld [vmem:[#allocation5 + $0x128] sm:$0xff]
        %v377 = vld [vmem:[#allocation5 + $0x130] sm:$0xff]
        %v378 = vld [vmem:[#allocation5 + $0x138] sm:$0xff]
        %v379 = vld [vmem:[#allocation5 + $0x140] sm:$0xff]
        %v380 = vld [vmem:[#allocation5 + $0x148] sm:$0xff]
        %v381 = vld [vmem:[#allocation5 + $0x150] sm:$0xff]
        %v382 = vld [vmem:[#allocation5 + $0x158] sm:$0xff]
        %v383 = vld [vmem:[#allocation5 + $0x160] sm:$0xff]
        %v384 = vld [vmem:[#allocation5 + $0x168] sm:$0xff]
        %v385 = vld [vmem:[#allocation5 + $0x170] sm:$0xff]
        %v386 = vld [vmem:[#allocation5 + $0x178] sm:$0xff]
        %v387 = vld [vmem:[#allocation5 + $0x180] sm:$0xff]
        %v388 = vld [vmem:[#allocation5 + $0x188] sm:$0xff]
        %v389 = vld [vmem:[#allocation5 + $0x190] sm:$0xff]
        %v390 = vld [vmem:[#allocation5 + $0x198] sm:$0xff]
        %v391 = vld [vmem:[#allocation5 + $0x1a0] sm:$0xff]
        %v392 = vld [vmem:[#allocation5 + $0x1a8] sm:$0xff]
        %v393 = vld [vmem:[#allocation5 + $0x1b0] sm:$0xff]
        %v394 = vld [vmem:[#allocation5 + $0x1b8] sm:$0xff]
        %v395 = vld [vmem:[#allocation5 + $0x1c0] sm:$0xff]
        %v396 = vld [vmem:[#allocation5 + $0x1c8] sm:$0xff]
        %v397 = vld [vmem:[#allocation5 + $0x1d0] sm:$0xff]
        %v398 = vld [vmem:[#allocation5 + $0x1d8] sm:$0xff]
        %v399 = vld [vmem:[#allocation5 + $0x1e0] sm:$0xff]
        %v400 = vld [vmem:[#allocation5 + $0x1e8] sm:$0xff]
        %v401 = vld [vmem:[#allocation5 + $0x1f0] sm:$0xff]
        %v402 = vld [vmem:[#allocation5 + $0x1f8] sm:$0xff]
        %v403 = vld [vmem:[#allocation5 + $0x200] sm:$0xff]
        %v404 = vld [vmem:[#allocation5 + $0x208] sm:$0xff]
        %v405 = vld [vmem:[#allocation5 + $0x210] sm:$0xff]
        %v406 = vld [vmem:[#allocation5 + $0x218] sm:$0xff]
        %v407 = vld [vmem:[#allocation5 + $0x220] sm:$0xff]
        %v408 = vld [vmem:[#allocation5 + $0x228] sm:$0xff]
        %v409 = vld [vmem:[#allocation5 + $0x230] sm:$0xff]
        %v410 = vld [vmem:[#allocation5 + $0x238] sm:$0xff]
        %v411 = vld [vmem:[#allocation5 + $0x240] sm:$0xff]
        %v412 = vld [vmem:[#allocation5 + $0x248] sm:$0xff]
        %v413 = vld [vmem:[#allocation5 + $0x250] sm:$0xff]
        %v414 = vld [vmem:[#allocation5 + $0x258] sm:$0xff]
        %v415 = vld [vmem:[#allocation5 + $0x260] sm:$0xff]
        %v416 = vld [vmem:[#allocation5 + $0x268] sm:$0xff]
        %v417 = vld [vmem:[#allocation5 + $0x270] sm:$0xff]
        %v418 = vld [vmem:[#allocation5 + $0x278] sm:$0xff]
        %v419 = vld [vmem:[#allocation5 + $0x280] sm:$0xff]
        %v420 = vld [vmem:[#allocation5 + $0x288] sm:$0xff]
        %v421 = vld [vmem:[#allocation5 + $0x290] sm:$0xff]
        %v422 = vld [vmem:[#allocation5 + $0x298] sm:$0xff]
        %v423 = vld [vmem:[#allocation5 + $0x2a0] sm:$0xff]
        %v424 = vld [vmem:[#allocation5 + $0x2a8] sm:$0xff]
        %v425 = vld [vmem:[#allocation5 + $0x2b0] sm:$0xff]
        %v426 = vld [vmem:[#allocation5 + $0x2b8] sm:$0xff]
        %v427 = vld [vmem:[#allocation5 + $0x2c0] sm:$0xff]
        %v428 = vld [vmem:[#allocation5 + $0x2c8] sm:$0xff]
        %v429 = vld [vmem:[#allocation5 + $0x2d0] sm:$0xff]
        %v430 = vld [vmem:[#allocation5 + $0x2d8] sm:$0xff]
        %v431 = vld [vmem:[#allocation5 + $0x2e0] sm:$0xff]
        %v432 = vld [vmem:[#allocation5 + $0x2e8] sm:$0xff]
        %v433 = vld [vmem:[#allocation5 + $0x2f0] sm:$0xff]
        %v434 = vld [vmem:[#allocation5 + $0x2f8] sm:$0xff]
        %v435 = vld [vmem:[#allocation5 + $0x300] sm:$0xff]
        %v436 = vld [vmem:[#allocation5 + $0x308] sm:$0xff]
        %v437 = vld [vmem:[#allocation5 + $0x310] sm:$0xff]
        %v438 = vld [vmem:[#allocation5 + $0x318] sm:$0xff]
        %v439 = vld [vmem:[#allocation5 + $0x320] sm:$0xff]
        %v440 = vld [vmem:[#allocation5 + $0x328] sm:$0xff]
        %v441 = vld [vmem:[#allocation5 + $0x330] sm:$0xff]
        %v442 = vld [vmem:[#allocation5 + $0x338] sm:$0xff]
        %v443 = vld [vmem:[#allocation5 + $0x340] sm:$0xff]
        %v444 = vld [vmem:[#allocation5 + $0x348] sm:$0xff]
        %v445 = vld [vmem:[#allocation5 + $0x350] sm:$0xff]
        %v446 = vld [vmem:[#allocation5 + $0x358] sm:$0xff]
        %v447 = vld [vmem:[#allocation5 + $0x360] sm:$0xff]
        %v448 = vld [vmem:[#allocation5 + $0x368] sm:$0xff]
        %v449 = vld [vmem:[#allocation5 + $0x370] sm:$0xff]
        %v450 = vld [vmem:[#allocation5 + $0x378] sm:$0xff]
        %v451 = vld [vmem:[#allocation5 + $0x380] sm:$0xff]
        %v452 = vld [vmem:[#allocation5 + $0x388] sm:$0xff]
        %v453 = vld [vmem:[#allocation5 + $0x390] sm:$0xff]
        %v454 = vld [vmem:[#allocation5 + $0x398] sm:$0xff]
        %v455 = vld [vmem:[#allocation5 + $0x3a0] sm:$0xff]
        %v456 = vld [vmem:[#allocation5 + $0x3a8] sm:$0xff]
        %v457 = vld [vmem:[#allocation5 + $0x3b0] sm:$0xff]
        %v458 = vld [vmem:[#allocation5 + $0x3b8] sm:$0xff]
        %v459 = vld [vmem:[#allocation5 + $0x3c0] sm:$0xff]
        %v460 = vld [vmem:[#allocation5 + $0x3c8] sm:$0xff]
        %v461 = vld [vmem:[#allocation5 + $0x3d0] sm:$0xff]
        %v462 = vld [vmem:[#allocation5 + $0x3d8] sm:$0xff]
        %v463 = vld [vmem:[#allocation5 + $0x3e0] sm:$0xff]
        %v464 = vld [vmem:[#allocation5 + $0x3e8] sm:$0xff]
        %v465 = vld [vmem:[#allocation5 + $0x3f0] sm:$0xff]
        %v466 = vld [vmem:[#allocation5 + $0x3f8] sm:$0xff]
        %v467 = vld [vmem:[#allocation7] sm:$0xff]
        %v469 = vperm.slane %v467, 0
        %v470 = vperm.slane %v467, 1
        %v471 = vperm.slane %v467, 2
        %v472 = vperm.slane %v467, 3
        %v473 = vperm.slane %v467, 4
        %v474 = vperm.slane %v467, 5
        %v475 = vperm.slane %v467, 6
        %v476 = vperm.slane %v467, 7
        %v613 = vunpack.c.l.b16 %v339
        %v614 = vunpack.c.h.b16 %v339
        %v615 = vunpack.c.l.b16 %v340
        %v616 = vunpack.c.h.b16 %v340
        %v617 = vunpack.c.l.b16 %v341
        %v618 = vunpack.c.h.b16 %v341
        %v619 = vunpack.c.l.b16 %v342
        %v620 = vunpack.c.h.b16 %v342
        %v621 = vunpack.c.l.b16 %v343
        %v622 = vunpack.c.h.b16 %v343
        %v623 = vunpack.c.l.b16 %v344
        %v624 = vunpack.c.h.b16 %v344
        %v625 = vunpack.c.l.b16 %v345
        %v626 = vunpack.c.h.b16 %v345
        %v627 = vunpack.c.l.b16 %v346
        %v628 = vunpack.c.h.b16 %v346
        %v629 = vunpack.c.l.b16 %v347
        %v630 = vunpack.c.h.b16 %v347
        %v631 = vunpack.c.l.b16 %v348
        %v632 = vunpack.c.h.b16 %v348
        %v633 = vunpack.c.l.b16 %v349
        %v634 = vunpack.c.h.b16 %v349
        %v635 = vunpack.c.l.b16 %v350
        %v636 = vunpack.c.h.b16 %v350
        %v637 = vunpack.c.l.b16 %v351
        %v638 = vunpack.c.h.b16 %v351
        %v639 = vunpack.c.l.b16 %v352
        %v640 = vunpack.c.h.b16 %v352
        %v641 = vunpack.c.l.b16 %v353
        %v642 = vunpack.c.h.b16 %v353
        %v643 = vunpack.c.l.b16 %v354
        %v644 = vunpack.c.h.b16 %v354
        %v645 = vunpack.c.l.b16 %v355
        %v646 = vunpack.c.h.b16 %v355
        %v647 = vunpack.c.l.b16 %v356
        %v648 = vunpack.c.h.b16 %v356
        %v649 = vunpack.c.l.b16 %v357
        %v650 = vunpack.c.h.b16 %v357
        %v651 = vunpack.c.l.b16 %v358
        %v652 = vunpack.c.h.b16 %v358
        %v653 = vunpack.c.l.b16 %v359
        %v654 = vunpack.c.h.b16 %v359
        %v655 = vunpack.c.l.b16 %v360
        %v656 = vunpack.c.h.b16 %v360
        %v657 = vunpack.c.l.b16 %v361
        %v658 = vunpack.c.h.b16 %v361
        %v659 = vunpack.c.l.b16 %v362
        %v660 = vunpack.c.h.b16 %v362
        %v661 = vunpack.c.l.b16 %v363
        %v662 = vunpack.c.h.b16 %v363
        %v663 = vunpack.c.l.b16 %v364
        %v664 = vunpack.c.h.b16 %v364
        %v665 = vunpack.c.l.b16 %v365
        %v666 = vunpack.c.h.b16 %v365
        %v667 = vunpack.c.l.b16 %v366
        %v668 = vunpack.c.h.b16 %v366
        %v669 = vunpack.c.l.b16 %v367
        %v670 = vunpack.c.h.b16 %v367
        %v671 = vunpack.c.l.b16 %v368
        %v672 = vunpack.c.h.b16 %v368
        %v673 = vunpack.c.l.b16 %v369
        %v674 = vunpack.c.h.b16 %v369
        %v675 = vunpack.c.l.b16 %v370
        %v676 = vunpack.c.h.b16 %v370
        %v677 = vunpack.c.l.b16 %v371
        %v678 = vunpack.c.h.b16 %v371
        %v679 = vunpack.c.l.b16 %v372
        %v680 = vunpack.c.h.b16 %v372
        %v681 = vunpack.c.l.b16 %v373
        %v682 = vunpack.c.h.b16 %v373
        %v683 = vunpack.c.l.b16 %v374
        %v684 = vunpack.c.h.b16 %v374
        %v685 = vunpack.c.l.b16 %v375
        %v686 = vunpack.c.h.b16 %v375
        %v687 = vunpack.c.l.b16 %v376
        %v688 = vunpack.c.h.b16 %v376
        %v689 = vunpack.c.l.b16 %v377
        %v690 = vunpack.c.h.b16 %v377
        %v691 = vunpack.c.l.b16 %v378
        %v692 = vunpack.c.h.b16 %v378
        %v693 = vunpack.c.l.b16 %v379
        %v694 = vunpack.c.h.b16 %v379
        %v695 = vunpack.c.l.b16 %v380
        %v696 = vunpack.c.h.b16 %v380
        %v697 = vunpack.c.l.b16 %v381
        %v698 = vunpack.c.h.b16 %v381
        %v699 = vunpack.c.l.b16 %v382
        %v700 = vunpack.c.h.b16 %v382
        %v701 = vunpack.c.l.b16 %v383
        %v702 = vunpack.c.h.b16 %v383
        %v703 = vunpack.c.l.b16 %v384
        %v704 = vunpack.c.h.b16 %v384
        %v705 = vunpack.c.l.b16 %v385
        %v706 = vunpack.c.h.b16 %v385
        %v707 = vunpack.c.l.b16 %v386
        %v708 = vunpack.c.h.b16 %v386
        %v709 = vunpack.c.l.b16 %v387
        %v710 = vunpack.c.h.b16 %v387
        %v711 = vunpack.c.l.b16 %v388
        %v712 = vunpack.c.h.b16 %v388
        %v713 = vunpack.c.l.b16 %v389
        %v714 = vunpack.c.h.b16 %v389
        %v715 = vunpack.c.l.b16 %v390
        %v716 = vunpack.c.h.b16 %v390
        %v717 = vunpack.c.l.b16 %v391
        %v718 = vunpack.c.h.b16 %v391
        %v719 = vunpack.c.l.b16 %v392
        %v720 = vunpack.c.h.b16 %v392
        %v721 = vunpack.c.l.b16 %v393
        %v722 = vunpack.c.h.b16 %v393
        %v723 = vunpack.c.l.b16 %v394
        %v724 = vunpack.c.h.b16 %v394
        %v725 = vunpack.c.l.b16 %v395
        %v726 = vunpack.c.h.b16 %v395
        %v727 = vunpack.c.l.b16 %v396
        %v728 = vunpack.c.h.b16 %v396
        %v729 = vunpack.c.l.b16 %v397
        %v730 = vunpack.c.h.b16 %v397
        %v731 = vunpack.c.l.b16 %v398
        %v732 = vunpack.c.h.b16 %v398
        %v733 = vunpack.c.l.b16 %v399
        %v734 = vunpack.c.h.b16 %v399
        %v735 = vunpack.c.l.b16 %v400
        %v736 = vunpack.c.h.b16 %v400
        %v737 = vunpack.c.l.b16 %v401
        %v738 = vunpack.c.h.b16 %v401
        %v739 = vunpack.c.l.b16 %v402
        %v740 = vunpack.c.h.b16 %v402
        %v741 = vunpack.c.l.b16 %v403
        %v742 = vunpack.c.h.b16 %v403
        %v743 = vunpack.c.l.b16 %v404
        %v744 = vunpack.c.h.b16 %v404
        %v745 = vunpack.c.l.b16 %v405
        %v746 = vunpack.c.h.b16 %v405
        %v747 = vunpack.c.l.b16 %v406
        %v748 = vunpack.c.h.b16 %v406
        %v749 = vunpack.c.l.b16 %v407
        %v750 = vunpack.c.h.b16 %v407
        %v751 = vunpack.c.l.b16 %v408
        %v752 = vunpack.c.h.b16 %v408
        %v753 = vunpack.c.l.b16 %v409
        %v754 = vunpack.c.h.b16 %v409
        %v755 = vunpack.c.l.b16 %v410
        %v756 = vunpack.c.h.b16 %v410
        %v757 = vunpack.c.l.b16 %v411
        %v758 = vunpack.c.h.b16 %v411
        %v759 = vunpack.c.l.b16 %v412
        %v760 = vunpack.c.h.b16 %v412
        %v761 = vunpack.c.l.b16 %v413
        %v762 = vunpack.c.h.b16 %v413
        %v763 = vunpack.c.l.b16 %v414
        %v764 = vunpack.c.h.b16 %v414
        %v765 = vunpack.c.l.b16 %v415
        %v766 = vunpack.c.h.b16 %v415
        %v767 = vunpack.c.l.b16 %v416
        %v768 = vunpack.c.h.b16 %v416
        %v769 = vunpack.c.l.b16 %v417
        %v770 = vunpack.c.h.b16 %v417
        %v771 = vunpack.c.l.b16 %v418
        %v772 = vunpack.c.h.b16 %v418
        %v773 = vunpack.c.l.b16 %v419
        %v774 = vunpack.c.h.b16 %v419
        %v775 = vunpack.c.l.b16 %v420
        %v776 = vunpack.c.h.b16 %v420
        %v777 = vunpack.c.l.b16 %v421
        %v778 = vunpack.c.h.b16 %v421
        %v779 = vunpack.c.l.b16 %v422
        %v780 = vunpack.c.h.b16 %v422
        %v781 = vunpack.c.l.b16 %v423
        %v782 = vunpack.c.h.b16 %v423
        %v783 = vunpack.c.l.b16 %v424
        %v784 = vunpack.c.h.b16 %v424
        %v785 = vunpack.c.l.b16 %v425
        %v786 = vunpack.c.h.b16 %v425
        %v787 = vunpack.c.l.b16 %v426
        %v788 = vunpack.c.h.b16 %v426
        %v789 = vunpack.c.l.b16 %v427
        %v790 = vunpack.c.h.b16 %v427
        %v791 = vunpack.c.l.b16 %v428
        %v792 = vunpack.c.h.b16 %v428
        %v793 = vunpack.c.l.b16 %v429
        %v794 = vunpack.c.h.b16 %v429
        %v795 = vunpack.c.l.b16 %v430
        %v796 = vunpack.c.h.b16 %v430
        %v797 = vunpack.c.l.b16 %v431
        %v798 = vunpack.c.h.b16 %v431
        %v799 = vunpack.c.l.b16 %v432
        %v800 = vunpack.c.h.b16 %v432
        %v801 = vunpack.c.l.b16 %v433
        %v802 = vunpack.c.h.b16 %v433
        %v803 = vunpack.c.l.b16 %v434
        %v804 = vunpack.c.h.b16 %v434
        %v805 = vunpack.c.l.b16 %v435
        %v806 = vunpack.c.h.b16 %v435
        %v807 = vunpack.c.l.b16 %v436
        %v808 = vunpack.c.h.b16 %v436
        %v809 = vunpack.c.l.b16 %v437
        %v810 = vunpack.c.h.b16 %v437
        %v811 = vunpack.c.l.b16 %v438
        %v812 = vunpack.c.h.b16 %v438
        %v813 = vunpack.c.l.b16 %v439
        %v814 = vunpack.c.h.b16 %v439
        %v815 = vunpack.c.l.b16 %v440
        %v816 = vunpack.c.h.b16 %v440
        %v817 = vunpack.c.l.b16 %v441
        %v818 = vunpack.c.h.b16 %v441
        %v819 = vunpack.c.l.b16 %v442
        %v820 = vunpack.c.h.b16 %v442
        %v821 = vunpack.c.l.b16 %v443
        %v822 = vunpack.c.h.b16 %v443
        %v823 = vunpack.c.l.b16 %v444
        %v824 = vunpack.c.h.b16 %v444
        %v825 = vunpack.c.l.b16 %v445
        %v826 = vunpack.c.h.b16 %v445
        %v827 = vunpack.c.l.b16 %v446
        %v828 = vunpack.c.h.b16 %v446
        %v829 = vunpack.c.l.b16 %v447
        %v830 = vunpack.c.h.b16 %v447
        %v831 = vunpack.c.l.b16 %v448
        %v832 = vunpack.c.h.b16 %v448
        %v833 = vunpack.c.l.b16 %v449
        %v834 = vunpack.c.h.b16 %v449
        %v835 = vunpack.c.l.b16 %v450
        %v836 = vunpack.c.h.b16 %v450
        %v837 = vunpack.c.l.b16 %v451
        %v838 = vunpack.c.h.b16 %v451
        %v839 = vunpack.c.l.b16 %v452
        %v840 = vunpack.c.h.b16 %v452
        %v841 = vunpack.c.l.b16 %v453
        %v842 = vunpack.c.h.b16 %v453
        %v843 = vunpack.c.l.b16 %v454
        %v844 = vunpack.c.h.b16 %v454
        %v845 = vunpack.c.l.b16 %v455
        %v846 = vunpack.c.h.b16 %v455
        %v847 = vunpack.c.l.b16 %v456
        %v848 = vunpack.c.h.b16 %v456
        %v849 = vunpack.c.l.b16 %v457
        %v850 = vunpack.c.h.b16 %v457
        %v851 = vunpack.c.l.b16 %v458
        %v852 = vunpack.c.h.b16 %v458
        %v853 = vunpack.c.l.b16 %v459
        %v854 = vunpack.c.h.b16 %v459
        %v855 = vunpack.c.l.b16 %v460
        %v856 = vunpack.c.h.b16 %v460
        %v857 = vunpack.c.l.b16 %v461
        %v858 = vunpack.c.h.b16 %v461
        %v859 = vunpack.c.l.b16 %v462
        %v860 = vunpack.c.h.b16 %v462
        %v861 = vunpack.c.l.b16 %v463
        %v862 = vunpack.c.h.b16 %v463
        %v863 = vunpack.c.l.b16 %v464
        %v864 = vunpack.c.h.b16 %v464
        %v865 = vunpack.c.l.b16 %v465
        %v866 = vunpack.c.h.b16 %v465
        %v867 = vunpack.c.l.b16 %v466
        %v868 = vunpack.c.h.b16 %v466
        %v869 = vpack.c.b16 %v621, %v613
        %v870 = vpack.c.b16 %v622, %v614
        %v871 = vpack.c.b16 %v623, %v615
        %v872 = vpack.c.b16 %v624, %v616
        %v873 = vpack.c.b16 %v625, %v617
        %v874 = vpack.c.b16 %v626, %v618
        %v875 = vpack.c.b16 %v627, %v619
        %v876 = vpack.c.b16 %v628, %v620
        %v877 = vpack.c.b16 %v637, %v629
        %v878 = vpack.c.b16 %v638, %v630
        %v879 = vpack.c.b16 %v639, %v631
        %v880 = vpack.c.b16 %v640, %v632
        %v881 = vpack.c.b16 %v641, %v633
        %v882 = vpack.c.b16 %v642, %v634
        %v883 = vpack.c.b16 %v643, %v635
        %v884 = vpack.c.b16 %v644, %v636
        %v885 = vpack.c.b16 %v653, %v645
        %v886 = vpack.c.b16 %v654, %v646
        %v887 = vpack.c.b16 %v655, %v647
        %v888 = vpack.c.b16 %v656, %v648
        %v889 = vpack.c.b16 %v657, %v649
        %v890 = vpack.c.b16 %v658, %v650
        %v891 = vpack.c.b16 %v659, %v651
        %v892 = vpack.c.b16 %v660, %v652
        %v893 = vpack.c.b16 %v669, %v661
        %v894 = vpack.c.b16 %v670, %v662
        %v895 = vpack.c.b16 %v671, %v663
        %v896 = vpack.c.b16 %v672, %v664
        %v897 = vpack.c.b16 %v673, %v665
        %v898 = vpack.c.b16 %v674, %v666
        %v899 = vpack.c.b16 %v675, %v667
        %v900 = vpack.c.b16 %v676, %v668
        %v901 = vpack.c.b16 %v685, %v677
        %v902 = vpack.c.b16 %v686, %v678
        %v903 = vpack.c.b16 %v687, %v679
        %v904 = vpack.c.b16 %v688, %v680
        %v905 = vpack.c.b16 %v689, %v681
        %v906 = vpack.c.b16 %v690, %v682
        %v907 = vpack.c.b16 %v691, %v683
        %v908 = vpack.c.b16 %v692, %v684
        %v909 = vpack.c.b16 %v701, %v693
        %v910 = vpack.c.b16 %v702, %v694
        %v911 = vpack.c.b16 %v703, %v695
        %v912 = vpack.c.b16 %v704, %v696
        %v913 = vpack.c.b16 %v705, %v697
        %v914 = vpack.c.b16 %v706, %v698
        %v915 = vpack.c.b16 %v707, %v699
        %v916 = vpack.c.b16 %v708, %v700
        %v917 = vpack.c.b16 %v717, %v709
        %v918 = vpack.c.b16 %v718, %v710
        %v919 = vpack.c.b16 %v719, %v711
        %v920 = vpack.c.b16 %v720, %v712
        %v921 = vpack.c.b16 %v721, %v713
        %v922 = vpack.c.b16 %v722, %v714
        %v923 = vpack.c.b16 %v723, %v715
        %v924 = vpack.c.b16 %v724, %v716
        %v925 = vpack.c.b16 %v733, %v725
        %v926 = vpack.c.b16 %v734, %v726
        %v927 = vpack.c.b16 %v735, %v727
        %v928 = vpack.c.b16 %v736, %v728
        %v929 = vpack.c.b16 %v737, %v729
        %v930 = vpack.c.b16 %v738, %v730
        %v931 = vpack.c.b16 %v739, %v731
        %v932 = vpack.c.b16 %v740, %v732
        %v933 = vpack.c.b16 %v749, %v741
        %v934 = vpack.c.b16 %v750, %v742
        %v935 = vpack.c.b16 %v751, %v743
        %v936 = vpack.c.b16 %v752, %v744
        %v937 = vpack.c.b16 %v753, %v745
        %v938 = vpack.c.b16 %v754, %v746
        %v939 = vpack.c.b16 %v755, %v747
        %v940 = vpack.c.b16 %v756, %v748
        %v941 = vpack.c.b16 %v765, %v757
        %v942 = vpack.c.b16 %v766, %v758
        %v943 = vpack.c.b16 %v767, %v759
        %v944 = vpack.c.b16 %v768, %v760
        %v945 = vpack.c.b16 %v769, %v761
        %v946 = vpack.c.b16 %v770, %v762
        %v947 = vpack.c.b16 %v771, %v763
        %v948 = vpack.c.b16 %v772, %v764
        %v949 = vpack.c.b16 %v781, %v773
        %v950 = vpack.c.b16 %v782, %v774
        %v951 = vpack.c.b16 %v783, %v775
        %v952 = vpack.c.b16 %v784, %v776
        %v953 = vpack.c.b16 %v785, %v777
        %v954 = vpack.c.b16 %v786, %v778
        %v955 = vpack.c.b16 %v787, %v779
        %v956 = vpack.c.b16 %v788, %v780
        %v957 = vpack.c.b16 %v797, %v789
        %v958 = vpack.c.b16 %v798, %v790
        %v959 = vpack.c.b16 %v799, %v791
        %v960 = vpack.c.b16 %v800, %v792
        %v961 = vpack.c.b16 %v801, %v793
        %v962 = vpack.c.b16 %v802, %v794
        %v963 = vpack.c.b16 %v803, %v795
        %v964 = vpack.c.b16 %v804, %v796
        %v965 = vpack.c.b16 %v813, %v805
        %v966 = vpack.c.b16 %v814, %v806
        %v967 = vpack.c.b16 %v815, %v807
        %v968 = vpack.c.b16 %v816, %v808
        %v969 = vpack.c.b16 %v817, %v809
        %v970 = vpack.c.b16 %v818, %v810
        %v971 = vpack.c.b16 %v819, %v811
        %v972 = vpack.c.b16 %v820, %v812
        %v973 = vpack.c.b16 %v829, %v821
        %v974 = vpack.c.b16 %v830, %v822
        %v975 = vpack.c.b16 %v831, %v823
        %v976 = vpack.c.b16 %v832, %v824
        %v977 = vpack.c.b16 %v833, %v825
        %v978 = vpack.c.b16 %v834, %v826
        %v979 = vpack.c.b16 %v835, %v827
        %v980 = vpack.c.b16 %v836, %v828
        %v981 = vpack.c.b16 %v845, %v837
        %v982 = vpack.c.b16 %v846, %v838
        %v983 = vpack.c.b16 %v847, %v839
        %v984 = vpack.c.b16 %v848, %v840
        %v985 = vpack.c.b16 %v849, %v841
        %v986 = vpack.c.b16 %v850, %v842
        %v987 = vpack.c.b16 %v851, %v843
        %v988 = vpack.c.b16 %v852, %v844
        %v989 = vpack.c.b16 %v861, %v853
        %v990 = vpack.c.b16 %v862, %v854
        %v991 = vpack.c.b16 %v863, %v855
        %v992 = vpack.c.b16 %v864, %v856
        %v993 = vpack.c.b16 %v865, %v857
        %v994 = vpack.c.b16 %v866, %v858
        %v995 = vpack.c.b16 %v867, %v859
        %v996 = vpack.c.b16 %v868, %v860
        %1125 = vmatpush.bf16.msra.mxu0 %v925
        %1126 = vmatpush.bf16.msra.mxu0 %v917
        %1127 = vmatpush.bf16.msra.mxu0 %v909
        %1128 = vmatpush.bf16.msra.mxu0 %v901
        %1129 = vmatpush.bf16.msra.mxu0 %v893
        %1130 = vmatpush.bf16.msra.mxu0 %v885
        %1131 = vmatpush.bf16.msra.mxu0 %v877
        %1132 = vmatpush.bf16.msra.mxu0 %v869
        %1133 = vmatmul.bf16.gmra.mxu0 %v337
        %v1134 = vpop.f32.mrf.mxu0
        %v1135 = vadd.f32 %v469, %v1134
        %v1136 = vpop.f32.mrf.mxu0
        %1137 = vdwg.mxu0
        %1138 = vmatpush.bf16.msra.mxu0 %v989
        %1139 = vmatpush.bf16.msra.mxu0 %v981
        %1140 = vmatpush.bf16.msra.mxu0 %v973
        %1141 = vmatpush.bf16.msra.mxu0 %v965
        %1142 = vmatpush.bf16.msra.mxu0 %v957
        %1143 = vmatpush.bf16.msra.mxu0 %v949
        %1144 = vmatpush.bf16.msra.mxu0 %v941
        %1145 = vmatpush.bf16.msra.mxu0 %v933
        %1146 = vmatmul.bf16.gmra.mxu0 %v338
        %v1147 = vpop.f32.mrf.mxu0
        %v1148 = vadd.f32 %v1135, %v1147
        %v1149 = vpop.f32.mrf.mxu0
        %1150 = vdwg.mxu0
        %1151 = vmatpush.bf16.msra.mxu0 %v926
        %1152 = vmatpush.bf16.msra.mxu0 %v918
        %1153 = vmatpush.bf16.msra.mxu0 %v910
        %1154 = vmatpush.bf16.msra.mxu0 %v902
        %1155 = vmatpush.bf16.msra.mxu0 %v894
        %1156 = vmatpush.bf16.msra.mxu0 %v886
        %1157 = vmatpush.bf16.msra.mxu0 %v878
        %1158 = vmatpush.bf16.msra.mxu0 %v870
        %1159 = vmatmul.bf16.gmra.mxu0 %v337
        %v1160 = vpop.f32.mrf.mxu0
        %v1161 = vadd.f32 %v470, %v1160
        %v1162 = vpop.f32.mrf.mxu0
        %1163 = vdwg.mxu0
        %1164 = vmatpush.bf16.msra.mxu0 %v990
        %1165 = vmatpush.bf16.msra.mxu0 %v982
        %1166 = vmatpush.bf16.msra.mxu0 %v974
        %1167 = vmatpush.bf16.msra.mxu0 %v966
        %1168 = vmatpush.bf16.msra.mxu0 %v958
        %1169 = vmatpush.bf16.msra.mxu0 %v950
        %1170 = vmatpush.bf16.msra.mxu0 %v942
        %1171 = vmatpush.bf16.msra.mxu0 %v934
        %1172 = vmatmul.bf16.gmra.mxu0 %v338
        %v1173 = vpop.f32.mrf.mxu0
        %v1174 = vadd.f32 %v1161, %v1173
        %v1175 = vpop.f32.mrf.mxu0
        %1176 = vdwg.mxu0
        %1177 = vmatpush.bf16.msra.mxu0 %v927
        %1178 = vmatpush.bf16.msra.mxu0 %v919
        %1179 = vmatpush.bf16.msra.mxu0 %v911
        %1180 = vmatpush.bf16.msra.mxu0 %v903
        %1181 = vmatpush.bf16.msra.mxu0 %v895
        %1182 = vmatpush.bf16.msra.mxu0 %v887
        %1183 = vmatpush.bf16.msra.mxu0 %v879
        %1184 = vmatpush.bf16.msra.mxu0 %v871
        %1185 = vmatmul.bf16.gmra.mxu0 %v337
        %v1186 = vpop.f32.mrf.mxu0
        %v1187 = vadd.f32 %v471, %v1186
        %v1188 = vpop.f32.mrf.mxu0
        %1189 = vdwg.mxu0
        %1190 = vmatpush.bf16.msra.mxu0 %v991
        %1191 = vmatpush.bf16.msra.mxu0 %v983
        %1192 = vmatpush.bf16.msra.mxu0 %v975
        %1193 = vmatpush.bf16.msra.mxu0 %v967
        %1194 = vmatpush.bf16.msra.mxu0 %v959
        %1195 = vmatpush.bf16.msra.mxu0 %v951
        %1196 = vmatpush.bf16.msra.mxu0 %v943
        %1197 = vmatpush.bf16.msra.mxu0 %v935
        %1198 = vmatmul.bf16.gmra.mxu0 %v338
        %v1199 = vpop.f32.mrf.mxu0
        %v1200 = vadd.f32 %v1187, %v1199
        %v1201 = vpop.f32.mrf.mxu0
        %1202 = vdwg.mxu0
        %1203 = vmatpush.bf16.msra.mxu0 %v928
        %1204 = vmatpush.bf16.msra.mxu0 %v920
        %1205 = vmatpush.bf16.msra.mxu0 %v912
        %1206 = vmatpush.bf16.msra.mxu0 %v904
        %1207 = vmatpush.bf16.msra.mxu0 %v896
        %1208 = vmatpush.bf16.msra.mxu0 %v888
        %1209 = vmatpush.bf16.msra.mxu0 %v880
        %1210 = vmatpush.bf16.msra.mxu0 %v872
        %1211 = vmatmul.bf16.gmra.mxu0 %v337
        %v1212 = vpop.f32.mrf.mxu0
        %v1213 = vadd.f32 %v472, %v1212
        %v1214 = vpop.f32.mrf.mxu0
        %1215 = vdwg.mxu0
        %1216 = vmatpush.bf16.msra.mxu0 %v992
        %1217 = vmatpush.bf16.msra.mxu0 %v984
        %1218 = vmatpush.bf16.msra.mxu0 %v976
        %1219 = vmatpush.bf16.msra.mxu0 %v968
        %1220 = vmatpush.bf16.msra.mxu0 %v960
        %1221 = vmatpush.bf16.msra.mxu0 %v952
        %1222 = vmatpush.bf16.msra.mxu0 %v944
        %1223 = vmatpush.bf16.msra.mxu0 %v936
        %1224 = vmatmul.bf16.gmra.mxu0 %v338
        %v1225 = vpop.f32.mrf.mxu0
        %v1226 = vadd.f32 %v1213, %v1225
        %v1227 = vpop.f32.mrf.mxu0
        %1228 = vdwg.mxu0
        %1229 = vmatpush.bf16.msra.mxu0 %v929
        %1230 = vmatpush.bf16.msra.mxu0 %v921
        %1231 = vmatpush.bf16.msra.mxu0 %v913
        %1232 = vmatpush.bf16.msra.mxu0 %v905
        %1233 = vmatpush.bf16.msra.mxu0 %v897
        %1234 = vmatpush.bf16.msra.mxu0 %v889
        %1235 = vmatpush.bf16.msra.mxu0 %v881
        %1236 = vmatpush.bf16.msra.mxu0 %v873
        %1237 = vmatmul.bf16.gmra.mxu0 %v337
        %v1238 = vpop.f32.mrf.mxu0
        %v1239 = vadd.f32 %v473, %v1238
        %v1240 = vpop.f32.mrf.mxu0
        %1241 = vdwg.mxu0
        %1242 = vmatpush.bf16.msra.mxu0 %v993
        %1243 = vmatpush.bf16.msra.mxu0 %v985
        %1244 = vmatpush.bf16.msra.mxu0 %v977
        %1245 = vmatpush.bf16.msra.mxu0 %v969
        %1246 = vmatpush.bf16.msra.mxu0 %v961
        %1247 = vmatpush.bf16.msra.mxu0 %v953
        %1248 = vmatpush.bf16.msra.mxu0 %v945
        %1249 = vmatpush.bf16.msra.mxu0 %v937
        %1250 = vmatmul.bf16.gmra.mxu0 %v338
        %v1251 = vpop.f32.mrf.mxu0
        %v1252 = vadd.f32 %v1239, %v1251
        %v1253 = vpop.f32.mrf.mxu0
        %1254 = vdwg.mxu0
        %1255 = vmatpush.bf16.msra.mxu0 %v930
        %1256 = vmatpush.bf16.msra.mxu0 %v922
        %1257 = vmatpush.bf16.msra.mxu0 %v914
        %1258 = vmatpush.bf16.msra.mxu0 %v906
        %1259 = vmatpush.bf16.msra.mxu0 %v898
        %1260 = vmatpush.bf16.msra.mxu0 %v890
        %1261 = vmatpush.bf16.msra.mxu0 %v882
        %1262 = vmatpush.bf16.msra.mxu0 %v874
        %1263 = vmatmul.bf16.gmra.mxu0 %v337
        %v1264 = vpop.f32.mrf.mxu0
        %v1265 = vadd.f32 %v474, %v1264
        %v1266 = vpop.f32.mrf.mxu0
        %1267 = vdwg.mxu0
        %1268 = vmatpush.bf16.msra.mxu0 %v994
        %1269 = vmatpush.bf16.msra.mxu0 %v986
        %1270 = vmatpush.bf16.msra.mxu0 %v978
        %1271 = vmatpush.bf16.msra.mxu0 %v970
        %1272 = vmatpush.bf16.msra.mxu0 %v962
        %1273 = vmatpush.bf16.msra.mxu0 %v954
        %1274 = vmatpush.bf16.msra.mxu0 %v946
        %1275 = vmatpush.bf16.msra.mxu0 %v938
        %1276 = vmatmul.bf16.gmra.mxu0 %v338
        %v1277 = vpop.f32.mrf.mxu0
        %v1278 = vadd.f32 %v1265, %v1277
        %v1279 = vpop.f32.mrf.mxu0
        %1280 = vdwg.mxu0
        %1281 = vmatpush.bf16.msra.mxu0 %v931
        %1282 = vmatpush.bf16.msra.mxu0 %v923
        %1283 = vmatpush.bf16.msra.mxu0 %v915
        %1284 = vmatpush.bf16.msra.mxu0 %v907
        %1285 = vmatpush.bf16.msra.mxu0 %v899
        %1286 = vmatpush.bf16.msra.mxu0 %v891
        %1287 = vmatpush.bf16.msra.mxu0 %v883
        %1288 = vmatpush.bf16.msra.mxu0 %v875
        %1289 = vmatmul.bf16.gmra.mxu0 %v337
        %v1290 = vpop.f32.mrf.mxu0
        %v1291 = vadd.f32 %v475, %v1290
        %v1292 = vpop.f32.mrf.mxu0
        %1293 = vdwg.mxu0
        %1294 = vmatpush.bf16.msra.mxu0 %v995
        %1295 = vmatpush.bf16.msra.mxu0 %v987
        %1296 = vmatpush.bf16.msra.mxu0 %v979
        %1297 = vmatpush.bf16.msra.mxu0 %v971
        %1298 = vmatpush.bf16.msra.mxu0 %v963
        %1299 = vmatpush.bf16.msra.mxu0 %v955
        %1300 = vmatpush.bf16.msra.mxu0 %v947
        %1301 = vmatpush.bf16.msra.mxu0 %v939
        %1302 = vmatmul.bf16.gmra.mxu0 %v338
        %v1303 = vpop.f32.mrf.mxu0
        %v1304 = vadd.f32 %v1291, %v1303
        %v1305 = vpop.f32.mrf.mxu0
        %1306 = vdwg.mxu0
        %1307 = vmatpush.bf16.msra.mxu0 %v932
        %1308 = vmatpush.bf16.msra.mxu0 %v924
        %1309 = vmatpush.bf16.msra.mxu0 %v916
        %1310 = vmatpush.bf16.msra.mxu0 %v908
        %1311 = vmatpush.bf16.msra.mxu0 %v900
        %1312 = vmatpush.bf16.msra.mxu0 %v892
        %1313 = vmatpush.bf16.msra.mxu0 %v884
        %1314 = vmatpush.bf16.msra.mxu0 %v876
        %1315 = vmatmul.bf16.gmra.mxu0 %v337
        %v1316 = vpop.f32.mrf.mxu0
        %v1317 = vadd.f32 %v476, %v1316
        %v1318 = vpop.f32.mrf.mxu0
        %1319 = vdwg.mxu0
        %1320 = vmatpush.bf16.msra.mxu0 %v996
        %1321 = vmatpush.bf16.msra.mxu0 %v988
        %1322 = vmatpush.bf16.msra.mxu0 %v980
        %1323 = vmatpush.bf16.msra.mxu0 %v972
        %1324 = vmatpush.bf16.msra.mxu0 %v964
        %1325 = vmatpush.bf16.msra.mxu0 %v956
        %1326 = vmatpush.bf16.msra.mxu0 %v948
        %1327 = vmatpush.bf16.msra.mxu0 %v940
        %1328 = vmatmul.bf16.gmra.mxu0 %v338
        %v1329 = vpop.f32.mrf.mxu0
        %v1330 = vadd.f32 %v1317, %v1329
        %v1331 = vpop.f32.mrf.mxu0
        %1332 = vdwg.mxu0
        %v1333 = vmax.f32 %v1148, 0.0
        %v1334 = vmax.f32 %v1174, 0.0
        %v1335 = vmax.f32 %v1200, 0.0
        %v1336 = vmax.f32 %v1226, 0.0
        %v1337 = vmax.f32 %v1252, 0.0
        %v1338 = vmax.f32 %v1278, 0.0
        %v1339 = vmax.f32 %v1304, 0.0
        %v1340 = vmax.f32 %v1330, 0.0
        %v1341 = vpack.c.bf16 %v1333, %v1333
        %v1342 = vpack.c.bf16 %v1334, %v1334
        %v1343 = vpack.c.bf16 %v1335, %v1335
        %v1344 = vpack.c.bf16 %v1336, %v1336
        %v1345 = vpack.c.bf16 %v1337, %v1337
        %v1346 = vpack.c.bf16 %v1338, %v1338
        %v1347 = vpack.c.bf16 %v1339, %v1339
        %v1348 = vpack.c.bf16 %v1340, %v1340
        %v1349 = vld [vmem:[%s284] sm:$0xff]
        %v1350 = vld [vmem:[%s284 + $0x8] sm:$0xff]
        %v1351 = vld [vmem:[%s284 + $0x10] sm:$0xff]
        %v1352 = vld [vmem:[%s284 + $0x18] sm:$0xff]
        %v1353 = vld [vmem:[%s284 + $0x20] sm:$0xff]
        %v1354 = vld [vmem:[%s284 + $0x28] sm:$0xff]
        %v1355 = vld [vmem:[%s284 + $0x30] sm:$0xff]
        %v1356 = vld [vmem:[%s284 + $0x38] sm:$0xff]
        %v1357 = vld [vmem:[%s284 + $0x40] sm:$0xff]
        %v1358 = vld [vmem:[%s284 + $0x48] sm:$0xff]
        %v1359 = vld [vmem:[%s284 + $0x50] sm:$0xff]
        %v1360 = vld [vmem:[%s284 + $0x58] sm:$0xff]
        %v1361 = vld [vmem:[%s284 + $0x60] sm:$0xff]
        %v1362 = vld [vmem:[%s284 + $0x68] sm:$0xff]
        %v1363 = vld [vmem:[%s284 + $0x70] sm:$0xff]
        %v1364 = vld [vmem:[%s284 + $0x78] sm:$0xff]
        %v1365 = vld [vmem:[%s284 + $0x80] sm:$0xff]
        %v1366 = vld [vmem:[%s284 + $0x88] sm:$0xff]
        %v1367 = vld [vmem:[%s284 + $0x90] sm:$0xff]
        %v1368 = vld [vmem:[%s284 + $0x98] sm:$0xff]
        %v1369 = vld [vmem:[%s284 + $0xa0] sm:$0xff]
        %v1370 = vld [vmem:[%s284 + $0xa8] sm:$0xff]
        %v1371 = vld [vmem:[%s284 + $0xb0] sm:$0xff]
        %v1372 = vld [vmem:[%s284 + $0xb8] sm:$0xff]
        %v1373 = vld [vmem:[%s284 + $0xc0] sm:$0xff]
        %v1374 = vld [vmem:[%s284 + $0xc8] sm:$0xff]
        %v1375 = vld [vmem:[%s284 + $0xd0] sm:$0xff]
        %v1376 = vld [vmem:[%s284 + $0xd8] sm:$0xff]
        %v1377 = vld [vmem:[%s284 + $0xe0] sm:$0xff]
        %v1378 = vld [vmem:[%s284 + $0xe8] sm:$0xff]
        %v1379 = vld [vmem:[%s284 + $0xf0] sm:$0xff]
        %v1380 = vld [vmem:[%s284 + $0xf8] sm:$0xff]
        %v1381 = vld [vmem:[%s284 + $0x100] sm:$0xff]
        %v1382 = vld [vmem:[%s284 + $0x108] sm:$0xff]
        %v1383 = vld [vmem:[%s284 + $0x110] sm:$0xff]
        %v1384 = vld [vmem:[%s284 + $0x118] sm:$0xff]
        %v1385 = vld [vmem:[%s284 + $0x120] sm:$0xff]
        %v1386 = vld [vmem:[%s284 + $0x128] sm:$0xff]
        %v1387 = vld [vmem:[%s284 + $0x130] sm:$0xff]
        %v1388 = vld [vmem:[%s284 + $0x138] sm:$0xff]
        %v1389 = vld [vmem:[%s284 + $0x140] sm:$0xff]
        %v1390 = vld [vmem:[%s284 + $0x148] sm:$0xff]
        %v1391 = vld [vmem:[%s284 + $0x150] sm:$0xff]
        %v1392 = vld [vmem:[%s284 + $0x158] sm:$0xff]
        %v1393 = vld [vmem:[%s284 + $0x160] sm:$0xff]
        %v1394 = vld [vmem:[%s284 + $0x168] sm:$0xff]
        %v1395 = vld [vmem:[%s284 + $0x170] sm:$0xff]
        %v1396 = vld [vmem:[%s284 + $0x178] sm:$0xff]
        %v1397 = vld [vmem:[%s284 + $0x180] sm:$0xff]
        %v1398 = vld [vmem:[%s284 + $0x188] sm:$0xff]
        %v1399 = vld [vmem:[%s284 + $0x190] sm:$0xff]
        %v1400 = vld [vmem:[%s284 + $0x198] sm:$0xff]
        %v1401 = vld [vmem:[%s284 + $0x1a0] sm:$0xff]
        %v1402 = vld [vmem:[%s284 + $0x1a8] sm:$0xff]
        %v1403 = vld [vmem:[%s284 + $0x1b0] sm:$0xff]
        %v1404 = vld [vmem:[%s284 + $0x1b8] sm:$0xff]
        %v1405 = vld [vmem:[%s284 + $0x1c0] sm:$0xff]
        %v1406 = vld [vmem:[%s284 + $0x1c8] sm:$0xff]
        %v1407 = vld [vmem:[%s284 + $0x1d0] sm:$0xff]
        %v1408 = vld [vmem:[%s284 + $0x1d8] sm:$0xff]
        %v1409 = vld [vmem:[%s284 + $0x1e0] sm:$0xff]
        %v1410 = vld [vmem:[%s284 + $0x1e8] sm:$0xff]
        %v1411 = vld [vmem:[%s284 + $0x1f0] sm:$0xff]
        %v1412 = vld [vmem:[%s284 + $0x1f8] sm:$0xff]
        %v1413 = vld [vmem:[%s284 + $0x200] sm:$0xff]
        %v1414 = vld [vmem:[%s284 + $0x208] sm:$0xff]
        %v1415 = vld [vmem:[%s284 + $0x210] sm:$0xff]
        %v1416 = vld [vmem:[%s284 + $0x218] sm:$0xff]
        %v1417 = vld [vmem:[%s284 + $0x220] sm:$0xff]
        %v1418 = vld [vmem:[%s284 + $0x228] sm:$0xff]
        %v1419 = vld [vmem:[%s284 + $0x230] sm:$0xff]
        %v1420 = vld [vmem:[%s284 + $0x238] sm:$0xff]
        %v1421 = vld [vmem:[%s284 + $0x240] sm:$0xff]
        %v1422 = vld [vmem:[%s284 + $0x248] sm:$0xff]
        %v1423 = vld [vmem:[%s284 + $0x250] sm:$0xff]
        %v1424 = vld [vmem:[%s284 + $0x258] sm:$0xff]
        %v1425 = vld [vmem:[%s284 + $0x260] sm:$0xff]
        %v1426 = vld [vmem:[%s284 + $0x268] sm:$0xff]
        %v1427 = vld [vmem:[%s284 + $0x270] sm:$0xff]
        %v1428 = vld [vmem:[%s284 + $0x278] sm:$0xff]
        %v1429 = vld [vmem:[%s284 + $0x280] sm:$0xff]
        %v1430 = vld [vmem:[%s284 + $0x288] sm:$0xff]
        %v1431 = vld [vmem:[%s284 + $0x290] sm:$0xff]
        %v1432 = vld [vmem:[%s284 + $0x298] sm:$0xff]
        %v1433 = vld [vmem:[%s284 + $0x2a0] sm:$0xff]
        %v1434 = vld [vmem:[%s284 + $0x2a8] sm:$0xff]
        %v1435 = vld [vmem:[%s284 + $0x2b0] sm:$0xff]
        %v1436 = vld [vmem:[%s284 + $0x2b8] sm:$0xff]
        %v1437 = vld [vmem:[%s284 + $0x2c0] sm:$0xff]
        %v1438 = vld [vmem:[%s284 + $0x2c8] sm:$0xff]
        %v1439 = vld [vmem:[%s284 + $0x2d0] sm:$0xff]
        %v1440 = vld [vmem:[%s284 + $0x2d8] sm:$0xff]
        %v1441 = vld [vmem:[%s284 + $0x2e0] sm:$0xff]
        %v1442 = vld [vmem:[%s284 + $0x2e8] sm:$0xff]
        %v1443 = vld [vmem:[%s284 + $0x2f0] sm:$0xff]
        %v1444 = vld [vmem:[%s284 + $0x2f8] sm:$0xff]
        %v1445 = vld [vmem:[%s284 + $0x300] sm:$0xff]
        %v1446 = vld [vmem:[%s284 + $0x308] sm:$0xff]
        %v1447 = vld [vmem:[%s284 + $0x310] sm:$0xff]
        %v1448 = vld [vmem:[%s284 + $0x318] sm:$0xff]
        %v1449 = vld [vmem:[%s284 + $0x320] sm:$0xff]
        %v1450 = vld [vmem:[%s284 + $0x328] sm:$0xff]
        %v1451 = vld [vmem:[%s284 + $0x330] sm:$0xff]
        %v1452 = vld [vmem:[%s284 + $0x338] sm:$0xff]
        %v1453 = vld [vmem:[%s284 + $0x340] sm:$0xff]
        %v1454 = vld [vmem:[%s284 + $0x348] sm:$0xff]
        %v1455 = vld [vmem:[%s284 + $0x350] sm:$0xff]
        %v1456 = vld [vmem:[%s284 + $0x358] sm:$0xff]
        %v1457 = vld [vmem:[%s284 + $0x360] sm:$0xff]
        %v1458 = vld [vmem:[%s284 + $0x368] sm:$0xff]
        %v1459 = vld [vmem:[%s284 + $0x370] sm:$0xff]
        %v1460 = vld [vmem:[%s284 + $0x378] sm:$0xff]
        %v1461 = vld [vmem:[%s284 + $0x380] sm:$0xff]
        %v1462 = vld [vmem:[%s284 + $0x388] sm:$0xff]
        %v1463 = vld [vmem:[%s284 + $0x390] sm:$0xff]
        %v1464 = vld [vmem:[%s284 + $0x398] sm:$0xff]
        %v1465 = vld [vmem:[%s284 + $0x3a0] sm:$0xff]
        %v1466 = vld [vmem:[%s284 + $0x3a8] sm:$0xff]
        %v1467 = vld [vmem:[%s284 + $0x3b0] sm:$0xff]
        %v1468 = vld [vmem:[%s284 + $0x3b8] sm:$0xff]
        %v1469 = vld [vmem:[%s284 + $0x3c0] sm:$0xff]
        %v1470 = vld [vmem:[%s284 + $0x3c8] sm:$0xff]
        %v1471 = vld [vmem:[%s284 + $0x3d0] sm:$0xff]
        %v1472 = vld [vmem:[%s284 + $0x3d8] sm:$0xff]
        %v1473 = vld [vmem:[%s284 + $0x3e0] sm:$0xff]
        %v1474 = vld [vmem:[%s284 + $0x3e8] sm:$0xff]
        %v1475 = vld [vmem:[%s284 + $0x3f0] sm:$0xff]
        %v1476 = vld [vmem:[%s284 + $0x3f8] sm:$0xff]
        %v1477 = vld [vmem:[%s284 + $0x400] sm:$0xff]
        %v1478 = vld [vmem:[%s284 + $0x408] sm:$0xff]
        %v1479 = vld [vmem:[%s284 + $0x410] sm:$0xff]
        %v1480 = vld [vmem:[%s284 + $0x418] sm:$0xff]
        %v1481 = vld [vmem:[%s284 + $0x420] sm:$0xff]
        %v1482 = vld [vmem:[%s284 + $0x428] sm:$0xff]
        %v1483 = vld [vmem:[%s284 + $0x430] sm:$0xff]
        %v1484 = vld [vmem:[%s284 + $0x438] sm:$0xff]
        %v1485 = vld [vmem:[%s284 + $0x440] sm:$0xff]
        %v1486 = vld [vmem:[%s284 + $0x448] sm:$0xff]
        %v1487 = vld [vmem:[%s284 + $0x450] sm:$0xff]
        %v1488 = vld [vmem:[%s284 + $0x458] sm:$0xff]
        %v1489 = vld [vmem:[%s284 + $0x460] sm:$0xff]
        %v1490 = vld [vmem:[%s284 + $0x468] sm:$0xff]
        %v1491 = vld [vmem:[%s284 + $0x470] sm:$0xff]
        %v1492 = vld [vmem:[%s284 + $0x478] sm:$0xff]
        %v1493 = vld [vmem:[%s284 + $0x480] sm:$0xff]
        %v1494 = vld [vmem:[%s284 + $0x488] sm:$0xff]
        %v1495 = vld [vmem:[%s284 + $0x490] sm:$0xff]
        %v1496 = vld [vmem:[%s284 + $0x498] sm:$0xff]
        %v1497 = vld [vmem:[%s284 + $0x4a0] sm:$0xff]
        %v1498 = vld [vmem:[%s284 + $0x4a8] sm:$0xff]
        %v1499 = vld [vmem:[%s284 + $0x4b0] sm:$0xff]
        %v1500 = vld [vmem:[%s284 + $0x4b8] sm:$0xff]
        %v1501 = vld [vmem:[%s284 + $0x4c0] sm:$0xff]
        %v1502 = vld [vmem:[%s284 + $0x4c8] sm:$0xff]
        %v1503 = vld [vmem:[%s284 + $0x4d0] sm:$0xff]
        %v1504 = vld [vmem:[%s284 + $0x4d8] sm:$0xff]
        %v1505 = vld [vmem:[%s284 + $0x4e0] sm:$0xff]
        %v1506 = vld [vmem:[%s284 + $0x4e8] sm:$0xff]
        %v1507 = vld [vmem:[%s284 + $0x4f0] sm:$0xff]
        %v1508 = vld [vmem:[%s284 + $0x4f8] sm:$0xff]
        %v1509 = vld [vmem:[%s284 + $0x500] sm:$0xff]
        %v1510 = vld [vmem:[%s284 + $0x508] sm:$0xff]
        %v1511 = vld [vmem:[%s284 + $0x510] sm:$0xff]
        %v1512 = vld [vmem:[%s284 + $0x518] sm:$0xff]
        %v1513 = vld [vmem:[%s284 + $0x520] sm:$0xff]
        %v1514 = vld [vmem:[%s284 + $0x528] sm:$0xff]
        %v1515 = vld [vmem:[%s284 + $0x530] sm:$0xff]
        %v1516 = vld [vmem:[%s284 + $0x538] sm:$0xff]
        %v1517 = vld [vmem:[%s284 + $0x540] sm:$0xff]
        %v1518 = vld [vmem:[%s284 + $0x548] sm:$0xff]
        %v1519 = vld [vmem:[%s284 + $0x550] sm:$0xff]
        %v1520 = vld [vmem:[%s284 + $0x558] sm:$0xff]
        %v1521 = vld [vmem:[%s284 + $0x560] sm:$0xff]
        %v1522 = vld [vmem:[%s284 + $0x568] sm:$0xff]
        %v1523 = vld [vmem:[%s284 + $0x570] sm:$0xff]
        %v1524 = vld [vmem:[%s284 + $0x578] sm:$0xff]
        %v1525 = vld [vmem:[%s284 + $0x580] sm:$0xff]
        %v1526 = vld [vmem:[%s284 + $0x588] sm:$0xff]
        %v1527 = vld [vmem:[%s284 + $0x590] sm:$0xff]
        %v1528 = vld [vmem:[%s284 + $0x598] sm:$0xff]
        %v1529 = vld [vmem:[%s284 + $0x5a0] sm:$0xff]
        %v1530 = vld [vmem:[%s284 + $0x5a8] sm:$0xff]
        %v1531 = vld [vmem:[%s284 + $0x5b0] sm:$0xff]
        %v1532 = vld [vmem:[%s284 + $0x5b8] sm:$0xff]
        %v1533 = vld [vmem:[%s284 + $0x5c0] sm:$0xff]
        %v1534 = vld [vmem:[%s284 + $0x5c8] sm:$0xff]
        %v1535 = vld [vmem:[%s284 + $0x5d0] sm:$0xff]
        %v1536 = vld [vmem:[%s284 + $0x5d8] sm:$0xff]
        %v1537 = vld [vmem:[%s284 + $0x5e0] sm:$0xff]
        %v1538 = vld [vmem:[%s284 + $0x5e8] sm:$0xff]
        %v1539 = vld [vmem:[%s284 + $0x5f0] sm:$0xff]
        %v1540 = vld [vmem:[%s284 + $0x5f8] sm:$0xff]
        %v1541 = vld [vmem:[%s284 + $0x600] sm:$0xff]
        %v1542 = vld [vmem:[%s284 + $0x608] sm:$0xff]
        %v1543 = vld [vmem:[%s284 + $0x610] sm:$0xff]
        %v1544 = vld [vmem:[%s284 + $0x618] sm:$0xff]
        %v1545 = vld [vmem:[%s284 + $0x620] sm:$0xff]
        %v1546 = vld [vmem:[%s284 + $0x628] sm:$0xff]
        %v1547 = vld [vmem:[%s284 + $0x630] sm:$0xff]
        %v1548 = vld [vmem:[%s284 + $0x638] sm:$0xff]
        %v1549 = vld [vmem:[%s284 + $0x640] sm:$0xff]
        %v1550 = vld [vmem:[%s284 + $0x648] sm:$0xff]
        %v1551 = vld [vmem:[%s284 + $0x650] sm:$0xff]
        %v1552 = vld [vmem:[%s284 + $0x658] sm:$0xff]
        %v1553 = vld [vmem:[%s284 + $0x660] sm:$0xff]
        %v1554 = vld [vmem:[%s284 + $0x668] sm:$0xff]
        %v1555 = vld [vmem:[%s284 + $0x670] sm:$0xff]
        %v1556 = vld [vmem:[%s284 + $0x678] sm:$0xff]
        %v1557 = vld [vmem:[%s284 + $0x680] sm:$0xff]
        %v1558 = vld [vmem:[%s284 + $0x688] sm:$0xff]
        %v1559 = vld [vmem:[%s284 + $0x690] sm:$0xff]
        %v1560 = vld [vmem:[%s284 + $0x698] sm:$0xff]
        %v1561 = vld [vmem:[%s284 + $0x6a0] sm:$0xff]
        %v1562 = vld [vmem:[%s284 + $0x6a8] sm:$0xff]
        %v1563 = vld [vmem:[%s284 + $0x6b0] sm:$0xff]
        %v1564 = vld [vmem:[%s284 + $0x6b8] sm:$0xff]
        %v1565 = vld [vmem:[%s284 + $0x6c0] sm:$0xff]
        %v1566 = vld [vmem:[%s284 + $0x6c8] sm:$0xff]
        %v1567 = vld [vmem:[%s284 + $0x6d0] sm:$0xff]
        %v1568 = vld [vmem:[%s284 + $0x6d8] sm:$0xff]
        %v1569 = vld [vmem:[%s284 + $0x6e0] sm:$0xff]
        %v1570 = vld [vmem:[%s284 + $0x6e8] sm:$0xff]
        %v1571 = vld [vmem:[%s284 + $0x6f0] sm:$0xff]
        %v1572 = vld [vmem:[%s284 + $0x6f8] sm:$0xff]
        %v1573 = vld [vmem:[%s284 + $0x700] sm:$0xff]
        %v1574 = vld [vmem:[%s284 + $0x708] sm:$0xff]
        %v1575 = vld [vmem:[%s284 + $0x710] sm:$0xff]
        %v1576 = vld [vmem:[%s284 + $0x718] sm:$0xff]
        %v1577 = vld [vmem:[%s284 + $0x720] sm:$0xff]
        %v1578 = vld [vmem:[%s284 + $0x728] sm:$0xff]
        %v1579 = vld [vmem:[%s284 + $0x730] sm:$0xff]
        %v1580 = vld [vmem:[%s284 + $0x738] sm:$0xff]
        %v1581 = vld [vmem:[%s284 + $0x740] sm:$0xff]
        %v1582 = vld [vmem:[%s284 + $0x748] sm:$0xff]
        %v1583 = vld [vmem:[%s284 + $0x750] sm:$0xff]
        %v1584 = vld [vmem:[%s284 + $0x758] sm:$0xff]
        %v1585 = vld [vmem:[%s284 + $0x760] sm:$0xff]
        %v1586 = vld [vmem:[%s284 + $0x768] sm:$0xff]
        %v1587 = vld [vmem:[%s284 + $0x770] sm:$0xff]
        %v1588 = vld [vmem:[%s284 + $0x778] sm:$0xff]
        %v1589 = vld [vmem:[%s284 + $0x780] sm:$0xff]
        %v1590 = vld [vmem:[%s284 + $0x788] sm:$0xff]
        %v1591 = vld [vmem:[%s284 + $0x790] sm:$0xff]
        %v1592 = vld [vmem:[%s284 + $0x798] sm:$0xff]
        %v1593 = vld [vmem:[%s284 + $0x7a0] sm:$0xff]
        %v1594 = vld [vmem:[%s284 + $0x7a8] sm:$0xff]
        %v1595 = vld [vmem:[%s284 + $0x7b0] sm:$0xff]
        %v1596 = vld [vmem:[%s284 + $0x7b8] sm:$0xff]
        %v1597 = vld [vmem:[%s284 + $0x7c0] sm:$0xff]
        %v1598 = vld [vmem:[%s284 + $0x7c8] sm:$0xff]
        %v1599 = vld [vmem:[%s284 + $0x7d0] sm:$0xff]
        %v1600 = vld [vmem:[%s284 + $0x7d8] sm:$0xff]
        %v1601 = vld [vmem:[%s284 + $0x7e0] sm:$0xff]
        %v1602 = vld [vmem:[%s284 + $0x7e8] sm:$0xff]
        %v1603 = vld [vmem:[%s284 + $0x7f0] sm:$0xff]
        %v1604 = vld [vmem:[%s284 + $0x7f8] sm:$0xff]
        %v1605 = vld [vmem:[%s284 + $0x800] sm:$0xff]
        %v1606 = vld [vmem:[%s284 + $0x808] sm:$0xff]
        %v1607 = vld [vmem:[%s284 + $0x810] sm:$0xff]
        %v1608 = vld [vmem:[%s284 + $0x818] sm:$0xff]
        %v1609 = vld [vmem:[%s284 + $0x820] sm:$0xff]
        %v1610 = vld [vmem:[%s284 + $0x828] sm:$0xff]
        %v1611 = vld [vmem:[%s284 + $0x830] sm:$0xff]
        %v1612 = vld [vmem:[%s284 + $0x838] sm:$0xff]
        %v1613 = vld [vmem:[%s284 + $0x840] sm:$0xff]
        %v1614 = vld [vmem:[%s284 + $0x848] sm:$0xff]
        %v1615 = vld [vmem:[%s284 + $0x850] sm:$0xff]
        %v1616 = vld [vmem:[%s284 + $0x858] sm:$0xff]
        %v1617 = vld [vmem:[%s284 + $0x860] sm:$0xff]
        %v1618 = vld [vmem:[%s284 + $0x868] sm:$0xff]
        %v1619 = vld [vmem:[%s284 + $0x870] sm:$0xff]
        %v1620 = vld [vmem:[%s284 + $0x878] sm:$0xff]
        %v1621 = vld [vmem:[%s284 + $0x880] sm:$0xff]
        %v1622 = vld [vmem:[%s284 + $0x888] sm:$0xff]
        %v1623 = vld [vmem:[%s284 + $0x890] sm:$0xff]
        %v1624 = vld [vmem:[%s284 + $0x898] sm:$0xff]
        %v1625 = vld [vmem:[%s284 + $0x8a0] sm:$0xff]
        %v1626 = vld [vmem:[%s284 + $0x8a8] sm:$0xff]
        %v1627 = vld [vmem:[%s284 + $0x8b0] sm:$0xff]
        %v1628 = vld [vmem:[%s284 + $0x8b8] sm:$0xff]
        %v1629 = vld [vmem:[%s284 + $0x8c0] sm:$0xff]
        %v1630 = vld [vmem:[%s284 + $0x8c8] sm:$0xff]
        %v1631 = vld [vmem:[%s284 + $0x8d0] sm:$0xff]
        %v1632 = vld [vmem:[%s284 + $0x8d8] sm:$0xff]
        %v1633 = vld [vmem:[%s284 + $0x8e0] sm:$0xff]
        %v1634 = vld [vmem:[%s284 + $0x8e8] sm:$0xff]
        %v1635 = vld [vmem:[%s284 + $0x8f0] sm:$0xff]
        %v1636 = vld [vmem:[%s284 + $0x8f8] sm:$0xff]
        %v1637 = vld [vmem:[%s284 + $0x900] sm:$0xff]
        %v1638 = vld [vmem:[%s284 + $0x908] sm:$0xff]
        %v1639 = vld [vmem:[%s284 + $0x910] sm:$0xff]
        %v1640 = vld [vmem:[%s284 + $0x918] sm:$0xff]
        %v1641 = vld [vmem:[%s284 + $0x920] sm:$0xff]
        %v1642 = vld [vmem:[%s284 + $0x928] sm:$0xff]
        %v1643 = vld [vmem:[%s284 + $0x930] sm:$0xff]
        %v1644 = vld [vmem:[%s284 + $0x938] sm:$0xff]
        %v1645 = vld [vmem:[%s284 + $0x940] sm:$0xff]
        %v1646 = vld [vmem:[%s284 + $0x948] sm:$0xff]
        %v1647 = vld [vmem:[%s284 + $0x950] sm:$0xff]
        %v1648 = vld [vmem:[%s284 + $0x958] sm:$0xff]
        %v1649 = vld [vmem:[%s284 + $0x960] sm:$0xff]
        %v1650 = vld [vmem:[%s284 + $0x968] sm:$0xff]
        %v1651 = vld [vmem:[%s284 + $0x970] sm:$0xff]
        %v1652 = vld [vmem:[%s284 + $0x978] sm:$0xff]
        %v1653 = vld [vmem:[%s284 + $0x980] sm:$0xff]
        %v1654 = vld [vmem:[%s284 + $0x988] sm:$0xff]
        %v1655 = vld [vmem:[%s284 + $0x990] sm:$0xff]
        %v1656 = vld [vmem:[%s284 + $0x998] sm:$0xff]
        %v1657 = vld [vmem:[%s284 + $0x9a0] sm:$0xff]
        %v1658 = vld [vmem:[%s284 + $0x9a8] sm:$0xff]
        %v1659 = vld [vmem:[%s284 + $0x9b0] sm:$0xff]
        %v1660 = vld [vmem:[%s284 + $0x9b8] sm:$0xff]
        %v1661 = vld [vmem:[%s284 + $0x9c0] sm:$0xff]
        %v1662 = vld [vmem:[%s284 + $0x9c8] sm:$0xff]
        %v1663 = vld [vmem:[%s284 + $0x9d0] sm:$0xff]
        %v1664 = vld [vmem:[%s284 + $0x9d8] sm:$0xff]
        %v1665 = vld [vmem:[%s284 + $0x9e0] sm:$0xff]
        %v1666 = vld [vmem:[%s284 + $0x9e8] sm:$0xff]
        %v1667 = vld [vmem:[%s284 + $0x9f0] sm:$0xff]
        %v1668 = vld [vmem:[%s284 + $0x9f8] sm:$0xff]
        %v1669 = vld [vmem:[%s284 + $0xa00] sm:$0xff]
        %v1670 = vld [vmem:[%s284 + $0xa08] sm:$0xff]
        %v1671 = vld [vmem:[%s284 + $0xa10] sm:$0xff]
        %v1672 = vld [vmem:[%s284 + $0xa18] sm:$0xff]
        %v1673 = vld [vmem:[%s284 + $0xa20] sm:$0xff]
        %v1674 = vld [vmem:[%s284 + $0xa28] sm:$0xff]
        %v1675 = vld [vmem:[%s284 + $0xa30] sm:$0xff]
        %v1676 = vld [vmem:[%s284 + $0xa38] sm:$0xff]
        %v1677 = vld [vmem:[%s284 + $0xa40] sm:$0xff]
        %v1678 = vld [vmem:[%s284 + $0xa48] sm:$0xff]
        %v1679 = vld [vmem:[%s284 + $0xa50] sm:$0xff]
        %v1680 = vld [vmem:[%s284 + $0xa58] sm:$0xff]
        %v1681 = vld [vmem:[%s284 + $0xa60] sm:$0xff]
        %v1682 = vld [vmem:[%s284 + $0xa68] sm:$0xff]
        %v1683 = vld [vmem:[%s284 + $0xa70] sm:$0xff]
        %v1684 = vld [vmem:[%s284 + $0xa78] sm:$0xff]
        %v1685 = vld [vmem:[%s284 + $0xa80] sm:$0xff]
        %v1686 = vld [vmem:[%s284 + $0xa88] sm:$0xff]
        %v1687 = vld [vmem:[%s284 + $0xa90] sm:$0xff]
        %v1688 = vld [vmem:[%s284 + $0xa98] sm:$0xff]
        %v1689 = vld [vmem:[%s284 + $0xaa0] sm:$0xff]
        %v1690 = vld [vmem:[%s284 + $0xaa8] sm:$0xff]
        %v1691 = vld [vmem:[%s284 + $0xab0] sm:$0xff]
        %v1692 = vld [vmem:[%s284 + $0xab8] sm:$0xff]
        %v1693 = vld [vmem:[%s284 + $0xac0] sm:$0xff]
        %v1694 = vld [vmem:[%s284 + $0xac8] sm:$0xff]
        %v1695 = vld [vmem:[%s284 + $0xad0] sm:$0xff]
        %v1696 = vld [vmem:[%s284 + $0xad8] sm:$0xff]
        %v1697 = vld [vmem:[%s284 + $0xae0] sm:$0xff]
        %v1698 = vld [vmem:[%s284 + $0xae8] sm:$0xff]
        %v1699 = vld [vmem:[%s284 + $0xaf0] sm:$0xff]
        %v1700 = vld [vmem:[%s284 + $0xaf8] sm:$0xff]
        %v1701 = vld [vmem:[%s284 + $0xb00] sm:$0xff]
        %v1702 = vld [vmem:[%s284 + $0xb08] sm:$0xff]
        %v1703 = vld [vmem:[%s284 + $0xb10] sm:$0xff]
        %v1704 = vld [vmem:[%s284 + $0xb18] sm:$0xff]
        %v1705 = vld [vmem:[%s284 + $0xb20] sm:$0xff]
        %v1706 = vld [vmem:[%s284 + $0xb28] sm:$0xff]
        %v1707 = vld [vmem:[%s284 + $0xb30] sm:$0xff]
        %v1708 = vld [vmem:[%s284 + $0xb38] sm:$0xff]
        %v1709 = vld [vmem:[%s284 + $0xb40] sm:$0xff]
        %v1710 = vld [vmem:[%s284 + $0xb48] sm:$0xff]
        %v1711 = vld [vmem:[%s284 + $0xb50] sm:$0xff]
        %v1712 = vld [vmem:[%s284 + $0xb58] sm:$0xff]
        %v1713 = vld [vmem:[%s284 + $0xb60] sm:$0xff]
        %v1714 = vld [vmem:[%s284 + $0xb68] sm:$0xff]
        %v1715 = vld [vmem:[%s284 + $0xb70] sm:$0xff]
        %v1716 = vld [vmem:[%s284 + $0xb78] sm:$0xff]
        %v1717 = vld [vmem:[%s284 + $0xb80] sm:$0xff]
        %v1718 = vld [vmem:[%s284 + $0xb88] sm:$0xff]
        %v1719 = vld [vmem:[%s284 + $0xb90] sm:$0xff]
        %v1720 = vld [vmem:[%s284 + $0xb98] sm:$0xff]
        %v1721 = vld [vmem:[%s284 + $0xba0] sm:$0xff]
        %v1722 = vld [vmem:[%s284 + $0xba8] sm:$0xff]
        %v1723 = vld [vmem:[%s284 + $0xbb0] sm:$0xff]
        %v1724 = vld [vmem:[%s284 + $0xbb8] sm:$0xff]
        %v1725 = vld [vmem:[%s284 + $0xbc0] sm:$0xff]
        %v1726 = vld [vmem:[%s284 + $0xbc8] sm:$0xff]
        %v1727 = vld [vmem:[%s284 + $0xbd0] sm:$0xff]
        %v1728 = vld [vmem:[%s284 + $0xbd8] sm:$0xff]
        %v1729 = vld [vmem:[%s284 + $0xbe0] sm:$0xff]
        %v1730 = vld [vmem:[%s284 + $0xbe8] sm:$0xff]
        %v1731 = vld [vmem:[%s284 + $0xbf0] sm:$0xff]
        %v1732 = vld [vmem:[%s284 + $0xbf8] sm:$0xff]
        %v1733 = vld [vmem:[%s284 + $0xc00] sm:$0xff]
        %v1734 = vld [vmem:[%s284 + $0xc08] sm:$0xff]
        %v1735 = vld [vmem:[%s284 + $0xc10] sm:$0xff]
        %v1736 = vld [vmem:[%s284 + $0xc18] sm:$0xff]
        %v1737 = vld [vmem:[%s284 + $0xc20] sm:$0xff]
        %v1738 = vld [vmem:[%s284 + $0xc28] sm:$0xff]
        %v1739 = vld [vmem:[%s284 + $0xc30] sm:$0xff]
        %v1740 = vld [vmem:[%s284 + $0xc38] sm:$0xff]
        %v1741 = vld [vmem:[%s284 + $0xc40] sm:$0xff]
        %v1742 = vld [vmem:[%s284 + $0xc48] sm:$0xff]
        %v1743 = vld [vmem:[%s284 + $0xc50] sm:$0xff]
        %v1744 = vld [vmem:[%s284 + $0xc58] sm:$0xff]
        %v1745 = vld [vmem:[%s284 + $0xc60] sm:$0xff]
        %v1746 = vld [vmem:[%s284 + $0xc68] sm:$0xff]
        %v1747 = vld [vmem:[%s284 + $0xc70] sm:$0xff]
        %v1748 = vld [vmem:[%s284 + $0xc78] sm:$0xff]
        %v1749 = vld [vmem:[%s284 + $0xc80] sm:$0xff]
        %v1750 = vld [vmem:[%s284 + $0xc88] sm:$0xff]
        %v1751 = vld [vmem:[%s284 + $0xc90] sm:$0xff]
        %v1752 = vld [vmem:[%s284 + $0xc98] sm:$0xff]
        %v1753 = vld [vmem:[%s284 + $0xca0] sm:$0xff]
        %v1754 = vld [vmem:[%s284 + $0xca8] sm:$0xff]
        %v1755 = vld [vmem:[%s284 + $0xcb0] sm:$0xff]
        %v1756 = vld [vmem:[%s284 + $0xcb8] sm:$0xff]
        %v1757 = vld [vmem:[%s284 + $0xcc0] sm:$0xff]
        %v1758 = vld [vmem:[%s284 + $0xcc8] sm:$0xff]
        %v1759 = vld [vmem:[%s284 + $0xcd0] sm:$0xff]
        %v1760 = vld [vmem:[%s284 + $0xcd8] sm:$0xff]
        %v1761 = vld [vmem:[%s284 + $0xce0] sm:$0xff]
        %v1762 = vld [vmem:[%s284 + $0xce8] sm:$0xff]
        %v1763 = vld [vmem:[%s284 + $0xcf0] sm:$0xff]
        %v1764 = vld [vmem:[%s284 + $0xcf8] sm:$0xff]
        %v1765 = vld [vmem:[%s284 + $0xd00] sm:$0xff]
        %v1766 = vld [vmem:[%s284 + $0xd08] sm:$0xff]
        %v1767 = vld [vmem:[%s284 + $0xd10] sm:$0xff]
        %v1768 = vld [vmem:[%s284 + $0xd18] sm:$0xff]
        %v1769 = vld [vmem:[%s284 + $0xd20] sm:$0xff]
        %v1770 = vld [vmem:[%s284 + $0xd28] sm:$0xff]
        %v1771 = vld [vmem:[%s284 + $0xd30] sm:$0xff]
        %v1772 = vld [vmem:[%s284 + $0xd38] sm:$0xff]
        %v1773 = vld [vmem:[%s284 + $0xd40] sm:$0xff]
        %v1774 = vld [vmem:[%s284 + $0xd48] sm:$0xff]
        %v1775 = vld [vmem:[%s284 + $0xd50] sm:$0xff]
        %v1776 = vld [vmem:[%s284 + $0xd58] sm:$0xff]
        %v1777 = vld [vmem:[%s284 + $0xd60] sm:$0xff]
        %v1778 = vld [vmem:[%s284 + $0xd68] sm:$0xff]
        %v1779 = vld [vmem:[%s284 + $0xd70] sm:$0xff]
        %v1780 = vld [vmem:[%s284 + $0xd78] sm:$0xff]
        %v1781 = vld [vmem:[%s284 + $0xd80] sm:$0xff]
        %v1782 = vld [vmem:[%s284 + $0xd88] sm:$0xff]
        %v1783 = vld [vmem:[%s284 + $0xd90] sm:$0xff]
        %v1784 = vld [vmem:[%s284 + $0xd98] sm:$0xff]
        %v1785 = vld [vmem:[%s284 + $0xda0] sm:$0xff]
        %v1786 = vld [vmem:[%s284 + $0xda8] sm:$0xff]
        %v1787 = vld [vmem:[%s284 + $0xdb0] sm:$0xff]
        %v1788 = vld [vmem:[%s284 + $0xdb8] sm:$0xff]
        %v1789 = vld [vmem:[%s284 + $0xdc0] sm:$0xff]
        %v1790 = vld [vmem:[%s284 + $0xdc8] sm:$0xff]
        %v1791 = vld [vmem:[%s284 + $0xdd0] sm:$0xff]
        %v1792 = vld [vmem:[%s284 + $0xdd8] sm:$0xff]
        %v1793 = vld [vmem:[%s284 + $0xde0] sm:$0xff]
        %v1794 = vld [vmem:[%s284 + $0xde8] sm:$0xff]
        %v1795 = vld [vmem:[%s284 + $0xdf0] sm:$0xff]
        %v1796 = vld [vmem:[%s284 + $0xdf8] sm:$0xff]
        %v1797 = vld [vmem:[%s284 + $0xe00] sm:$0xff]
        %v1798 = vld [vmem:[%s284 + $0xe08] sm:$0xff]
        %v1799 = vld [vmem:[%s284 + $0xe10] sm:$0xff]
        %v1800 = vld [vmem:[%s284 + $0xe18] sm:$0xff]
        %v1801 = vld [vmem:[%s284 + $0xe20] sm:$0xff]
        %v1802 = vld [vmem:[%s284 + $0xe28] sm:$0xff]
        %v1803 = vld [vmem:[%s284 + $0xe30] sm:$0xff]
        %v1804 = vld [vmem:[%s284 + $0xe38] sm:$0xff]
        %v1805 = vld [vmem:[%s284 + $0xe40] sm:$0xff]
        %v1806 = vld [vmem:[%s284 + $0xe48] sm:$0xff]
        %v1807 = vld [vmem:[%s284 + $0xe50] sm:$0xff]
        %v1808 = vld [vmem:[%s284 + $0xe58] sm:$0xff]
        %v1809 = vld [vmem:[%s284 + $0xe60] sm:$0xff]
        %v1810 = vld [vmem:[%s284 + $0xe68] sm:$0xff]
        %v1811 = vld [vmem:[%s284 + $0xe70] sm:$0xff]
        %v1812 = vld [vmem:[%s284 + $0xe78] sm:$0xff]
        %v1813 = vld [vmem:[%s284 + $0xe80] sm:$0xff]
        %v1814 = vld [vmem:[%s284 + $0xe88] sm:$0xff]
        %v1815 = vld [vmem:[%s284 + $0xe90] sm:$0xff]
        %v1816 = vld [vmem:[%s284 + $0xe98] sm:$0xff]
        %v1817 = vld [vmem:[%s284 + $0xea0] sm:$0xff]
        %v1818 = vld [vmem:[%s284 + $0xea8] sm:$0xff]
        %v1819 = vld [vmem:[%s284 + $0xeb0] sm:$0xff]
        %v1820 = vld [vmem:[%s284 + $0xeb8] sm:$0xff]
        %v1821 = vld [vmem:[%s284 + $0xec0] sm:$0xff]
        %v1822 = vld [vmem:[%s284 + $0xec8] sm:$0xff]
        %v1823 = vld [vmem:[%s284 + $0xed0] sm:$0xff]
        %v1824 = vld [vmem:[%s284 + $0xed8] sm:$0xff]
        %v1825 = vld [vmem:[%s284 + $0xee0] sm:$0xff]
        %v1826 = vld [vmem:[%s284 + $0xee8] sm:$0xff]
        %v1827 = vld [vmem:[%s284 + $0xef0] sm:$0xff]
        %v1828 = vld [vmem:[%s284 + $0xef8] sm:$0xff]
        %v1829 = vld [vmem:[%s284 + $0xf00] sm:$0xff]
        %v1830 = vld [vmem:[%s284 + $0xf08] sm:$0xff]
        %v1831 = vld [vmem:[%s284 + $0xf10] sm:$0xff]
        %v1832 = vld [vmem:[%s284 + $0xf18] sm:$0xff]
        %v1833 = vld [vmem:[%s284 + $0xf20] sm:$0xff]
        %v1834 = vld [vmem:[%s284 + $0xf28] sm:$0xff]
        %v1835 = vld [vmem:[%s284 + $0xf30] sm:$0xff]
        %v1836 = vld [vmem:[%s284 + $0xf38] sm:$0xff]
        %v1837 = vld [vmem:[%s284 + $0xf40] sm:$0xff]
        %v1838 = vld [vmem:[%s284 + $0xf48] sm:$0xff]
        %v1839 = vld [vmem:[%s284 + $0xf50] sm:$0xff]
        %v1840 = vld [vmem:[%s284 + $0xf58] sm:$0xff]
        %v1841 = vld [vmem:[%s284 + $0xf60] sm:$0xff]
        %v1842 = vld [vmem:[%s284 + $0xf68] sm:$0xff]
        %v1843 = vld [vmem:[%s284 + $0xf70] sm:$0xff]
        %v1844 = vld [vmem:[%s284 + $0xf78] sm:$0xff]
        %v1845 = vld [vmem:[%s284 + $0xf80] sm:$0xff]
        %v1846 = vld [vmem:[%s284 + $0xf88] sm:$0xff]
        %v1847 = vld [vmem:[%s284 + $0xf90] sm:$0xff]
        %v1848 = vld [vmem:[%s284 + $0xf98] sm:$0xff]
        %v1849 = vld [vmem:[%s284 + $0xfa0] sm:$0xff]
        %v1850 = vld [vmem:[%s284 + $0xfa8] sm:$0xff]
        %v1851 = vld [vmem:[%s284 + $0xfb0] sm:$0xff]
        %v1852 = vld [vmem:[%s284 + $0xfb8] sm:$0xff]
        %v1853 = vld [vmem:[%s284 + $0xfc0] sm:$0xff]
        %v1854 = vld [vmem:[%s284 + $0xfc8] sm:$0xff]
        %v1855 = vld [vmem:[%s284 + $0xfd0] sm:$0xff]
        %v1856 = vld [vmem:[%s284 + $0xfd8] sm:$0xff]
        %v1857 = vld [vmem:[%s284 + $0xfe0] sm:$0xff]
        %v1858 = vld [vmem:[%s284 + $0xfe8] sm:$0xff]
        %v1859 = vld [vmem:[%s284 + $0xff0] sm:$0xff]
        %v1860 = vld [vmem:[%s284 + $0xff8] sm:$0xff]
        %v1861 = vld [vmem:[%s294] sm:$0xff]
        %v1863 = vperm.slane %v1861, 0
        %v1864 = vperm.slane %v1861, 1
        %v1865 = vperm.slane %v1861, 2
        %v1866 = vperm.slane %v1861, 3
        %v1867 = vperm.slane %v1861, 4
        %v1868 = vperm.slane %v1861, 5
        %v1869 = vperm.slane %v1861, 6
        %v1870 = vperm.slane %v1861, 7
        %v2391 = vunpack.c.l.b16 %v1349
        %v2392 = vunpack.c.h.b16 %v1349
        %v2393 = vunpack.c.l.b16 %v1350
        %v2394 = vunpack.c.h.b16 %v1350
        %v2395 = vunpack.c.l.b16 %v1351
        %v2396 = vunpack.c.h.b16 %v1351
        %v2397 = vunpack.c.l.b16 %v1352
        %v2398 = vunpack.c.h.b16 %v1352
        %v2399 = vunpack.c.l.b16 %v1353
        %v2400 = vunpack.c.h.b16 %v1353
        %v2401 = vunpack.c.l.b16 %v1354
        %v2402 = vunpack.c.h.b16 %v1354
        %v2403 = vunpack.c.l.b16 %v1355
        %v2404 = vunpack.c.h.b16 %v1355
        %v2405 = vunpack.c.l.b16 %v1356
        %v2406 = vunpack.c.h.b16 %v1356
        %v2407 = vunpack.c.l.b16 %v1357
        %v2408 = vunpack.c.h.b16 %v1357
        %v2409 = vunpack.c.l.b16 %v1358
        %v2410 = vunpack.c.h.b16 %v1358
        %v2411 = vunpack.c.l.b16 %v1359
        %v2412 = vunpack.c.h.b16 %v1359
        %v2413 = vunpack.c.l.b16 %v1360
        %v2414 = vunpack.c.h.b16 %v1360
        %v2415 = vunpack.c.l.b16 %v1361
        %v2416 = vunpack.c.h.b16 %v1361
        %v2417 = vunpack.c.l.b16 %v1362
        %v2418 = vunpack.c.h.b16 %v1362
        %v2419 = vunpack.c.l.b16 %v1363
        %v2420 = vunpack.c.h.b16 %v1363
        %v2421 = vunpack.c.l.b16 %v1364
        %v2422 = vunpack.c.h.b16 %v1364
        %v2423 = vunpack.c.l.b16 %v1365
        %v2424 = vunpack.c.h.b16 %v1365
        %v2425 = vunpack.c.l.b16 %v1366
        %v2426 = vunpack.c.h.b16 %v1366
        %v2427 = vunpack.c.l.b16 %v1367
        %v2428 = vunpack.c.h.b16 %v1367
        %v2429 = vunpack.c.l.b16 %v1368
        %v2430 = vunpack.c.h.b16 %v1368
        %v2431 = vunpack.c.l.b16 %v1369
        %v2432 = vunpack.c.h.b16 %v1369
        %v2433 = vunpack.c.l.b16 %v1370
        %v2434 = vunpack.c.h.b16 %v1370
        %v2435 = vunpack.c.l.b16 %v1371
        %v2436 = vunpack.c.h.b16 %v1371
        %v2437 = vunpack.c.l.b16 %v1372
        %v2438 = vunpack.c.h.b16 %v1372
        %v2439 = vunpack.c.l.b16 %v1373
        %v2440 = vunpack.c.h.b16 %v1373
        %v2441 = vunpack.c.l.b16 %v1374
        %v2442 = vunpack.c.h.b16 %v1374
        %v2443 = vunpack.c.l.b16 %v1375
        %v2444 = vunpack.c.h.b16 %v1375
        %v2445 = vunpack.c.l.b16 %v1376
        %v2446 = vunpack.c.h.b16 %v1376
        %v2447 = vunpack.c.l.b16 %v1377
        %v2448 = vunpack.c.h.b16 %v1377
        %v2449 = vunpack.c.l.b16 %v1378
        %v2450 = vunpack.c.h.b16 %v1378
        %v2451 = vunpack.c.l.b16 %v1379
        %v2452 = vunpack.c.h.b16 %v1379
        %v2453 = vunpack.c.l.b16 %v1380
        %v2454 = vunpack.c.h.b16 %v1380
        %v2455 = vunpack.c.l.b16 %v1381
        %v2456 = vunpack.c.h.b16 %v1381
        %v2457 = vunpack.c.l.b16 %v1382
        %v2458 = vunpack.c.h.b16 %v1382
        %v2459 = vunpack.c.l.b16 %v1383
        %v2460 = vunpack.c.h.b16 %v1383
        %v2461 = vunpack.c.l.b16 %v1384
        %v2462 = vunpack.c.h.b16 %v1384
        %v2463 = vunpack.c.l.b16 %v1385
        %v2464 = vunpack.c.h.b16 %v1385
        %v2465 = vunpack.c.l.b16 %v1386
        %v2466 = vunpack.c.h.b16 %v1386
        %v2467 = vunpack.c.l.b16 %v1387
        %v2468 = vunpack.c.h.b16 %v1387
        %v2469 = vunpack.c.l.b16 %v1388
        %v2470 = vunpack.c.h.b16 %v1388
        %v2471 = vunpack.c.l.b16 %v1389
        %v2472 = vunpack.c.h.b16 %v1389
        %v2473 = vunpack.c.l.b16 %v1390
        %v2474 = vunpack.c.h.b16 %v1390
        %v2475 = vunpack.c.l.b16 %v1391
        %v2476 = vunpack.c.h.b16 %v1391
        %v2477 = vunpack.c.l.b16 %v1392
        %v2478 = vunpack.c.h.b16 %v1392
        %v2479 = vunpack.c.l.b16 %v1393
        %v2480 = vunpack.c.h.b16 %v1393
        %v2481 = vunpack.c.l.b16 %v1394
        %v2482 = vunpack.c.h.b16 %v1394
        %v2483 = vunpack.c.l.b16 %v1395
        %v2484 = vunpack.c.h.b16 %v1395
        %v2485 = vunpack.c.l.b16 %v1396
        %v2486 = vunpack.c.h.b16 %v1396
        %v2487 = vunpack.c.l.b16 %v1397
        %v2488 = vunpack.c.h.b16 %v1397
        %v2489 = vunpack.c.l.b16 %v1398
        %v2490 = vunpack.c.h.b16 %v1398
        %v2491 = vunpack.c.l.b16 %v1399
        %v2492 = vunpack.c.h.b16 %v1399
        %v2493 = vunpack.c.l.b16 %v1400
        %v2494 = vunpack.c.h.b16 %v1400
        %v2495 = vunpack.c.l.b16 %v1401
        %v2496 = vunpack.c.h.b16 %v1401
        %v2497 = vunpack.c.l.b16 %v1402
        %v2498 = vunpack.c.h.b16 %v1402
        %v2499 = vunpack.c.l.b16 %v1403
        %v2500 = vunpack.c.h.b16 %v1403
        %v2501 = vunpack.c.l.b16 %v1404
        %v2502 = vunpack.c.h.b16 %v1404
        %v2503 = vunpack.c.l.b16 %v1405
        %v2504 = vunpack.c.h.b16 %v1405
        %v2505 = vunpack.c.l.b16 %v1406
        %v2506 = vunpack.c.h.b16 %v1406
        %v2507 = vunpack.c.l.b16 %v1407
        %v2508 = vunpack.c.h.b16 %v1407
        %v2509 = vunpack.c.l.b16 %v1408
        %v2510 = vunpack.c.h.b16 %v1408
        %v2511 = vunpack.c.l.b16 %v1409
        %v2512 = vunpack.c.h.b16 %v1409
        %v2513 = vunpack.c.l.b16 %v1410
        %v2514 = vunpack.c.h.b16 %v1410
        %v2515 = vunpack.c.l.b16 %v1411
        %v2516 = vunpack.c.h.b16 %v1411
        %v2517 = vunpack.c.l.b16 %v1412
        %v2518 = vunpack.c.h.b16 %v1412
        %v2519 = vunpack.c.l.b16 %v1413
        %v2520 = vunpack.c.h.b16 %v1413
        %v2521 = vunpack.c.l.b16 %v1414
        %v2522 = vunpack.c.h.b16 %v1414
        %v2523 = vunpack.c.l.b16 %v1415
        %v2524 = vunpack.c.h.b16 %v1415
        %v2525 = vunpack.c.l.b16 %v1416
        %v2526 = vunpack.c.h.b16 %v1416
        %v2527 = vunpack.c.l.b16 %v1417
        %v2528 = vunpack.c.h.b16 %v1417
        %v2529 = vunpack.c.l.b16 %v1418
        %v2530 = vunpack.c.h.b16 %v1418
        %v2531 = vunpack.c.l.b16 %v1419
        %v2532 = vunpack.c.h.b16 %v1419
        %v2533 = vunpack.c.l.b16 %v1420
        %v2534 = vunpack.c.h.b16 %v1420
        %v2535 = vunpack.c.l.b16 %v1421
        %v2536 = vunpack.c.h.b16 %v1421
        %v2537 = vunpack.c.l.b16 %v1422
        %v2538 = vunpack.c.h.b16 %v1422
        %v2539 = vunpack.c.l.b16 %v1423
        %v2540 = vunpack.c.h.b16 %v1423
        %v2541 = vunpack.c.l.b16 %v1424
        %v2542 = vunpack.c.h.b16 %v1424
        %v2543 = vunpack.c.l.b16 %v1425
        %v2544 = vunpack.c.h.b16 %v1425
        %v2545 = vunpack.c.l.b16 %v1426
        %v2546 = vunpack.c.h.b16 %v1426
        %v2547 = vunpack.c.l.b16 %v1427
        %v2548 = vunpack.c.h.b16 %v1427
        %v2549 = vunpack.c.l.b16 %v1428
        %v2550 = vunpack.c.h.b16 %v1428
        %v2551 = vunpack.c.l.b16 %v1429
        %v2552 = vunpack.c.h.b16 %v1429
        %v2553 = vunpack.c.l.b16 %v1430
        %v2554 = vunpack.c.h.b16 %v1430
        %v2555 = vunpack.c.l.b16 %v1431
        %v2556 = vunpack.c.h.b16 %v1431
        %v2557 = vunpack.c.l.b16 %v1432
        %v2558 = vunpack.c.h.b16 %v1432
        %v2559 = vunpack.c.l.b16 %v1433
        %v2560 = vunpack.c.h.b16 %v1433
        %v2561 = vunpack.c.l.b16 %v1434
        %v2562 = vunpack.c.h.b16 %v1434
        %v2563 = vunpack.c.l.b16 %v1435
        %v2564 = vunpack.c.h.b16 %v1435
        %v2565 = vunpack.c.l.b16 %v1436
        %v2566 = vunpack.c.h.b16 %v1436
        %v2567 = vunpack.c.l.b16 %v1437
        %v2568 = vunpack.c.h.b16 %v1437
        %v2569 = vunpack.c.l.b16 %v1438
        %v2570 = vunpack.c.h.b16 %v1438
        %v2571 = vunpack.c.l.b16 %v1439
        %v2572 = vunpack.c.h.b16 %v1439
        %v2573 = vunpack.c.l.b16 %v1440
        %v2574 = vunpack.c.h.b16 %v1440
        %v2575 = vunpack.c.l.b16 %v1441
        %v2576 = vunpack.c.h.b16 %v1441
        %v2577 = vunpack.c.l.b16 %v1442
        %v2578 = vunpack.c.h.b16 %v1442
        %v2579 = vunpack.c.l.b16 %v1443
        %v2580 = vunpack.c.h.b16 %v1443
        %v2581 = vunpack.c.l.b16 %v1444
        %v2582 = vunpack.c.h.b16 %v1444
        %v2583 = vunpack.c.l.b16 %v1445
        %v2584 = vunpack.c.h.b16 %v1445
        %v2585 = vunpack.c.l.b16 %v1446
        %v2586 = vunpack.c.h.b16 %v1446
        %v2587 = vunpack.c.l.b16 %v1447
        %v2588 = vunpack.c.h.b16 %v1447
        %v2589 = vunpack.c.l.b16 %v1448
        %v2590 = vunpack.c.h.b16 %v1448
        %v2591 = vunpack.c.l.b16 %v1449
        %v2592 = vunpack.c.h.b16 %v1449
        %v2593 = vunpack.c.l.b16 %v1450
        %v2594 = vunpack.c.h.b16 %v1450
        %v2595 = vunpack.c.l.b16 %v1451
        %v2596 = vunpack.c.h.b16 %v1451
        %v2597 = vunpack.c.l.b16 %v1452
        %v2598 = vunpack.c.h.b16 %v1452
        %v2599 = vunpack.c.l.b16 %v1453
        %v2600 = vunpack.c.h.b16 %v1453
        %v2601 = vunpack.c.l.b16 %v1454
        %v2602 = vunpack.c.h.b16 %v1454
        %v2603 = vunpack.c.l.b16 %v1455
        %v2604 = vunpack.c.h.b16 %v1455
        %v2605 = vunpack.c.l.b16 %v1456
        %v2606 = vunpack.c.h.b16 %v1456
        %v2607 = vunpack.c.l.b16 %v1457
        %v2608 = vunpack.c.h.b16 %v1457
        %v2609 = vunpack.c.l.b16 %v1458
        %v2610 = vunpack.c.h.b16 %v1458
        %v2611 = vunpack.c.l.b16 %v1459
        %v2612 = vunpack.c.h.b16 %v1459
        %v2613 = vunpack.c.l.b16 %v1460
        %v2614 = vunpack.c.h.b16 %v1460
        %v2615 = vunpack.c.l.b16 %v1461
        %v2616 = vunpack.c.h.b16 %v1461
        %v2617 = vunpack.c.l.b16 %v1462
        %v2618 = vunpack.c.h.b16 %v1462
        %v2619 = vunpack.c.l.b16 %v1463
        %v2620 = vunpack.c.h.b16 %v1463
        %v2621 = vunpack.c.l.b16 %v1464
        %v2622 = vunpack.c.h.b16 %v1464
        %v2623 = vunpack.c.l.b16 %v1465
        %v2624 = vunpack.c.h.b16 %v1465
        %v2625 = vunpack.c.l.b16 %v1466
        %v2626 = vunpack.c.h.b16 %v1466
        %v2627 = vunpack.c.l.b16 %v1467
        %v2628 = vunpack.c.h.b16 %v1467
        %v2629 = vunpack.c.l.b16 %v1468
        %v2630 = vunpack.c.h.b16 %v1468
        %v2631 = vunpack.c.l.b16 %v1469
        %v2632 = vunpack.c.h.b16 %v1469
        %v2633 = vunpack.c.l.b16 %v1470
        %v2634 = vunpack.c.h.b16 %v1470
        %v2635 = vunpack.c.l.b16 %v1471
        %v2636 = vunpack.c.h.b16 %v1471
        %v2637 = vunpack.c.l.b16 %v1472
        %v2638 = vunpack.c.h.b16 %v1472
        %v2639 = vunpack.c.l.b16 %v1473
        %v2640 = vunpack.c.h.b16 %v1473
        %v2641 = vunpack.c.l.b16 %v1474
        %v2642 = vunpack.c.h.b16 %v1474
        %v2643 = vunpack.c.l.b16 %v1475
        %v2644 = vunpack.c.h.b16 %v1475
        %v2645 = vunpack.c.l.b16 %v1476
        %v2646 = vunpack.c.h.b16 %v1476
        %v2647 = vunpack.c.l.b16 %v1477
        %v2648 = vunpack.c.h.b16 %v1477
        %v2649 = vunpack.c.l.b16 %v1478
        %v2650 = vunpack.c.h.b16 %v1478
        %v2651 = vunpack.c.l.b16 %v1479
        %v2652 = vunpack.c.h.b16 %v1479
        %v2653 = vunpack.c.l.b16 %v1480
        %v2654 = vunpack.c.h.b16 %v1480
        %v2655 = vunpack.c.l.b16 %v1481
        %v2656 = vunpack.c.h.b16 %v1481
        %v2657 = vunpack.c.l.b16 %v1482
        %v2658 = vunpack.c.h.b16 %v1482
        %v2659 = vunpack.c.l.b16 %v1483
        %v2660 = vunpack.c.h.b16 %v1483
        %v2661 = vunpack.c.l.b16 %v1484
        %v2662 = vunpack.c.h.b16 %v1484
        %v2663 = vunpack.c.l.b16 %v1485
        %v2664 = vunpack.c.h.b16 %v1485
        %v2665 = vunpack.c.l.b16 %v1486
        %v2666 = vunpack.c.h.b16 %v1486
        %v2667 = vunpack.c.l.b16 %v1487
        %v2668 = vunpack.c.h.b16 %v1487
        %v2669 = vunpack.c.l.b16 %v1488
        %v2670 = vunpack.c.h.b16 %v1488
        %v2671 = vunpack.c.l.b16 %v1489
        %v2672 = vunpack.c.h.b16 %v1489
        %v2673 = vunpack.c.l.b16 %v1490
        %v2674 = vunpack.c.h.b16 %v1490
        %v2675 = vunpack.c.l.b16 %v1491
        %v2676 = vunpack.c.h.b16 %v1491
        %v2677 = vunpack.c.l.b16 %v1492
        %v2678 = vunpack.c.h.b16 %v1492
        %v2679 = vunpack.c.l.b16 %v1493
        %v2680 = vunpack.c.h.b16 %v1493
        %v2681 = vunpack.c.l.b16 %v1494
        %v2682 = vunpack.c.h.b16 %v1494
        %v2683 = vunpack.c.l.b16 %v1495
        %v2684 = vunpack.c.h.b16 %v1495
        %v2685 = vunpack.c.l.b16 %v1496
        %v2686 = vunpack.c.h.b16 %v1496
        %v2687 = vunpack.c.l.b16 %v1497
        %v2688 = vunpack.c.h.b16 %v1497
        %v2689 = vunpack.c.l.b16 %v1498
        %v2690 = vunpack.c.h.b16 %v1498
        %v2691 = vunpack.c.l.b16 %v1499
        %v2692 = vunpack.c.h.b16 %v1499
        %v2693 = vunpack.c.l.b16 %v1500
        %v2694 = vunpack.c.h.b16 %v1500
        %v2695 = vunpack.c.l.b16 %v1501
        %v2696 = vunpack.c.h.b16 %v1501
        %v2697 = vunpack.c.l.b16 %v1502
        %v2698 = vunpack.c.h.b16 %v1502
        %v2699 = vunpack.c.l.b16 %v1503
        %v2700 = vunpack.c.h.b16 %v1503
        %v2701 = vunpack.c.l.b16 %v1504
        %v2702 = vunpack.c.h.b16 %v1504
        %v2703 = vunpack.c.l.b16 %v1505
        %v2704 = vunpack.c.h.b16 %v1505
        %v2705 = vunpack.c.l.b16 %v1506
        %v2706 = vunpack.c.h.b16 %v1506
        %v2707 = vunpack.c.l.b16 %v1507
        %v2708 = vunpack.c.h.b16 %v1507
        %v2709 = vunpack.c.l.b16 %v1508
        %v2710 = vunpack.c.h.b16 %v1508
        %v2711 = vunpack.c.l.b16 %v1509
        %v2712 = vunpack.c.h.b16 %v1509
        %v2713 = vunpack.c.l.b16 %v1510
        %v2714 = vunpack.c.h.b16 %v1510
        %v2715 = vunpack.c.l.b16 %v1511
        %v2716 = vunpack.c.h.b16 %v1511
        %v2717 = vunpack.c.l.b16 %v1512
        %v2718 = vunpack.c.h.b16 %v1512
        %v2719 = vunpack.c.l.b16 %v1513
        %v2720 = vunpack.c.h.b16 %v1513
        %v2721 = vunpack.c.l.b16 %v1514
        %v2722 = vunpack.c.h.b16 %v1514
        %v2723 = vunpack.c.l.b16 %v1515
        %v2724 = vunpack.c.h.b16 %v1515
        %v2725 = vunpack.c.l.b16 %v1516
        %v2726 = vunpack.c.h.b16 %v1516
        %v2727 = vunpack.c.l.b16 %v1517
        %v2728 = vunpack.c.h.b16 %v1517
        %v2729 = vunpack.c.l.b16 %v1518
        %v2730 = vunpack.c.h.b16 %v1518
        %v2731 = vunpack.c.l.b16 %v1519
        %v2732 = vunpack.c.h.b16 %v1519
        %v2733 = vunpack.c.l.b16 %v1520
        %v2734 = vunpack.c.h.b16 %v1520
        %v2735 = vunpack.c.l.b16 %v1521
        %v2736 = vunpack.c.h.b16 %v1521
        %v2737 = vunpack.c.l.b16 %v1522
        %v2738 = vunpack.c.h.b16 %v1522
        %v2739 = vunpack.c.l.b16 %v1523
        %v2740 = vunpack.c.h.b16 %v1523
        %v2741 = vunpack.c.l.b16 %v1524
        %v2742 = vunpack.c.h.b16 %v1524
        %v2743 = vunpack.c.l.b16 %v1525
        %v2744 = vunpack.c.h.b16 %v1525
        %v2745 = vunpack.c.l.b16 %v1526
        %v2746 = vunpack.c.h.b16 %v1526
        %v2747 = vunpack.c.l.b16 %v1527
        %v2748 = vunpack.c.h.b16 %v1527
        %v2749 = vunpack.c.l.b16 %v1528
        %v2750 = vunpack.c.h.b16 %v1528
        %v2751 = vunpack.c.l.b16 %v1529
        %v2752 = vunpack.c.h.b16 %v1529
        %v2753 = vunpack.c.l.b16 %v1530
        %v2754 = vunpack.c.h.b16 %v1530
        %v2755 = vunpack.c.l.b16 %v1531
        %v2756 = vunpack.c.h.b16 %v1531
        %v2757 = vunpack.c.l.b16 %v1532
        %v2758 = vunpack.c.h.b16 %v1532
        %v2759 = vunpack.c.l.b16 %v1533
        %v2760 = vunpack.c.h.b16 %v1533
        %v2761 = vunpack.c.l.b16 %v1534
        %v2762 = vunpack.c.h.b16 %v1534
        %v2763 = vunpack.c.l.b16 %v1535
        %v2764 = vunpack.c.h.b16 %v1535
        %v2765 = vunpack.c.l.b16 %v1536
        %v2766 = vunpack.c.h.b16 %v1536
        %v2767 = vunpack.c.l.b16 %v1537
        %v2768 = vunpack.c.h.b16 %v1537
        %v2769 = vunpack.c.l.b16 %v1538
        %v2770 = vunpack.c.h.b16 %v1538
        %v2771 = vunpack.c.l.b16 %v1539
        %v2772 = vunpack.c.h.b16 %v1539
        %v2773 = vunpack.c.l.b16 %v1540
        %v2774 = vunpack.c.h.b16 %v1540
        %v2775 = vunpack.c.l.b16 %v1541
        %v2776 = vunpack.c.h.b16 %v1541
        %v2777 = vunpack.c.l.b16 %v1542
        %v2778 = vunpack.c.h.b16 %v1542
        %v2779 = vunpack.c.l.b16 %v1543
        %v2780 = vunpack.c.h.b16 %v1543
        %v2781 = vunpack.c.l.b16 %v1544
        %v2782 = vunpack.c.h.b16 %v1544
        %v2783 = vunpack.c.l.b16 %v1545
        %v2784 = vunpack.c.h.b16 %v1545
        %v2785 = vunpack.c.l.b16 %v1546
        %v2786 = vunpack.c.h.b16 %v1546
        %v2787 = vunpack.c.l.b16 %v1547
        %v2788 = vunpack.c.h.b16 %v1547
        %v2789 = vunpack.c.l.b16 %v1548
        %v2790 = vunpack.c.h.b16 %v1548
        %v2791 = vunpack.c.l.b16 %v1549
        %v2792 = vunpack.c.h.b16 %v1549
        %v2793 = vunpack.c.l.b16 %v1550
        %v2794 = vunpack.c.h.b16 %v1550
        %v2795 = vunpack.c.l.b16 %v1551
        %v2796 = vunpack.c.h.b16 %v1551
        %v2797 = vunpack.c.l.b16 %v1552
        %v2798 = vunpack.c.h.b16 %v1552
        %v2799 = vunpack.c.l.b16 %v1553
        %v2800 = vunpack.c.h.b16 %v1553
        %v2801 = vunpack.c.l.b16 %v1554
        %v2802 = vunpack.c.h.b16 %v1554
        %v2803 = vunpack.c.l.b16 %v1555
        %v2804 = vunpack.c.h.b16 %v1555
        %v2805 = vunpack.c.l.b16 %v1556
        %v2806 = vunpack.c.h.b16 %v1556
        %v2807 = vunpack.c.l.b16 %v1557
        %v2808 = vunpack.c.h.b16 %v1557
        %v2809 = vunpack.c.l.b16 %v1558
        %v2810 = vunpack.c.h.b16 %v1558
        %v2811 = vunpack.c.l.b16 %v1559
        %v2812 = vunpack.c.h.b16 %v1559
        %v2813 = vunpack.c.l.b16 %v1560
        %v2814 = vunpack.c.h.b16 %v1560
        %v2815 = vunpack.c.l.b16 %v1561
        %v2816 = vunpack.c.h.b16 %v1561
        %v2817 = vunpack.c.l.b16 %v1562
        %v2818 = vunpack.c.h.b16 %v1562
        %v2819 = vunpack.c.l.b16 %v1563
        %v2820 = vunpack.c.h.b16 %v1563
        %v2821 = vunpack.c.l.b16 %v1564
        %v2822 = vunpack.c.h.b16 %v1564
        %v2823 = vunpack.c.l.b16 %v1565
        %v2824 = vunpack.c.h.b16 %v1565
        %v2825 = vunpack.c.l.b16 %v1566
        %v2826 = vunpack.c.h.b16 %v1566
        %v2827 = vunpack.c.l.b16 %v1567
        %v2828 = vunpack.c.h.b16 %v1567
        %v2829 = vunpack.c.l.b16 %v1568
        %v2830 = vunpack.c.h.b16 %v1568
        %v2831 = vunpack.c.l.b16 %v1569
        %v2832 = vunpack.c.h.b16 %v1569
        %v2833 = vunpack.c.l.b16 %v1570
        %v2834 = vunpack.c.h.b16 %v1570
        %v2835 = vunpack.c.l.b16 %v1571
        %v2836 = vunpack.c.h.b16 %v1571
        %v2837 = vunpack.c.l.b16 %v1572
        %v2838 = vunpack.c.h.b16 %v1572
        %v2839 = vunpack.c.l.b16 %v1573
        %v2840 = vunpack.c.h.b16 %v1573
        %v2841 = vunpack.c.l.b16 %v1574
        %v2842 = vunpack.c.h.b16 %v1574
        %v2843 = vunpack.c.l.b16 %v1575
        %v2844 = vunpack.c.h.b16 %v1575
        %v2845 = vunpack.c.l.b16 %v1576
        %v2846 = vunpack.c.h.b16 %v1576
        %v2847 = vunpack.c.l.b16 %v1577
        %v2848 = vunpack.c.h.b16 %v1577
        %v2849 = vunpack.c.l.b16 %v1578
        %v2850 = vunpack.c.h.b16 %v1578
        %v2851 = vunpack.c.l.b16 %v1579
        %v2852 = vunpack.c.h.b16 %v1579
        %v2853 = vunpack.c.l.b16 %v1580
        %v2854 = vunpack.c.h.b16 %v1580
        %v2855 = vunpack.c.l.b16 %v1581
        %v2856 = vunpack.c.h.b16 %v1581
        %v2857 = vunpack.c.l.b16 %v1582
        %v2858 = vunpack.c.h.b16 %v1582
        %v2859 = vunpack.c.l.b16 %v1583
        %v2860 = vunpack.c.h.b16 %v1583
        %v2861 = vunpack.c.l.b16 %v1584
        %v2862 = vunpack.c.h.b16 %v1584
        %v2863 = vunpack.c.l.b16 %v1585
        %v2864 = vunpack.c.h.b16 %v1585
        %v2865 = vunpack.c.l.b16 %v1586
        %v2866 = vunpack.c.h.b16 %v1586
        %v2867 = vunpack.c.l.b16 %v1587
        %v2868 = vunpack.c.h.b16 %v1587
        %v2869 = vunpack.c.l.b16 %v1588
        %v2870 = vunpack.c.h.b16 %v1588
        %v2871 = vunpack.c.l.b16 %v1589
        %v2872 = vunpack.c.h.b16 %v1589
        %v2873 = vunpack.c.l.b16 %v1590
        %v2874 = vunpack.c.h.b16 %v1590
        %v2875 = vunpack.c.l.b16 %v1591
        %v2876 = vunpack.c.h.b16 %v1591
        %v2877 = vunpack.c.l.b16 %v1592
        %v2878 = vunpack.c.h.b16 %v1592
        %v2879 = vunpack.c.l.b16 %v1593
        %v2880 = vunpack.c.h.b16 %v1593
        %v2881 = vunpack.c.l.b16 %v1594
        %v2882 = vunpack.c.h.b16 %v1594
        %v2883 = vunpack.c.l.b16 %v1595
        %v2884 = vunpack.c.h.b16 %v1595
        %v2885 = vunpack.c.l.b16 %v1596
        %v2886 = vunpack.c.h.b16 %v1596
        %v2887 = vunpack.c.l.b16 %v1597
        %v2888 = vunpack.c.h.b16 %v1597
        %v2889 = vunpack.c.l.b16 %v1598
        %v2890 = vunpack.c.h.b16 %v1598
        %v2891 = vunpack.c.l.b16 %v1599
        %v2892 = vunpack.c.h.b16 %v1599
        %v2893 = vunpack.c.l.b16 %v1600
        %v2894 = vunpack.c.h.b16 %v1600
        %v2895 = vunpack.c.l.b16 %v1601
        %v2896 = vunpack.c.h.b16 %v1601
        %v2897 = vunpack.c.l.b16 %v1602
        %v2898 = vunpack.c.h.b16 %v1602
        %v2899 = vunpack.c.l.b16 %v1603
        %v2900 = vunpack.c.h.b16 %v1603
        %v2901 = vunpack.c.l.b16 %v1604
        %v2902 = vunpack.c.h.b16 %v1604
        %v2903 = vunpack.c.l.b16 %v1605
        %v2904 = vunpack.c.h.b16 %v1605
        %v2905 = vunpack.c.l.b16 %v1606
        %v2906 = vunpack.c.h.b16 %v1606
        %v2907 = vunpack.c.l.b16 %v1607
        %v2908 = vunpack.c.h.b16 %v1607
        %v2909 = vunpack.c.l.b16 %v1608
        %v2910 = vunpack.c.h.b16 %v1608
        %v2911 = vunpack.c.l.b16 %v1609
        %v2912 = vunpack.c.h.b16 %v1609
        %v2913 = vunpack.c.l.b16 %v1610
        %v2914 = vunpack.c.h.b16 %v1610
        %v2915 = vunpack.c.l.b16 %v1611
        %v2916 = vunpack.c.h.b16 %v1611
        %v2917 = vunpack.c.l.b16 %v1612
        %v2918 = vunpack.c.h.b16 %v1612
        %v2919 = vunpack.c.l.b16 %v1613
        %v2920 = vunpack.c.h.b16 %v1613
        %v2921 = vunpack.c.l.b16 %v1614
        %v2922 = vunpack.c.h.b16 %v1614
        %v2923 = vunpack.c.l.b16 %v1615
        %v2924 = vunpack.c.h.b16 %v1615
        %v2925 = vunpack.c.l.b16 %v1616
        %v2926 = vunpack.c.h.b16 %v1616
        %v2927 = vunpack.c.l.b16 %v1617
        %v2928 = vunpack.c.h.b16 %v1617
        %v2929 = vunpack.c.l.b16 %v1618
        %v2930 = vunpack.c.h.b16 %v1618
        %v2931 = vunpack.c.l.b16 %v1619
        %v2932 = vunpack.c.h.b16 %v1619
        %v2933 = vunpack.c.l.b16 %v1620
        %v2934 = vunpack.c.h.b16 %v1620
        %v2935 = vunpack.c.l.b16 %v1621
        %v2936 = vunpack.c.h.b16 %v1621
        %v2937 = vunpack.c.l.b16 %v1622
        %v2938 = vunpack.c.h.b16 %v1622
        %v2939 = vunpack.c.l.b16 %v1623
        %v2940 = vunpack.c.h.b16 %v1623
        %v2941 = vunpack.c.l.b16 %v1624
        %v2942 = vunpack.c.h.b16 %v1624
        %v2943 = vunpack.c.l.b16 %v1625
        %v2944 = vunpack.c.h.b16 %v1625
        %v2945 = vunpack.c.l.b16 %v1626
        %v2946 = vunpack.c.h.b16 %v1626
        %v2947 = vunpack.c.l.b16 %v1627
        %v2948 = vunpack.c.h.b16 %v1627
        %v2949 = vunpack.c.l.b16 %v1628
        %v2950 = vunpack.c.h.b16 %v1628
        %v2951 = vunpack.c.l.b16 %v1629
        %v2952 = vunpack.c.h.b16 %v1629
        %v2953 = vunpack.c.l.b16 %v1630
        %v2954 = vunpack.c.h.b16 %v1630
        %v2955 = vunpack.c.l.b16 %v1631
        %v2956 = vunpack.c.h.b16 %v1631
        %v2957 = vunpack.c.l.b16 %v1632
        %v2958 = vunpack.c.h.b16 %v1632
        %v2959 = vunpack.c.l.b16 %v1633
        %v2960 = vunpack.c.h.b16 %v1633
        %v2961 = vunpack.c.l.b16 %v1634
        %v2962 = vunpack.c.h.b16 %v1634
        %v2963 = vunpack.c.l.b16 %v1635
        %v2964 = vunpack.c.h.b16 %v1635
        %v2965 = vunpack.c.l.b16 %v1636
        %v2966 = vunpack.c.h.b16 %v1636
        %v2967 = vunpack.c.l.b16 %v1637
        %v2968 = vunpack.c.h.b16 %v1637
        %v2969 = vunpack.c.l.b16 %v1638
        %v2970 = vunpack.c.h.b16 %v1638
        %v2971 = vunpack.c.l.b16 %v1639
        %v2972 = vunpack.c.h.b16 %v1639
        %v2973 = vunpack.c.l.b16 %v1640
        %v2974 = vunpack.c.h.b16 %v1640
        %v2975 = vunpack.c.l.b16 %v1641
        %v2976 = vunpack.c.h.b16 %v1641
        %v2977 = vunpack.c.l.b16 %v1642
        %v2978 = vunpack.c.h.b16 %v1642
        %v2979 = vunpack.c.l.b16 %v1643
        %v2980 = vunpack.c.h.b16 %v1643
        %v2981 = vunpack.c.l.b16 %v1644
        %v2982 = vunpack.c.h.b16 %v1644
        %v2983 = vunpack.c.l.b16 %v1645
        %v2984 = vunpack.c.h.b16 %v1645
        %v2985 = vunpack.c.l.b16 %v1646
        %v2986 = vunpack.c.h.b16 %v1646
        %v2987 = vunpack.c.l.b16 %v1647
        %v2988 = vunpack.c.h.b16 %v1647
        %v2989 = vunpack.c.l.b16 %v1648
        %v2990 = vunpack.c.h.b16 %v1648
        %v2991 = vunpack.c.l.b16 %v1649
        %v2992 = vunpack.c.h.b16 %v1649
        %v2993 = vunpack.c.l.b16 %v1650
        %v2994 = vunpack.c.h.b16 %v1650
        %v2995 = vunpack.c.l.b16 %v1651
        %v2996 = vunpack.c.h.b16 %v1651
        %v2997 = vunpack.c.l.b16 %v1652
        %v2998 = vunpack.c.h.b16 %v1652
        %v2999 = vunpack.c.l.b16 %v1653
        %v3000 = vunpack.c.h.b16 %v1653
        %v3001 = vunpack.c.l.b16 %v1654
        %v3002 = vunpack.c.h.b16 %v1654
        %v3003 = vunpack.c.l.b16 %v1655
        %v3004 = vunpack.c.h.b16 %v1655
        %v3005 = vunpack.c.l.b16 %v1656
        %v3006 = vunpack.c.h.b16 %v1656
        %v3007 = vunpack.c.l.b16 %v1657
        %v3008 = vunpack.c.h.b16 %v1657
        %v3009 = vunpack.c.l.b16 %v1658
        %v3010 = vunpack.c.h.b16 %v1658
        %v3011 = vunpack.c.l.b16 %v1659
        %v3012 = vunpack.c.h.b16 %v1659
        %v3013 = vunpack.c.l.b16 %v1660
        %v3014 = vunpack.c.h.b16 %v1660
        %v3015 = vunpack.c.l.b16 %v1661
        %v3016 = vunpack.c.h.b16 %v1661
        %v3017 = vunpack.c.l.b16 %v1662
        %v3018 = vunpack.c.h.b16 %v1662
        %v3019 = vunpack.c.l.b16 %v1663
        %v3020 = vunpack.c.h.b16 %v1663
        %v3021 = vunpack.c.l.b16 %v1664
        %v3022 = vunpack.c.h.b16 %v1664
        %v3023 = vunpack.c.l.b16 %v1665
        %v3024 = vunpack.c.h.b16 %v1665
        %v3025 = vunpack.c.l.b16 %v1666
        %v3026 = vunpack.c.h.b16 %v1666
        %v3027 = vunpack.c.l.b16 %v1667
        %v3028 = vunpack.c.h.b16 %v1667
        %v3029 = vunpack.c.l.b16 %v1668
        %v3030 = vunpack.c.h.b16 %v1668
        %v3031 = vunpack.c.l.b16 %v1669
        %v3032 = vunpack.c.h.b16 %v1669
        %v3033 = vunpack.c.l.b16 %v1670
        %v3034 = vunpack.c.h.b16 %v1670
        %v3035 = vunpack.c.l.b16 %v1671
        %v3036 = vunpack.c.h.b16 %v1671
        %v3037 = vunpack.c.l.b16 %v1672
        %v3038 = vunpack.c.h.b16 %v1672
        %v3039 = vunpack.c.l.b16 %v1673
        %v3040 = vunpack.c.h.b16 %v1673
        %v3041 = vunpack.c.l.b16 %v1674
        %v3042 = vunpack.c.h.b16 %v1674
        %v3043 = vunpack.c.l.b16 %v1675
        %v3044 = vunpack.c.h.b16 %v1675
        %v3045 = vunpack.c.l.b16 %v1676
        %v3046 = vunpack.c.h.b16 %v1676
        %v3047 = vunpack.c.l.b16 %v1677
        %v3048 = vunpack.c.h.b16 %v1677
        %v3049 = vunpack.c.l.b16 %v1678
        %v3050 = vunpack.c.h.b16 %v1678
        %v3051 = vunpack.c.l.b16 %v1679
        %v3052 = vunpack.c.h.b16 %v1679
        %v3053 = vunpack.c.l.b16 %v1680
        %v3054 = vunpack.c.h.b16 %v1680
        %v3055 = vunpack.c.l.b16 %v1681
        %v3056 = vunpack.c.h.b16 %v1681
        %v3057 = vunpack.c.l.b16 %v1682
        %v3058 = vunpack.c.h.b16 %v1682
        %v3059 = vunpack.c.l.b16 %v1683
        %v3060 = vunpack.c.h.b16 %v1683
        %v3061 = vunpack.c.l.b16 %v1684
        %v3062 = vunpack.c.h.b16 %v1684
        %v3063 = vunpack.c.l.b16 %v1685
        %v3064 = vunpack.c.h.b16 %v1685
        %v3065 = vunpack.c.l.b16 %v1686
        %v3066 = vunpack.c.h.b16 %v1686
        %v3067 = vunpack.c.l.b16 %v1687
        %v3068 = vunpack.c.h.b16 %v1687
        %v3069 = vunpack.c.l.b16 %v1688
        %v3070 = vunpack.c.h.b16 %v1688
        %v3071 = vunpack.c.l.b16 %v1689
        %v3072 = vunpack.c.h.b16 %v1689
        %v3073 = vunpack.c.l.b16 %v1690
        %v3074 = vunpack.c.h.b16 %v1690
        %v3075 = vunpack.c.l.b16 %v1691
        %v3076 = vunpack.c.h.b16 %v1691
        %v3077 = vunpack.c.l.b16 %v1692
        %v3078 = vunpack.c.h.b16 %v1692
        %v3079 = vunpack.c.l.b16 %v1693
        %v3080 = vunpack.c.h.b16 %v1693
        %v3081 = vunpack.c.l.b16 %v1694
        %v3082 = vunpack.c.h.b16 %v1694
        %v3083 = vunpack.c.l.b16 %v1695
        %v3084 = vunpack.c.h.b16 %v1695
        %v3085 = vunpack.c.l.b16 %v1696
        %v3086 = vunpack.c.h.b16 %v1696
        %v3087 = vunpack.c.l.b16 %v1697
        %v3088 = vunpack.c.h.b16 %v1697
        %v3089 = vunpack.c.l.b16 %v1698
        %v3090 = vunpack.c.h.b16 %v1698
        %v3091 = vunpack.c.l.b16 %v1699
        %v3092 = vunpack.c.h.b16 %v1699
        %v3093 = vunpack.c.l.b16 %v1700
        %v3094 = vunpack.c.h.b16 %v1700
        %v3095 = vunpack.c.l.b16 %v1701
        %v3096 = vunpack.c.h.b16 %v1701
        %v3097 = vunpack.c.l.b16 %v1702
        %v3098 = vunpack.c.h.b16 %v1702
        %v3099 = vunpack.c.l.b16 %v1703
        %v3100 = vunpack.c.h.b16 %v1703
        %v3101 = vunpack.c.l.b16 %v1704
        %v3102 = vunpack.c.h.b16 %v1704
        %v3103 = vunpack.c.l.b16 %v1705
        %v3104 = vunpack.c.h.b16 %v1705
        %v3105 = vunpack.c.l.b16 %v1706
        %v3106 = vunpack.c.h.b16 %v1706
        %v3107 = vunpack.c.l.b16 %v1707
        %v3108 = vunpack.c.h.b16 %v1707
        %v3109 = vunpack.c.l.b16 %v1708
        %v3110 = vunpack.c.h.b16 %v1708
        %v3111 = vunpack.c.l.b16 %v1709
        %v3112 = vunpack.c.h.b16 %v1709
        %v3113 = vunpack.c.l.b16 %v1710
        %v3114 = vunpack.c.h.b16 %v1710
        %v3115 = vunpack.c.l.b16 %v1711
        %v3116 = vunpack.c.h.b16 %v1711
        %v3117 = vunpack.c.l.b16 %v1712
        %v3118 = vunpack.c.h.b16 %v1712
        %v3119 = vunpack.c.l.b16 %v1713
        %v3120 = vunpack.c.h.b16 %v1713
        %v3121 = vunpack.c.l.b16 %v1714
        %v3122 = vunpack.c.h.b16 %v1714
        %v3123 = vunpack.c.l.b16 %v1715
        %v3124 = vunpack.c.h.b16 %v1715
        %v3125 = vunpack.c.l.b16 %v1716
        %v3126 = vunpack.c.h.b16 %v1716
        %v3127 = vunpack.c.l.b16 %v1717
        %v3128 = vunpack.c.h.b16 %v1717
        %v3129 = vunpack.c.l.b16 %v1718
        %v3130 = vunpack.c.h.b16 %v1718
        %v3131 = vunpack.c.l.b16 %v1719
        %v3132 = vunpack.c.h.b16 %v1719
        %v3133 = vunpack.c.l.b16 %v1720
        %v3134 = vunpack.c.h.b16 %v1720
        %v3135 = vunpack.c.l.b16 %v1721
        %v3136 = vunpack.c.h.b16 %v1721
        %v3137 = vunpack.c.l.b16 %v1722
        %v3138 = vunpack.c.h.b16 %v1722
        %v3139 = vunpack.c.l.b16 %v1723
        %v3140 = vunpack.c.h.b16 %v1723
        %v3141 = vunpack.c.l.b16 %v1724
        %v3142 = vunpack.c.h.b16 %v1724
        %v3143 = vunpack.c.l.b16 %v1725
        %v3144 = vunpack.c.h.b16 %v1725
        %v3145 = vunpack.c.l.b16 %v1726
        %v3146 = vunpack.c.h.b16 %v1726
        %v3147 = vunpack.c.l.b16 %v1727
        %v3148 = vunpack.c.h.b16 %v1727
        %v3149 = vunpack.c.l.b16 %v1728
        %v3150 = vunpack.c.h.b16 %v1728
        %v3151 = vunpack.c.l.b16 %v1729
        %v3152 = vunpack.c.h.b16 %v1729
        %v3153 = vunpack.c.l.b16 %v1730
        %v3154 = vunpack.c.h.b16 %v1730
        %v3155 = vunpack.c.l.b16 %v1731
        %v3156 = vunpack.c.h.b16 %v1731
        %v3157 = vunpack.c.l.b16 %v1732
        %v3158 = vunpack.c.h.b16 %v1732
        %v3159 = vunpack.c.l.b16 %v1733
        %v3160 = vunpack.c.h.b16 %v1733
        %v3161 = vunpack.c.l.b16 %v1734
        %v3162 = vunpack.c.h.b16 %v1734
        %v3163 = vunpack.c.l.b16 %v1735
        %v3164 = vunpack.c.h.b16 %v1735
        %v3165 = vunpack.c.l.b16 %v1736
        %v3166 = vunpack.c.h.b16 %v1736
        %v3167 = vunpack.c.l.b16 %v1737
        %v3168 = vunpack.c.h.b16 %v1737
        %v3169 = vunpack.c.l.b16 %v1738
        %v3170 = vunpack.c.h.b16 %v1738
        %v3171 = vunpack.c.l.b16 %v1739
        %v3172 = vunpack.c.h.b16 %v1739
        %v3173 = vunpack.c.l.b16 %v1740
        %v3174 = vunpack.c.h.b16 %v1740
        %v3175 = vunpack.c.l.b16 %v1741
        %v3176 = vunpack.c.h.b16 %v1741
        %v3177 = vunpack.c.l.b16 %v1742
        %v3178 = vunpack.c.h.b16 %v1742
        %v3179 = vunpack.c.l.b16 %v1743
        %v3180 = vunpack.c.h.b16 %v1743
        %v3181 = vunpack.c.l.b16 %v1744
        %v3182 = vunpack.c.h.b16 %v1744
        %v3183 = vunpack.c.l.b16 %v1745
        %v3184 = vunpack.c.h.b16 %v1745
        %v3185 = vunpack.c.l.b16 %v1746
        %v3186 = vunpack.c.h.b16 %v1746
        %v3187 = vunpack.c.l.b16 %v1747
        %v3188 = vunpack.c.h.b16 %v1747
        %v3189 = vunpack.c.l.b16 %v1748
        %v3190 = vunpack.c.h.b16 %v1748
        %v3191 = vunpack.c.l.b16 %v1749
        %v3192 = vunpack.c.h.b16 %v1749
        %v3193 = vunpack.c.l.b16 %v1750
        %v3194 = vunpack.c.h.b16 %v1750
        %v3195 = vunpack.c.l.b16 %v1751
        %v3196 = vunpack.c.h.b16 %v1751
        %v3197 = vunpack.c.l.b16 %v1752
        %v3198 = vunpack.c.h.b16 %v1752
        %v3199 = vunpack.c.l.b16 %v1753
        %v3200 = vunpack.c.h.b16 %v1753
        %v3201 = vunpack.c.l.b16 %v1754
        %v3202 = vunpack.c.h.b16 %v1754
        %v3203 = vunpack.c.l.b16 %v1755
        %v3204 = vunpack.c.h.b16 %v1755
        %v3205 = vunpack.c.l.b16 %v1756
        %v3206 = vunpack.c.h.b16 %v1756
        %v3207 = vunpack.c.l.b16 %v1757
        %v3208 = vunpack.c.h.b16 %v1757
        %v3209 = vunpack.c.l.b16 %v1758
        %v3210 = vunpack.c.h.b16 %v1758
        %v3211 = vunpack.c.l.b16 %v1759
        %v3212 = vunpack.c.h.b16 %v1759
        %v3213 = vunpack.c.l.b16 %v1760
        %v3214 = vunpack.c.h.b16 %v1760
        %v3215 = vunpack.c.l.b16 %v1761
        %v3216 = vunpack.c.h.b16 %v1761
        %v3217 = vunpack.c.l.b16 %v1762
        %v3218 = vunpack.c.h.b16 %v1762
        %v3219 = vunpack.c.l.b16 %v1763
        %v3220 = vunpack.c.h.b16 %v1763
        %v3221 = vunpack.c.l.b16 %v1764
        %v3222 = vunpack.c.h.b16 %v1764
        %v3223 = vunpack.c.l.b16 %v1765
        %v3224 = vunpack.c.h.b16 %v1765
        %v3225 = vunpack.c.l.b16 %v1766
        %v3226 = vunpack.c.h.b16 %v1766
        %v3227 = vunpack.c.l.b16 %v1767
        %v3228 = vunpack.c.h.b16 %v1767
        %v3229 = vunpack.c.l.b16 %v1768
        %v3230 = vunpack.c.h.b16 %v1768
        %v3231 = vunpack.c.l.b16 %v1769
        %v3232 = vunpack.c.h.b16 %v1769
        %v3233 = vunpack.c.l.b16 %v1770
        %v3234 = vunpack.c.h.b16 %v1770
        %v3235 = vunpack.c.l.b16 %v1771
        %v3236 = vunpack.c.h.b16 %v1771
        %v3237 = vunpack.c.l.b16 %v1772
        %v3238 = vunpack.c.h.b16 %v1772
        %v3239 = vunpack.c.l.b16 %v1773
        %v3240 = vunpack.c.h.b16 %v1773
        %v3241 = vunpack.c.l.b16 %v1774
        %v3242 = vunpack.c.h.b16 %v1774
        %v3243 = vunpack.c.l.b16 %v1775
        %v3244 = vunpack.c.h.b16 %v1775
        %v3245 = vunpack.c.l.b16 %v1776
        %v3246 = vunpack.c.h.b16 %v1776
        %v3247 = vunpack.c.l.b16 %v1777
        %v3248 = vunpack.c.h.b16 %v1777
        %v3249 = vunpack.c.l.b16 %v1778
        %v3250 = vunpack.c.h.b16 %v1778
        %v3251 = vunpack.c.l.b16 %v1779
        %v3252 = vunpack.c.h.b16 %v1779
        %v3253 = vunpack.c.l.b16 %v1780
        %v3254 = vunpack.c.h.b16 %v1780
        %v3255 = vunpack.c.l.b16 %v1781
        %v3256 = vunpack.c.h.b16 %v1781
        %v3257 = vunpack.c.l.b16 %v1782
        %v3258 = vunpack.c.h.b16 %v1782
        %v3259 = vunpack.c.l.b16 %v1783
        %v3260 = vunpack.c.h.b16 %v1783
        %v3261 = vunpack.c.l.b16 %v1784
        %v3262 = vunpack.c.h.b16 %v1784
        %v3263 = vunpack.c.l.b16 %v1785
        %v3264 = vunpack.c.h.b16 %v1785
        %v3265 = vunpack.c.l.b16 %v1786
        %v3266 = vunpack.c.h.b16 %v1786
        %v3267 = vunpack.c.l.b16 %v1787
        %v3268 = vunpack.c.h.b16 %v1787
        %v3269 = vunpack.c.l.b16 %v1788
        %v3270 = vunpack.c.h.b16 %v1788
        %v3271 = vunpack.c.l.b16 %v1789
        %v3272 = vunpack.c.h.b16 %v1789
        %v3273 = vunpack.c.l.b16 %v1790
        %v3274 = vunpack.c.h.b16 %v1790
        %v3275 = vunpack.c.l.b16 %v1791
        %v3276 = vunpack.c.h.b16 %v1791
        %v3277 = vunpack.c.l.b16 %v1792
        %v3278 = vunpack.c.h.b16 %v1792
        %v3279 = vunpack.c.l.b16 %v1793
        %v3280 = vunpack.c.h.b16 %v1793
        %v3281 = vunpack.c.l.b16 %v1794
        %v3282 = vunpack.c.h.b16 %v1794
        %v3283 = vunpack.c.l.b16 %v1795
        %v3284 = vunpack.c.h.b16 %v1795
        %v3285 = vunpack.c.l.b16 %v1796
        %v3286 = vunpack.c.h.b16 %v1796
        %v3287 = vunpack.c.l.b16 %v1797
        %v3288 = vunpack.c.h.b16 %v1797
        %v3289 = vunpack.c.l.b16 %v1798
        %v3290 = vunpack.c.h.b16 %v1798
        %v3291 = vunpack.c.l.b16 %v1799
        %v3292 = vunpack.c.h.b16 %v1799
        %v3293 = vunpack.c.l.b16 %v1800
        %v3294 = vunpack.c.h.b16 %v1800
        %v3295 = vunpack.c.l.b16 %v1801
        %v3296 = vunpack.c.h.b16 %v1801
        %v3297 = vunpack.c.l.b16 %v1802
        %v3298 = vunpack.c.h.b16 %v1802
        %v3299 = vunpack.c.l.b16 %v1803
        %v3300 = vunpack.c.h.b16 %v1803
        %v3301 = vunpack.c.l.b16 %v1804
        %v3302 = vunpack.c.h.b16 %v1804
        %v3303 = vunpack.c.l.b16 %v1805
        %v3304 = vunpack.c.h.b16 %v1805
        %v3305 = vunpack.c.l.b16 %v1806
        %v3306 = vunpack.c.h.b16 %v1806
        %v3307 = vunpack.c.l.b16 %v1807
        %v3308 = vunpack.c.h.b16 %v1807
        %v3309 = vunpack.c.l.b16 %v1808
        %v3310 = vunpack.c.h.b16 %v1808
        %v3311 = vunpack.c.l.b16 %v1809
        %v3312 = vunpack.c.h.b16 %v1809
        %v3313 = vunpack.c.l.b16 %v1810
        %v3314 = vunpack.c.h.b16 %v1810
        %v3315 = vunpack.c.l.b16 %v1811
        %v3316 = vunpack.c.h.b16 %v1811
        %v3317 = vunpack.c.l.b16 %v1812
        %v3318 = vunpack.c.h.b16 %v1812
        %v3319 = vunpack.c.l.b16 %v1813
        %v3320 = vunpack.c.h.b16 %v1813
        %v3321 = vunpack.c.l.b16 %v1814
        %v3322 = vunpack.c.h.b16 %v1814
        %v3323 = vunpack.c.l.b16 %v1815
        %v3324 = vunpack.c.h.b16 %v1815
        %v3325 = vunpack.c.l.b16 %v1816
        %v3326 = vunpack.c.h.b16 %v1816
        %v3327 = vunpack.c.l.b16 %v1817
        %v3328 = vunpack.c.h.b16 %v1817
        %v3329 = vunpack.c.l.b16 %v1818
        %v3330 = vunpack.c.h.b16 %v1818
        %v3331 = vunpack.c.l.b16 %v1819
        %v3332 = vunpack.c.h.b16 %v1819
        %v3333 = vunpack.c.l.b16 %v1820
        %v3334 = vunpack.c.h.b16 %v1820
        %v3335 = vunpack.c.l.b16 %v1821
        %v3336 = vunpack.c.h.b16 %v1821
        %v3337 = vunpack.c.l.b16 %v1822
        %v3338 = vunpack.c.h.b16 %v1822
        %v3339 = vunpack.c.l.b16 %v1823
        %v3340 = vunpack.c.h.b16 %v1823
        %v3341 = vunpack.c.l.b16 %v1824
        %v3342 = vunpack.c.h.b16 %v1824
        %v3343 = vunpack.c.l.b16 %v1825
        %v3344 = vunpack.c.h.b16 %v1825
        %v3345 = vunpack.c.l.b16 %v1826
        %v3346 = vunpack.c.h.b16 %v1826
        %v3347 = vunpack.c.l.b16 %v1827
        %v3348 = vunpack.c.h.b16 %v1827
        %v3349 = vunpack.c.l.b16 %v1828
        %v3350 = vunpack.c.h.b16 %v1828
        %v3351 = vunpack.c.l.b16 %v1829
        %v3352 = vunpack.c.h.b16 %v1829
        %v3353 = vunpack.c.l.b16 %v1830
        %v3354 = vunpack.c.h.b16 %v1830
        %v3355 = vunpack.c.l.b16 %v1831
        %v3356 = vunpack.c.h.b16 %v1831
        %v3357 = vunpack.c.l.b16 %v1832
        %v3358 = vunpack.c.h.b16 %v1832
        %v3359 = vunpack.c.l.b16 %v1833
        %v3360 = vunpack.c.h.b16 %v1833
        %v3361 = vunpack.c.l.b16 %v1834
        %v3362 = vunpack.c.h.b16 %v1834
        %v3363 = vunpack.c.l.b16 %v1835
        %v3364 = vunpack.c.h.b16 %v1835
        %v3365 = vunpack.c.l.b16 %v1836
        %v3366 = vunpack.c.h.b16 %v1836
        %v3367 = vunpack.c.l.b16 %v1837
        %v3368 = vunpack.c.h.b16 %v1837
        %v3369 = vunpack.c.l.b16 %v1838
        %v3370 = vunpack.c.h.b16 %v1838
        %v3371 = vunpack.c.l.b16 %v1839
        %v3372 = vunpack.c.h.b16 %v1839
        %v3373 = vunpack.c.l.b16 %v1840
        %v3374 = vunpack.c.h.b16 %v1840
        %v3375 = vunpack.c.l.b16 %v1841
        %v3376 = vunpack.c.h.b16 %v1841
        %v3377 = vunpack.c.l.b16 %v1842
        %v3378 = vunpack.c.h.b16 %v1842
        %v3379 = vunpack.c.l.b16 %v1843
        %v3380 = vunpack.c.h.b16 %v1843
        %v3381 = vunpack.c.l.b16 %v1844
        %v3382 = vunpack.c.h.b16 %v1844
        %v3383 = vunpack.c.l.b16 %v1845
        %v3384 = vunpack.c.h.b16 %v1845
        %v3385 = vunpack.c.l.b16 %v1846
        %v3386 = vunpack.c.h.b16 %v1846
        %v3387 = vunpack.c.l.b16 %v1847
        %v3388 = vunpack.c.h.b16 %v1847
        %v3389 = vunpack.c.l.b16 %v1848
        %v3390 = vunpack.c.h.b16 %v1848
        %v3391 = vunpack.c.l.b16 %v1849
        %v3392 = vunpack.c.h.b16 %v1849
        %v3393 = vunpack.c.l.b16 %v1850
        %v3394 = vunpack.c.h.b16 %v1850
        %v3395 = vunpack.c.l.b16 %v1851
        %v3396 = vunpack.c.h.b16 %v1851
        %v3397 = vunpack.c.l.b16 %v1852
        %v3398 = vunpack.c.h.b16 %v1852
        %v3399 = vunpack.c.l.b16 %v1853
        %v3400 = vunpack.c.h.b16 %v1853
        %v3401 = vunpack.c.l.b16 %v1854
        %v3402 = vunpack.c.h.b16 %v1854
        %v3403 = vunpack.c.l.b16 %v1855
        %v3404 = vunpack.c.h.b16 %v1855
        %v3405 = vunpack.c.l.b16 %v1856
        %v3406 = vunpack.c.h.b16 %v1856
        %v3407 = vunpack.c.l.b16 %v1857
        %v3408 = vunpack.c.h.b16 %v1857
        %v3409 = vunpack.c.l.b16 %v1858
        %v3410 = vunpack.c.h.b16 %v1858
        %v3411 = vunpack.c.l.b16 %v1859
        %v3412 = vunpack.c.h.b16 %v1859
        %v3413 = vunpack.c.l.b16 %v1860
        %v3414 = vunpack.c.h.b16 %v1860
        %v3415 = vpack.c.b16 %v2399, %v2391
        %v3416 = vpack.c.b16 %v2400, %v2392
        %v3417 = vpack.c.b16 %v2401, %v2393
        %v3418 = vpack.c.b16 %v2402, %v2394
        %v3419 = vpack.c.b16 %v2403, %v2395
        %v3420 = vpack.c.b16 %v2404, %v2396
        %v3421 = vpack.c.b16 %v2405, %v2397
        %v3422 = vpack.c.b16 %v2406, %v2398
        %v3423 = vpack.c.b16 %v2415, %v2407
        %v3424 = vpack.c.b16 %v2416, %v2408
        %v3425 = vpack.c.b16 %v2417, %v2409
        %v3426 = vpack.c.b16 %v2418, %v2410
        %v3427 = vpack.c.b16 %v2419, %v2411
        %v3428 = vpack.c.b16 %v2420, %v2412
        %v3429 = vpack.c.b16 %v2421, %v2413
        %v3430 = vpack.c.b16 %v2422, %v2414
        %v3431 = vpack.c.b16 %v2431, %v2423
        %v3432 = vpack.c.b16 %v2432, %v2424
        %v3433 = vpack.c.b16 %v2433, %v2425
        %v3434 = vpack.c.b16 %v2434, %v2426
        %v3435 = vpack.c.b16 %v2435, %v2427
        %v3436 = vpack.c.b16 %v2436, %v2428
        %v3437 = vpack.c.b16 %v2437, %v2429
        %v3438 = vpack.c.b16 %v2438, %v2430
        %v3439 = vpack.c.b16 %v2447, %v2439
        %v3440 = vpack.c.b16 %v2448, %v2440
        %v3441 = vpack.c.b16 %v2449, %v2441
        %v3442 = vpack.c.b16 %v2450, %v2442
        %v3443 = vpack.c.b16 %v2451, %v2443
        %v3444 = vpack.c.b16 %v2452, %v2444
        %v3445 = vpack.c.b16 %v2453, %v2445
        %v3446 = vpack.c.b16 %v2454, %v2446
        %v3447 = vpack.c.b16 %v2463, %v2455
        %v3448 = vpack.c.b16 %v2464, %v2456
        %v3449 = vpack.c.b16 %v2465, %v2457
        %v3450 = vpack.c.b16 %v2466, %v2458
        %v3451 = vpack.c.b16 %v2467, %v2459
        %v3452 = vpack.c.b16 %v2468, %v2460
        %v3453 = vpack.c.b16 %v2469, %v2461
        %v3454 = vpack.c.b16 %v2470, %v2462
        %v3455 = vpack.c.b16 %v2479, %v2471
        %v3456 = vpack.c.b16 %v2480, %v2472
        %v3457 = vpack.c.b16 %v2481, %v2473
        %v3458 = vpack.c.b16 %v2482, %v2474
        %v3459 = vpack.c.b16 %v2483, %v2475
        %v3460 = vpack.c.b16 %v2484, %v2476
        %v3461 = vpack.c.b16 %v2485, %v2477
        %v3462 = vpack.c.b16 %v2486, %v2478
        %v3463 = vpack.c.b16 %v2495, %v2487
        %v3464 = vpack.c.b16 %v2496, %v2488
        %v3465 = vpack.c.b16 %v2497, %v2489
        %v3466 = vpack.c.b16 %v2498, %v2490
        %v3467 = vpack.c.b16 %v2499, %v2491
        %v3468 = vpack.c.b16 %v2500, %v2492
        %v3469 = vpack.c.b16 %v2501, %v2493
        %v3470 = vpack.c.b16 %v2502, %v2494
        %v3471 = vpack.c.b16 %v2511, %v2503
        %v3472 = vpack.c.b16 %v2512, %v2504
        %v3473 = vpack.c.b16 %v2513, %v2505
        %v3474 = vpack.c.b16 %v2514, %v2506
        %v3475 = vpack.c.b16 %v2515, %v2507
        %v3476 = vpack.c.b16 %v2516, %v2508
        %v3477 = vpack.c.b16 %v2517, %v2509
        %v3478 = vpack.c.b16 %v2518, %v2510
        %v3479 = vpack.c.b16 %v2527, %v2519
        %v3480 = vpack.c.b16 %v2528, %v2520
        %v3481 = vpack.c.b16 %v2529, %v2521
        %v3482 = vpack.c.b16 %v2530, %v2522
        %v3483 = vpack.c.b16 %v2531, %v2523
        %v3484 = vpack.c.b16 %v2532, %v2524
        %v3485 = vpack.c.b16 %v2533, %v2525
        %v3486 = vpack.c.b16 %v2534, %v2526
        %v3487 = vpack.c.b16 %v2543, %v2535
        %v3488 = vpack.c.b16 %v2544, %v2536
        %v3489 = vpack.c.b16 %v2545, %v2537
        %v3490 = vpack.c.b16 %v2546, %v2538
        %v3491 = vpack.c.b16 %v2547, %v2539
        %v3492 = vpack.c.b16 %v2548, %v2540
        %v3493 = vpack.c.b16 %v2549, %v2541
        %v3494 = vpack.c.b16 %v2550, %v2542
        %v3495 = vpack.c.b16 %v2559, %v2551
        %v3496 = vpack.c.b16 %v2560, %v2552
        %v3497 = vpack.c.b16 %v2561, %v2553
        %v3498 = vpack.c.b16 %v2562, %v2554
        %v3499 = vpack.c.b16 %v2563, %v2555
        %v3500 = vpack.c.b16 %v2564, %v2556
        %v3501 = vpack.c.b16 %v2565, %v2557
        %v3502 = vpack.c.b16 %v2566, %v2558
        %v3503 = vpack.c.b16 %v2575, %v2567
        %v3504 = vpack.c.b16 %v2576, %v2568
        %v3505 = vpack.c.b16 %v2577, %v2569
        %v3506 = vpack.c.b16 %v2578, %v2570
        %v3507 = vpack.c.b16 %v2579, %v2571
        %v3508 = vpack.c.b16 %v2580, %v2572
        %v3509 = vpack.c.b16 %v2581, %v2573
        %v3510 = vpack.c.b16 %v2582, %v2574
        %v3511 = vpack.c.b16 %v2591, %v2583
        %v3512 = vpack.c.b16 %v2592, %v2584
        %v3513 = vpack.c.b16 %v2593, %v2585
        %v3514 = vpack.c.b16 %v2594, %v2586
        %v3515 = vpack.c.b16 %v2595, %v2587
        %v3516 = vpack.c.b16 %v2596, %v2588
        %v3517 = vpack.c.b16 %v2597, %v2589
        %v3518 = vpack.c.b16 %v2598, %v2590
        %v3519 = vpack.c.b16 %v2607, %v2599
        %v3520 = vpack.c.b16 %v2608, %v2600
        %v3521 = vpack.c.b16 %v2609, %v2601
        %v3522 = vpack.c.b16 %v2610, %v2602
        %v3523 = vpack.c.b16 %v2611, %v2603
        %v3524 = vpack.c.b16 %v2612, %v2604
        %v3525 = vpack.c.b16 %v2613, %v2605
        %v3526 = vpack.c.b16 %v2614, %v2606
        %v3527 = vpack.c.b16 %v2623, %v2615
        %v3528 = vpack.c.b16 %v2624, %v2616
        %v3529 = vpack.c.b16 %v2625, %v2617
        %v3530 = vpack.c.b16 %v2626, %v2618
        %v3531 = vpack.c.b16 %v2627, %v2619
        %v3532 = vpack.c.b16 %v2628, %v2620
        %v3533 = vpack.c.b16 %v2629, %v2621
        %v3534 = vpack.c.b16 %v2630, %v2622
        %v3535 = vpack.c.b16 %v2639, %v2631
        %v3536 = vpack.c.b16 %v2640, %v2632
        %v3537 = vpack.c.b16 %v2641, %v2633
        %v3538 = vpack.c.b16 %v2642, %v2634
        %v3539 = vpack.c.b16 %v2643, %v2635
        %v3540 = vpack.c.b16 %v2644, %v2636
        %v3541 = vpack.c.b16 %v2645, %v2637
        %v3542 = vpack.c.b16 %v2646, %v2638
        %v3543 = vpack.c.b16 %v2655, %v2647
        %v3544 = vpack.c.b16 %v2656, %v2648
        %v3545 = vpack.c.b16 %v2657, %v2649
        %v3546 = vpack.c.b16 %v2658, %v2650
        %v3547 = vpack.c.b16 %v2659, %v2651
        %v3548 = vpack.c.b16 %v2660, %v2652
        %v3549 = vpack.c.b16 %v2661, %v2653
        %v3550 = vpack.c.b16 %v2662, %v2654
        %v3551 = vpack.c.b16 %v2671, %v2663
        %v3552 = vpack.c.b16 %v2672, %v2664
        %v3553 = vpack.c.b16 %v2673, %v2665
        %v3554 = vpack.c.b16 %v2674, %v2666
        %v3555 = vpack.c.b16 %v2675, %v2667
        %v3556 = vpack.c.b16 %v2676, %v2668
        %v3557 = vpack.c.b16 %v2677, %v2669
        %v3558 = vpack.c.b16 %v2678, %v2670
        %v3559 = vpack.c.b16 %v2687, %v2679
        %v3560 = vpack.c.b16 %v2688, %v2680
        %v3561 = vpack.c.b16 %v2689, %v2681
        %v3562 = vpack.c.b16 %v2690, %v2682
        %v3563 = vpack.c.b16 %v2691, %v2683
        %v3564 = vpack.c.b16 %v2692, %v2684
        %v3565 = vpack.c.b16 %v2693, %v2685
        %v3566 = vpack.c.b16 %v2694, %v2686
        %v3567 = vpack.c.b16 %v2703, %v2695
        %v3568 = vpack.c.b16 %v2704, %v2696
        %v3569 = vpack.c.b16 %v2705, %v2697
        %v3570 = vpack.c.b16 %v2706, %v2698
        %v3571 = vpack.c.b16 %v2707, %v2699
        %v3572 = vpack.c.b16 %v2708, %v2700
        %v3573 = vpack.c.b16 %v2709, %v2701
        %v3574 = vpack.c.b16 %v2710, %v2702
        %v3575 = vpack.c.b16 %v2719, %v2711
        %v3576 = vpack.c.b16 %v2720, %v2712
        %v3577 = vpack.c.b16 %v2721, %v2713
        %v3578 = vpack.c.b16 %v2722, %v2714
        %v3579 = vpack.c.b16 %v2723, %v2715
        %v3580 = vpack.c.b16 %v2724, %v2716
        %v3581 = vpack.c.b16 %v2725, %v2717
        %v3582 = vpack.c.b16 %v2726, %v2718
        %v3583 = vpack.c.b16 %v2735, %v2727
        %v3584 = vpack.c.b16 %v2736, %v2728
        %v3585 = vpack.c.b16 %v2737, %v2729
        %v3586 = vpack.c.b16 %v2738, %v2730
        %v3587 = vpack.c.b16 %v2739, %v2731
        %v3588 = vpack.c.b16 %v2740, %v2732
        %v3589 = vpack.c.b16 %v2741, %v2733
        %v3590 = vpack.c.b16 %v2742, %v2734
        %v3591 = vpack.c.b16 %v2751, %v2743
        %v3592 = vpack.c.b16 %v2752, %v2744
        %v3593 = vpack.c.b16 %v2753, %v2745
        %v3594 = vpack.c.b16 %v2754, %v2746
        %v3595 = vpack.c.b16 %v2755, %v2747
        %v3596 = vpack.c.b16 %v2756, %v2748
        %v3597 = vpack.c.b16 %v2757, %v2749
        %v3598 = vpack.c.b16 %v2758, %v2750
        %v3599 = vpack.c.b16 %v2767, %v2759
        %v3600 = vpack.c.b16 %v2768, %v2760
        %v3601 = vpack.c.b16 %v2769, %v2761
        %v3602 = vpack.c.b16 %v2770, %v2762
        %v3603 = vpack.c.b16 %v2771, %v2763
        %v3604 = vpack.c.b16 %v2772, %v2764
        %v3605 = vpack.c.b16 %v2773, %v2765
        %v3606 = vpack.c.b16 %v2774, %v2766
        %v3607 = vpack.c.b16 %v2783, %v2775
        %v3608 = vpack.c.b16 %v2784, %v2776
        %v3609 = vpack.c.b16 %v2785, %v2777
        %v3610 = vpack.c.b16 %v2786, %v2778
        %v3611 = vpack.c.b16 %v2787, %v2779
        %v3612 = vpack.c.b16 %v2788, %v2780
        %v3613 = vpack.c.b16 %v2789, %v2781
        %v3614 = vpack.c.b16 %v2790, %v2782
        %v3615 = vpack.c.b16 %v2799, %v2791
        %v3616 = vpack.c.b16 %v2800, %v2792
        %v3617 = vpack.c.b16 %v2801, %v2793
        %v3618 = vpack.c.b16 %v2802, %v2794
        %v3619 = vpack.c.b16 %v2803, %v2795
        %v3620 = vpack.c.b16 %v2804, %v2796
        %v3621 = vpack.c.b16 %v2805, %v2797
        %v3622 = vpack.c.b16 %v2806, %v2798
        %v3623 = vpack.c.b16 %v2815, %v2807
        %v3624 = vpack.c.b16 %v2816, %v2808
        %v3625 = vpack.c.b16 %v2817, %v2809
        %v3626 = vpack.c.b16 %v2818, %v2810
        %v3627 = vpack.c.b16 %v2819, %v2811
        %v3628 = vpack.c.b16 %v2820, %v2812
        %v3629 = vpack.c.b16 %v2821, %v2813
        %v3630 = vpack.c.b16 %v2822, %v2814
        %v3631 = vpack.c.b16 %v2831, %v2823
        %v3632 = vpack.c.b16 %v2832, %v2824
        %v3633 = vpack.c.b16 %v2833, %v2825
        %v3634 = vpack.c.b16 %v2834, %v2826
        %v3635 = vpack.c.b16 %v2835, %v2827
        %v3636 = vpack.c.b16 %v2836, %v2828
        %v3637 = vpack.c.b16 %v2837, %v2829
        %v3638 = vpack.c.b16 %v2838, %v2830
        %v3639 = vpack.c.b16 %v2847, %v2839
        %v3640 = vpack.c.b16 %v2848, %v2840
        %v3641 = vpack.c.b16 %v2849, %v2841
        %v3642 = vpack.c.b16 %v2850, %v2842
        %v3643 = vpack.c.b16 %v2851, %v2843
        %v3644 = vpack.c.b16 %v2852, %v2844
        %v3645 = vpack.c.b16 %v2853, %v2845
        %v3646 = vpack.c.b16 %v2854, %v2846
        %v3647 = vpack.c.b16 %v2863, %v2855
        %v3648 = vpack.c.b16 %v2864, %v2856
        %v3649 = vpack.c.b16 %v2865, %v2857
        %v3650 = vpack.c.b16 %v2866, %v2858
        %v3651 = vpack.c.b16 %v2867, %v2859
        %v3652 = vpack.c.b16 %v2868, %v2860
        %v3653 = vpack.c.b16 %v2869, %v2861
        %v3654 = vpack.c.b16 %v2870, %v2862
        %v3655 = vpack.c.b16 %v2879, %v2871
        %v3656 = vpack.c.b16 %v2880, %v2872
        %v3657 = vpack.c.b16 %v2881, %v2873
        %v3658 = vpack.c.b16 %v2882, %v2874
        %v3659 = vpack.c.b16 %v2883, %v2875
        %v3660 = vpack.c.b16 %v2884, %v2876
        %v3661 = vpack.c.b16 %v2885, %v2877
        %v3662 = vpack.c.b16 %v2886, %v2878
        %v3663 = vpack.c.b16 %v2895, %v2887
        %v3664 = vpack.c.b16 %v2896, %v2888
        %v3665 = vpack.c.b16 %v2897, %v2889
        %v3666 = vpack.c.b16 %v2898, %v2890
        %v3667 = vpack.c.b16 %v2899, %v2891
        %v3668 = vpack.c.b16 %v2900, %v2892
        %v3669 = vpack.c.b16 %v2901, %v2893
        %v3670 = vpack.c.b16 %v2902, %v2894
        %v3671 = vpack.c.b16 %v2911, %v2903
        %v3672 = vpack.c.b16 %v2912, %v2904
        %v3673 = vpack.c.b16 %v2913, %v2905
        %v3674 = vpack.c.b16 %v2914, %v2906
        %v3675 = vpack.c.b16 %v2915, %v2907
        %v3676 = vpack.c.b16 %v2916, %v2908
        %v3677 = vpack.c.b16 %v2917, %v2909
        %v3678 = vpack.c.b16 %v2918, %v2910
        %v3679 = vpack.c.b16 %v2927, %v2919
        %v3680 = vpack.c.b16 %v2928, %v2920
        %v3681 = vpack.c.b16 %v2929, %v2921
        %v3682 = vpack.c.b16 %v2930, %v2922
        %v3683 = vpack.c.b16 %v2931, %v2923
        %v3684 = vpack.c.b16 %v2932, %v2924
        %v3685 = vpack.c.b16 %v2933, %v2925
        %v3686 = vpack.c.b16 %v2934, %v2926
        %v3687 = vpack.c.b16 %v2943, %v2935
        %v3688 = vpack.c.b16 %v2944, %v2936
        %v3689 = vpack.c.b16 %v2945, %v2937
        %v3690 = vpack.c.b16 %v2946, %v2938
        %v3691 = vpack.c.b16 %v2947, %v2939
        %v3692 = vpack.c.b16 %v2948, %v2940
        %v3693 = vpack.c.b16 %v2949, %v2941
        %v3694 = vpack.c.b16 %v2950, %v2942
        %v3695 = vpack.c.b16 %v2959, %v2951
        %v3696 = vpack.c.b16 %v2960, %v2952
        %v3697 = vpack.c.b16 %v2961, %v2953
        %v3698 = vpack.c.b16 %v2962, %v2954
        %v3699 = vpack.c.b16 %v2963, %v2955
        %v3700 = vpack.c.b16 %v2964, %v2956
        %v3701 = vpack.c.b16 %v2965, %v2957
        %v3702 = vpack.c.b16 %v2966, %v2958
        %v3703 = vpack.c.b16 %v2975, %v2967
        %v3704 = vpack.c.b16 %v2976, %v2968
        %v3705 = vpack.c.b16 %v2977, %v2969
        %v3706 = vpack.c.b16 %v2978, %v2970
        %v3707 = vpack.c.b16 %v2979, %v2971
        %v3708 = vpack.c.b16 %v2980, %v2972
        %v3709 = vpack.c.b16 %v2981, %v2973
        %v3710 = vpack.c.b16 %v2982, %v2974
        %v3711 = vpack.c.b16 %v2991, %v2983
        %v3712 = vpack.c.b16 %v2992, %v2984
        %v3713 = vpack.c.b16 %v2993, %v2985
        %v3714 = vpack.c.b16 %v2994, %v2986
        %v3715 = vpack.c.b16 %v2995, %v2987
        %v3716 = vpack.c.b16 %v2996, %v2988
        %v3717 = vpack.c.b16 %v2997, %v2989
        %v3718 = vpack.c.b16 %v2998, %v2990
        %v3719 = vpack.c.b16 %v3007, %v2999
        %v3720 = vpack.c.b16 %v3008, %v3000
        %v3721 = vpack.c.b16 %v3009, %v3001
        %v3722 = vpack.c.b16 %v3010, %v3002
        %v3723 = vpack.c.b16 %v3011, %v3003
        %v3724 = vpack.c.b16 %v3012, %v3004
        %v3725 = vpack.c.b16 %v3013, %v3005
        %v3726 = vpack.c.b16 %v3014, %v3006
        %v3727 = vpack.c.b16 %v3023, %v3015
        %v3728 = vpack.c.b16 %v3024, %v3016
        %v3729 = vpack.c.b16 %v3025, %v3017
        %v3730 = vpack.c.b16 %v3026, %v3018
        %v3731 = vpack.c.b16 %v3027, %v3019
        %v3732 = vpack.c.b16 %v3028, %v3020
        %v3733 = vpack.c.b16 %v3029, %v3021
        %v3734 = vpack.c.b16 %v3030, %v3022
        %v3735 = vpack.c.b16 %v3039, %v3031
        %v3736 = vpack.c.b16 %v3040, %v3032
        %v3737 = vpack.c.b16 %v3041, %v3033
        %v3738 = vpack.c.b16 %v3042, %v3034
        %v3739 = vpack.c.b16 %v3043, %v3035
        %v3740 = vpack.c.b16 %v3044, %v3036
        %v3741 = vpack.c.b16 %v3045, %v3037
        %v3742 = vpack.c.b16 %v3046, %v3038
        %v3743 = vpack.c.b16 %v3055, %v3047
        %v3744 = vpack.c.b16 %v3056, %v3048
        %v3745 = vpack.c.b16 %v3057, %v3049
        %v3746 = vpack.c.b16 %v3058, %v3050
        %v3747 = vpack.c.b16 %v3059, %v3051
        %v3748 = vpack.c.b16 %v3060, %v3052
        %v3749 = vpack.c.b16 %v3061, %v3053
        %v3750 = vpack.c.b16 %v3062, %v3054
        %v3751 = vpack.c.b16 %v3071, %v3063
        %v3752 = vpack.c.b16 %v3072, %v3064
        %v3753 = vpack.c.b16 %v3073, %v3065
        %v3754 = vpack.c.b16 %v3074, %v3066
        %v3755 = vpack.c.b16 %v3075, %v3067
        %v3756 = vpack.c.b16 %v3076, %v3068
        %v3757 = vpack.c.b16 %v3077, %v3069
        %v3758 = vpack.c.b16 %v3078, %v3070
        %v3759 = vpack.c.b16 %v3087, %v3079
        %v3760 = vpack.c.b16 %v3088, %v3080
        %v3761 = vpack.c.b16 %v3089, %v3081
        %v3762 = vpack.c.b16 %v3090, %v3082
        %v3763 = vpack.c.b16 %v3091, %v3083
        %v3764 = vpack.c.b16 %v3092, %v3084
        %v3765 = vpack.c.b16 %v3093, %v3085
        %v3766 = vpack.c.b16 %v3094, %v3086
        %v3767 = vpack.c.b16 %v3103, %v3095
        %v3768 = vpack.c.b16 %v3104, %v3096
        %v3769 = vpack.c.b16 %v3105, %v3097
        %v3770 = vpack.c.b16 %v3106, %v3098
        %v3771 = vpack.c.b16 %v3107, %v3099
        %v3772 = vpack.c.b16 %v3108, %v3100
        %v3773 = vpack.c.b16 %v3109, %v3101
        %v3774 = vpack.c.b16 %v3110, %v3102
        %v3775 = vpack.c.b16 %v3119, %v3111
        %v3776 = vpack.c.b16 %v3120, %v3112
        %v3777 = vpack.c.b16 %v3121, %v3113
        %v3778 = vpack.c.b16 %v3122, %v3114
        %v3779 = vpack.c.b16 %v3123, %v3115
        %v3780 = vpack.c.b16 %v3124, %v3116
        %v3781 = vpack.c.b16 %v3125, %v3117
        %v3782 = vpack.c.b16 %v3126, %v3118
        %v3783 = vpack.c.b16 %v3135, %v3127
        %v3784 = vpack.c.b16 %v3136, %v3128
        %v3785 = vpack.c.b16 %v3137, %v3129
        %v3786 = vpack.c.b16 %v3138, %v3130
        %v3787 = vpack.c.b16 %v3139, %v3131
        %v3788 = vpack.c.b16 %v3140, %v3132
        %v3789 = vpack.c.b16 %v3141, %v3133
        %v3790 = vpack.c.b16 %v3142, %v3134
        %v3791 = vpack.c.b16 %v3151, %v3143
        %v3792 = vpack.c.b16 %v3152, %v3144
        %v3793 = vpack.c.b16 %v3153, %v3145
        %v3794 = vpack.c.b16 %v3154, %v3146
        %v3795 = vpack.c.b16 %v3155, %v3147
        %v3796 = vpack.c.b16 %v3156, %v3148
        %v3797 = vpack.c.b16 %v3157, %v3149
        %v3798 = vpack.c.b16 %v3158, %v3150
        %v3799 = vpack.c.b16 %v3167, %v3159
        %v3800 = vpack.c.b16 %v3168, %v3160
        %v3801 = vpack.c.b16 %v3169, %v3161
        %v3802 = vpack.c.b16 %v3170, %v3162
        %v3803 = vpack.c.b16 %v3171, %v3163
        %v3804 = vpack.c.b16 %v3172, %v3164
        %v3805 = vpack.c.b16 %v3173, %v3165
        %v3806 = vpack.c.b16 %v3174, %v3166
        %v3807 = vpack.c.b16 %v3183, %v3175
        %v3808 = vpack.c.b16 %v3184, %v3176
        %v3809 = vpack.c.b16 %v3185, %v3177
        %v3810 = vpack.c.b16 %v3186, %v3178
        %v3811 = vpack.c.b16 %v3187, %v3179
        %v3812 = vpack.c.b16 %v3188, %v3180
        %v3813 = vpack.c.b16 %v3189, %v3181
        %v3814 = vpack.c.b16 %v3190, %v3182
        %v3815 = vpack.c.b16 %v3199, %v3191
        %v3816 = vpack.c.b16 %v3200, %v3192
        %v3817 = vpack.c.b16 %v3201, %v3193
        %v3818 = vpack.c.b16 %v3202, %v3194
        %v3819 = vpack.c.b16 %v3203, %v3195
        %v3820 = vpack.c.b16 %v3204, %v3196
        %v3821 = vpack.c.b16 %v3205, %v3197
        %v3822 = vpack.c.b16 %v3206, %v3198
        %v3823 = vpack.c.b16 %v3215, %v3207
        %v3824 = vpack.c.b16 %v3216, %v3208
        %v3825 = vpack.c.b16 %v3217, %v3209
        %v3826 = vpack.c.b16 %v3218, %v3210
        %v3827 = vpack.c.b16 %v3219, %v3211
        %v3828 = vpack.c.b16 %v3220, %v3212
        %v3829 = vpack.c.b16 %v3221, %v3213
        %v3830 = vpack.c.b16 %v3222, %v3214
        %v3831 = vpack.c.b16 %v3231, %v3223
        %v3832 = vpack.c.b16 %v3232, %v3224
        %v3833 = vpack.c.b16 %v3233, %v3225
        %v3834 = vpack.c.b16 %v3234, %v3226
        %v3835 = vpack.c.b16 %v3235, %v3227
        %v3836 = vpack.c.b16 %v3236, %v3228
        %v3837 = vpack.c.b16 %v3237, %v3229
        %v3838 = vpack.c.b16 %v3238, %v3230
        %v3839 = vpack.c.b16 %v3247, %v3239
        %v3840 = vpack.c.b16 %v3248, %v3240
        %v3841 = vpack.c.b16 %v3249, %v3241
        %v3842 = vpack.c.b16 %v3250, %v3242
        %v3843 = vpack.c.b16 %v3251, %v3243
        %v3844 = vpack.c.b16 %v3252, %v3244
        %v3845 = vpack.c.b16 %v3253, %v3245
        %v3846 = vpack.c.b16 %v3254, %v3246
        %v3847 = vpack.c.b16 %v3263, %v3255
        %v3848 = vpack.c.b16 %v3264, %v3256
        %v3849 = vpack.c.b16 %v3265, %v3257
        %v3850 = vpack.c.b16 %v3266, %v3258
        %v3851 = vpack.c.b16 %v3267, %v3259
        %v3852 = vpack.c.b16 %v3268, %v3260
        %v3853 = vpack.c.b16 %v3269, %v3261
        %v3854 = vpack.c.b16 %v3270, %v3262
        %v3855 = vpack.c.b16 %v3279, %v3271
        %v3856 = vpack.c.b16 %v3280, %v3272
        %v3857 = vpack.c.b16 %v3281, %v3273
        %v3858 = vpack.c.b16 %v3282, %v3274
        %v3859 = vpack.c.b16 %v3283, %v3275
        %v3860 = vpack.c.b16 %v3284, %v3276
        %v3861 = vpack.c.b16 %v3285, %v3277
        %v3862 = vpack.c.b16 %v3286, %v3278
        %v3863 = vpack.c.b16 %v3295, %v3287
        %v3864 = vpack.c.b16 %v3296, %v3288
        %v3865 = vpack.c.b16 %v3297, %v3289
        %v3866 = vpack.c.b16 %v3298, %v3290
        %v3867 = vpack.c.b16 %v3299, %v3291
        %v3868 = vpack.c.b16 %v3300, %v3292
        %v3869 = vpack.c.b16 %v3301, %v3293
        %v3870 = vpack.c.b16 %v3302, %v3294
        %v3871 = vpack.c.b16 %v3311, %v3303
        %v3872 = vpack.c.b16 %v3312, %v3304
        %v3873 = vpack.c.b16 %v3313, %v3305
        %v3874 = vpack.c.b16 %v3314, %v3306
        %v3875 = vpack.c.b16 %v3315, %v3307
        %v3876 = vpack.c.b16 %v3316, %v3308
        %v3877 = vpack.c.b16 %v3317, %v3309
        %v3878 = vpack.c.b16 %v3318, %v3310
        %v3879 = vpack.c.b16 %v3327, %v3319
        %v3880 = vpack.c.b16 %v3328, %v3320
        %v3881 = vpack.c.b16 %v3329, %v3321
        %v3882 = vpack.c.b16 %v3330, %v3322
        %v3883 = vpack.c.b16 %v3331, %v3323
        %v3884 = vpack.c.b16 %v3332, %v3324
        %v3885 = vpack.c.b16 %v3333, %v3325
        %v3886 = vpack.c.b16 %v3334, %v3326
        %v3887 = vpack.c.b16 %v3343, %v3335
        %v3888 = vpack.c.b16 %v3344, %v3336
        %v3889 = vpack.c.b16 %v3345, %v3337
        %v3890 = vpack.c.b16 %v3346, %v3338
        %v3891 = vpack.c.b16 %v3347, %v3339
        %v3892 = vpack.c.b16 %v3348, %v3340
        %v3893 = vpack.c.b16 %v3349, %v3341
        %v3894 = vpack.c.b16 %v3350, %v3342
        %v3895 = vpack.c.b16 %v3359, %v3351
        %v3896 = vpack.c.b16 %v3360, %v3352
        %v3897 = vpack.c.b16 %v3361, %v3353
        %v3898 = vpack.c.b16 %v3362, %v3354
        %v3899 = vpack.c.b16 %v3363, %v3355
        %v3900 = vpack.c.b16 %v3364, %v3356
        %v3901 = vpack.c.b16 %v3365, %v3357
        %v3902 = vpack.c.b16 %v3366, %v3358
        %v3903 = vpack.c.b16 %v3375, %v3367
        %v3904 = vpack.c.b16 %v3376, %v3368
        %v3905 = vpack.c.b16 %v3377, %v3369
        %v3906 = vpack.c.b16 %v3378, %v3370
        %v3907 = vpack.c.b16 %v3379, %v3371
        %v3908 = vpack.c.b16 %v3380, %v3372
        %v3909 = vpack.c.b16 %v3381, %v3373
        %v3910 = vpack.c.b16 %v3382, %v3374
        %v3911 = vpack.c.b16 %v3391, %v3383
        %v3912 = vpack.c.b16 %v3392, %v3384
        %v3913 = vpack.c.b16 %v3393, %v3385
        %v3914 = vpack.c.b16 %v3394, %v3386
        %v3915 = vpack.c.b16 %v3395, %v3387
        %v3916 = vpack.c.b16 %v3396, %v3388
        %v3917 = vpack.c.b16 %v3397, %v3389
        %v3918 = vpack.c.b16 %v3398, %v3390
        %v3919 = vpack.c.b16 %v3407, %v3399
        %v3920 = vpack.c.b16 %v3408, %v3400
        %v3921 = vpack.c.b16 %v3409, %v3401
        %v3922 = vpack.c.b16 %v3410, %v3402
        %v3923 = vpack.c.b16 %v3411, %v3403
        %v3924 = vpack.c.b16 %v3412, %v3404
        %v3925 = vpack.c.b16 %v3413, %v3405
        %v3926 = vpack.c.b16 %v3414, %v3406
        %4439 = vmatpush.bf16.msra.mxu0 %v3471
        %4440 = vmatpush.bf16.msra.mxu0 %v3463
        %4441 = vmatpush.bf16.msra.mxu0 %v3455
        %4442 = vmatpush.bf16.msra.mxu0 %v3447
        %4443 = vmatpush.bf16.msra.mxu0 %v3439
        %4444 = vmatpush.bf16.msra.mxu0 %v3431
        %4445 = vmatpush.bf16.msra.mxu0 %v3423
        %4446 = vmatpush.bf16.msra.mxu0 %v3415
        %4447 = vmatmul.bf16.gmra.mxu0 %v1341
        %v4448 = vpop.f32.mrf.mxu0
        %v4449 = vadd.f32 %v1863, %v4448
        %v4450 = vpop.f32.mrf.mxu0
        %4451 = vdwg.mxu0
        %4452 = vmatpush.bf16.msra.mxu0 %v3535
        %4453 = vmatpush.bf16.msra.mxu0 %v3527
        %4454 = vmatpush.bf16.msra.mxu0 %v3519
        %4455 = vmatpush.bf16.msra.mxu0 %v3511
        %4456 = vmatpush.bf16.msra.mxu0 %v3503
        %4457 = vmatpush.bf16.msra.mxu0 %v3495
        %4458 = vmatpush.bf16.msra.mxu0 %v3487
        %4459 = vmatpush.bf16.msra.mxu0 %v3479
        %4460 = vmatmul.bf16.gmra.mxu0 %v1342
        %v4461 = vpop.f32.mrf.mxu0
        %v4462 = vadd.f32 %v4449, %v4461
        %v4463 = vpop.f32.mrf.mxu0
        %4464 = vdwg.mxu0
        %4465 = vmatpush.bf16.msra.mxu0 %v3599
        %4466 = vmatpush.bf16.msra.mxu0 %v3591
        %4467 = vmatpush.bf16.msra.mxu0 %v3583
        %4468 = vmatpush.bf16.msra.mxu0 %v3575
        %4469 = vmatpush.bf16.msra.mxu0 %v3567
        %4470 = vmatpush.bf16.msra.mxu0 %v3559
        %4471 = vmatpush.bf16.msra.mxu0 %v3551
        %4472 = vmatpush.bf16.msra.mxu0 %v3543
        %4473 = vmatmul.bf16.gmra.mxu0 %v1343
        %v4474 = vpop.f32.mrf.mxu0
        %v4475 = vadd.f32 %v4462, %v4474
        %v4476 = vpop.f32.mrf.mxu0
        %4477 = vdwg.mxu0
        %4478 = vmatpush.bf16.msra.mxu0 %v3663
        %4479 = vmatpush.bf16.msra.mxu0 %v3655
        %4480 = vmatpush.bf16.msra.mxu0 %v3647
        %4481 = vmatpush.bf16.msra.mxu0 %v3639
        %4482 = vmatpush.bf16.msra.mxu0 %v3631
        %4483 = vmatpush.bf16.msra.mxu0 %v3623
        %4484 = vmatpush.bf16.msra.mxu0 %v3615
        %4485 = vmatpush.bf16.msra.mxu0 %v3607
        %4486 = vmatmul.bf16.gmra.mxu0 %v1344
        %v4487 = vpop.f32.mrf.mxu0
        %v4488 = vadd.f32 %v4475, %v4487
        %v4489 = vpop.f32.mrf.mxu0
        %4490 = vdwg.mxu0
        %4491 = vmatpush.bf16.msra.mxu0 %v3727
        %4492 = vmatpush.bf16.msra.mxu0 %v3719
        %4493 = vmatpush.bf16.msra.mxu0 %v3711
        %4494 = vmatpush.bf16.msra.mxu0 %v3703
        %4495 = vmatpush.bf16.msra.mxu0 %v3695
        %4496 = vmatpush.bf16.msra.mxu0 %v3687
        %4497 = vmatpush.bf16.msra.mxu0 %v3679
        %4498 = vmatpush.bf16.msra.mxu0 %v3671
        %4499 = vmatmul.bf16.gmra.mxu0 %v1345
        %v4500 = vpop.f32.mrf.mxu0
        %v4501 = vadd.f32 %v4488, %v4500
        %v4502 = vpop.f32.mrf.mxu0
        %4503 = vdwg.mxu0
        %4504 = vmatpush.bf16.msra.mxu0 %v3791
        %4505 = vmatpush.bf16.msra.mxu0 %v3783
        %4506 = vmatpush.bf16.msra.mxu0 %v3775
        %4507 = vmatpush.bf16.msra.mxu0 %v3767
        %4508 = vmatpush.bf16.msra.mxu0 %v3759
        %4509 = vmatpush.bf16.msra.mxu0 %v3751
        %4510 = vmatpush.bf16.msra.mxu0 %v3743
        %4511 = vmatpush.bf16.msra.mxu0 %v3735
        %4512 = vmatmul.bf16.gmra.mxu0 %v1346
        %v4513 = vpop.f32.mrf.mxu0
        %v4514 = vadd.f32 %v4501, %v4513
        %v4515 = vpop.f32.mrf.mxu0
        %4516 = vdwg.mxu0
        %4517 = vmatpush.bf16.msra.mxu0 %v3855
        %4518 = vmatpush.bf16.msra.mxu0 %v3847
        %4519 = vmatpush.bf16.msra.mxu0 %v3839
        %4520 = vmatpush.bf16.msra.mxu0 %v3831
        %4521 = vmatpush.bf16.msra.mxu0 %v3823
        %4522 = vmatpush.bf16.msra.mxu0 %v3815
        %4523 = vmatpush.bf16.msra.mxu0 %v3807
        %4524 = vmatpush.bf16.msra.mxu0 %v3799
        %4525 = vmatmul.bf16.gmra.mxu0 %v1347
        %v4526 = vpop.f32.mrf.mxu0
        %v4527 = vadd.f32 %v4514, %v4526
        %v4528 = vpop.f32.mrf.mxu0
        %4529 = vdwg.mxu0
        %4530 = vmatpush.bf16.msra.mxu0 %v3919
        %4531 = vmatpush.bf16.msra.mxu0 %v3911
        %4532 = vmatpush.bf16.msra.mxu0 %v3903
        %4533 = vmatpush.bf16.msra.mxu0 %v3895
        %4534 = vmatpush.bf16.msra.mxu0 %v3887
        %4535 = vmatpush.bf16.msra.mxu0 %v3879
        %4536 = vmatpush.bf16.msra.mxu0 %v3871
        %4537 = vmatpush.bf16.msra.mxu0 %v3863
        %4538 = vmatmul.bf16.gmra.mxu0 %v1348
        %v4539 = vpop.f32.mrf.mxu0
        %v4540 = vadd.f32 %v4527, %v4539
        %v4541 = vpop.f32.mrf.mxu0
        %4542 = vdwg.mxu0
        %4543 = vmatpush.bf16.msra.mxu0 %v3472
        %4544 = vmatpush.bf16.msra.mxu0 %v3464
        %4545 = vmatpush.bf16.msra.mxu0 %v3456
        %4546 = vmatpush.bf16.msra.mxu0 %v3448
        %4547 = vmatpush.bf16.msra.mxu0 %v3440
        %4548 = vmatpush.bf16.msra.mxu0 %v3432
        %4549 = vmatpush.bf16.msra.mxu0 %v3424
        %4550 = vmatpush.bf16.msra.mxu0 %v3416
        %4551 = vmatmul.bf16.gmra.mxu0 %v1341
        %v4552 = vpop.f32.mrf.mxu0
        %v4553 = vadd.f32 %v1864, %v4552
        %v4554 = vpop.f32.mrf.mxu0
        %4555 = vdwg.mxu0
        %4556 = vmatpush.bf16.msra.mxu0 %v3536
        %4557 = vmatpush.bf16.msra.mxu0 %v3528
        %4558 = vmatpush.bf16.msra.mxu0 %v3520
        %4559 = vmatpush.bf16.msra.mxu0 %v3512
        %4560 = vmatpush.bf16.msra.mxu0 %v3504
        %4561 = vmatpush.bf16.msra.mxu0 %v3496
        %4562 = vmatpush.bf16.msra.mxu0 %v3488
        %4563 = vmatpush.bf16.msra.mxu0 %v3480
        %4564 = vmatmul.bf16.gmra.mxu0 %v1342
        %v4565 = vpop.f32.mrf.mxu0
        %v4566 = vadd.f32 %v4553, %v4565
        %v4567 = vpop.f32.mrf.mxu0
        %4568 = vdwg.mxu0
        %4569 = vmatpush.bf16.msra.mxu0 %v3600
        %4570 = vmatpush.bf16.msra.mxu0 %v3592
        %4571 = vmatpush.bf16.msra.mxu0 %v3584
        %4572 = vmatpush.bf16.msra.mxu0 %v3576
        %4573 = vmatpush.bf16.msra.mxu0 %v3568
        %4574 = vmatpush.bf16.msra.mxu0 %v3560
        %4575 = vmatpush.bf16.msra.mxu0 %v3552
        %4576 = vmatpush.bf16.msra.mxu0 %v3544
        %4577 = vmatmul.bf16.gmra.mxu0 %v1343
        %v4578 = vpop.f32.mrf.mxu0
        %v4579 = vadd.f32 %v4566, %v4578
        %v4580 = vpop.f32.mrf.mxu0
        %4581 = vdwg.mxu0
        %4582 = vmatpush.bf16.msra.mxu0 %v3664
        %4583 = vmatpush.bf16.msra.mxu0 %v3656
        %4584 = vmatpush.bf16.msra.mxu0 %v3648
        %4585 = vmatpush.bf16.msra.mxu0 %v3640
        %4586 = vmatpush.bf16.msra.mxu0 %v3632
        %4587 = vmatpush.bf16.msra.mxu0 %v3624
        %4588 = vmatpush.bf16.msra.mxu0 %v3616
        %4589 = vmatpush.bf16.msra.mxu0 %v3608
        %4590 = vmatmul.bf16.gmra.mxu0 %v1344
        %v4591 = vpop.f32.mrf.mxu0
        %v4592 = vadd.f32 %v4579, %v4591
        %v4593 = vpop.f32.mrf.mxu0
        %4594 = vdwg.mxu0
        %4595 = vmatpush.bf16.msra.mxu0 %v3728
        %4596 = vmatpush.bf16.msra.mxu0 %v3720
        %4597 = vmatpush.bf16.msra.mxu0 %v3712
        %4598 = vmatpush.bf16.msra.mxu0 %v3704
        %4599 = vmatpush.bf16.msra.mxu0 %v3696
        %4600 = vmatpush.bf16.msra.mxu0 %v3688
        %4601 = vmatpush.bf16.msra.mxu0 %v3680
        %4602 = vmatpush.bf16.msra.mxu0 %v3672
        %4603 = vmatmul.bf16.gmra.mxu0 %v1345
        %v4604 = vpop.f32.mrf.mxu0
        %v4605 = vadd.f32 %v4592, %v4604
        %v4606 = vpop.f32.mrf.mxu0
        %4607 = vdwg.mxu0
        %4608 = vmatpush.bf16.msra.mxu0 %v3792
        %4609 = vmatpush.bf16.msra.mxu0 %v3784
        %4610 = vmatpush.bf16.msra.mxu0 %v3776
        %4611 = vmatpush.bf16.msra.mxu0 %v3768
        %4612 = vmatpush.bf16.msra.mxu0 %v3760
        %4613 = vmatpush.bf16.msra.mxu0 %v3752
        %4614 = vmatpush.bf16.msra.mxu0 %v3744
        %4615 = vmatpush.bf16.msra.mxu0 %v3736
        %4616 = vmatmul.bf16.gmra.mxu0 %v1346
        %v4617 = vpop.f32.mrf.mxu0
        %v4618 = vadd.f32 %v4605, %v4617
        %v4619 = vpop.f32.mrf.mxu0
        %4620 = vdwg.mxu0
        %4621 = vmatpush.bf16.msra.mxu0 %v3856
        %4622 = vmatpush.bf16.msra.mxu0 %v3848
        %4623 = vmatpush.bf16.msra.mxu0 %v3840
        %4624 = vmatpush.bf16.msra.mxu0 %v3832
        %4625 = vmatpush.bf16.msra.mxu0 %v3824
        %4626 = vmatpush.bf16.msra.mxu0 %v3816
        %4627 = vmatpush.bf16.msra.mxu0 %v3808
        %4628 = vmatpush.bf16.msra.mxu0 %v3800
        %4629 = vmatmul.bf16.gmra.mxu0 %v1347
        %v4630 = vpop.f32.mrf.mxu0
        %v4631 = vadd.f32 %v4618, %v4630
        %v4632 = vpop.f32.mrf.mxu0
        %4633 = vdwg.mxu0
        %4634 = vmatpush.bf16.msra.mxu0 %v3920
        %4635 = vmatpush.bf16.msra.mxu0 %v3912
        %4636 = vmatpush.bf16.msra.mxu0 %v3904
        %4637 = vmatpush.bf16.msra.mxu0 %v3896
        %4638 = vmatpush.bf16.msra.mxu0 %v3888
        %4639 = vmatpush.bf16.msra.mxu0 %v3880
        %4640 = vmatpush.bf16.msra.mxu0 %v3872
        %4641 = vmatpush.bf16.msra.mxu0 %v3864
        %4642 = vmatmul.bf16.gmra.mxu0 %v1348
        %v4643 = vpop.f32.mrf.mxu0
        %v4644 = vadd.f32 %v4631, %v4643
        %v4645 = vpop.f32.mrf.mxu0
        %4646 = vdwg.mxu0
        %4647 = vmatpush.bf16.msra.mxu0 %v3473
        %4648 = vmatpush.bf16.msra.mxu0 %v3465
        %4649 = vmatpush.bf16.msra.mxu0 %v3457
        %4650 = vmatpush.bf16.msra.mxu0 %v3449
        %4651 = vmatpush.bf16.msra.mxu0 %v3441
        %4652 = vmatpush.bf16.msra.mxu0 %v3433
        %4653 = vmatpush.bf16.msra.mxu0 %v3425
        %4654 = vmatpush.bf16.msra.mxu0 %v3417
        %4655 = vmatmul.bf16.gmra.mxu0 %v1341
        %v4656 = vpop.f32.mrf.mxu0
        %v4657 = vadd.f32 %v1865, %v4656
        %v4658 = vpop.f32.mrf.mxu0
        %4659 = vdwg.mxu0
        %4660 = vmatpush.bf16.msra.mxu0 %v3537
        %4661 = vmatpush.bf16.msra.mxu0 %v3529
        %4662 = vmatpush.bf16.msra.mxu0 %v3521
        %4663 = vmatpush.bf16.msra.mxu0 %v3513
        %4664 = vmatpush.bf16.msra.mxu0 %v3505
        %4665 = vmatpush.bf16.msra.mxu0 %v3497
        %4666 = vmatpush.bf16.msra.mxu0 %v3489
        %4667 = vmatpush.bf16.msra.mxu0 %v3481
        %4668 = vmatmul.bf16.gmra.mxu0 %v1342
        %v4669 = vpop.f32.mrf.mxu0
        %v4670 = vadd.f32 %v4657, %v4669
        %v4671 = vpop.f32.mrf.mxu0
        %4672 = vdwg.mxu0
        %4673 = vmatpush.bf16.msra.mxu0 %v3601
        %4674 = vmatpush.bf16.msra.mxu0 %v3593
        %4675 = vmatpush.bf16.msra.mxu0 %v3585
        %4676 = vmatpush.bf16.msra.mxu0 %v3577
        %4677 = vmatpush.bf16.msra.mxu0 %v3569
        %4678 = vmatpush.bf16.msra.mxu0 %v3561
        %4679 = vmatpush.bf16.msra.mxu0 %v3553
        %4680 = vmatpush.bf16.msra.mxu0 %v3545
        %4681 = vmatmul.bf16.gmra.mxu0 %v1343
        %v4682 = vpop.f32.mrf.mxu0
        %v4683 = vadd.f32 %v4670, %v4682
        %v4684 = vpop.f32.mrf.mxu0
        %4685 = vdwg.mxu0
        %4686 = vmatpush.bf16.msra.mxu0 %v3665
        %4687 = vmatpush.bf16.msra.mxu0 %v3657
        %4688 = vmatpush.bf16.msra.mxu0 %v3649
        %4689 = vmatpush.bf16.msra.mxu0 %v3641
        %4690 = vmatpush.bf16.msra.mxu0 %v3633
        %4691 = vmatpush.bf16.msra.mxu0 %v3625
        %4692 = vmatpush.bf16.msra.mxu0 %v3617
        %4693 = vmatpush.bf16.msra.mxu0 %v3609
        %4694 = vmatmul.bf16.gmra.mxu0 %v1344
        %v4695 = vpop.f32.mrf.mxu0
        %v4696 = vadd.f32 %v4683, %v4695
        %v4697 = vpop.f32.mrf.mxu0
        %4698 = vdwg.mxu0
        %4699 = vmatpush.bf16.msra.mxu0 %v3729
        %4700 = vmatpush.bf16.msra.mxu0 %v3721
        %4701 = vmatpush.bf16.msra.mxu0 %v3713
        %4702 = vmatpush.bf16.msra.mxu0 %v3705
        %4703 = vmatpush.bf16.msra.mxu0 %v3697
        %4704 = vmatpush.bf16.msra.mxu0 %v3689
        %4705 = vmatpush.bf16.msra.mxu0 %v3681
        %4706 = vmatpush.bf16.msra.mxu0 %v3673
        %4707 = vmatmul.bf16.gmra.mxu0 %v1345
        %v4708 = vpop.f32.mrf.mxu0
        %v4709 = vadd.f32 %v4696, %v4708
        %v4710 = vpop.f32.mrf.mxu0
        %4711 = vdwg.mxu0
        %4712 = vmatpush.bf16.msra.mxu0 %v3793
        %4713 = vmatpush.bf16.msra.mxu0 %v3785
        %4714 = vmatpush.bf16.msra.mxu0 %v3777
        %4715 = vmatpush.bf16.msra.mxu0 %v3769
        %4716 = vmatpush.bf16.msra.mxu0 %v3761
        %4717 = vmatpush.bf16.msra.mxu0 %v3753
        %4718 = vmatpush.bf16.msra.mxu0 %v3745
        %4719 = vmatpush.bf16.msra.mxu0 %v3737
        %4720 = vmatmul.bf16.gmra.mxu0 %v1346
        %v4721 = vpop.f32.mrf.mxu0
        %v4722 = vadd.f32 %v4709, %v4721
        %v4723 = vpop.f32.mrf.mxu0
        %4724 = vdwg.mxu0
        %4725 = vmatpush.bf16.msra.mxu0 %v3857
        %4726 = vmatpush.bf16.msra.mxu0 %v3849
        %4727 = vmatpush.bf16.msra.mxu0 %v3841
        %4728 = vmatpush.bf16.msra.mxu0 %v3833
        %4729 = vmatpush.bf16.msra.mxu0 %v3825
        %4730 = vmatpush.bf16.msra.mxu0 %v3817
        %4731 = vmatpush.bf16.msra.mxu0 %v3809
        %4732 = vmatpush.bf16.msra.mxu0 %v3801
        %4733 = vmatmul.bf16.gmra.mxu0 %v1347
        %v4734 = vpop.f32.mrf.mxu0
        %v4735 = vadd.f32 %v4722, %v4734
        %v4736 = vpop.f32.mrf.mxu0
        %4737 = vdwg.mxu0
        %4738 = vmatpush.bf16.msra.mxu0 %v3921
        %4739 = vmatpush.bf16.msra.mxu0 %v3913
        %4740 = vmatpush.bf16.msra.mxu0 %v3905
        %4741 = vmatpush.bf16.msra.mxu0 %v3897
        %4742 = vmatpush.bf16.msra.mxu0 %v3889
        %4743 = vmatpush.bf16.msra.mxu0 %v3881
        %4744 = vmatpush.bf16.msra.mxu0 %v3873
        %4745 = vmatpush.bf16.msra.mxu0 %v3865
        %4746 = vmatmul.bf16.gmra.mxu0 %v1348
        %v4747 = vpop.f32.mrf.mxu0
        %v4748 = vadd.f32 %v4735, %v4747
        %v4749 = vpop.f32.mrf.mxu0
        %4750 = vdwg.mxu0
        %4751 = vmatpush.bf16.msra.mxu0 %v3474
        %4752 = vmatpush.bf16.msra.mxu0 %v3466
        %4753 = vmatpush.bf16.msra.mxu0 %v3458
        %4754 = vmatpush.bf16.msra.mxu0 %v3450
        %4755 = vmatpush.bf16.msra.mxu0 %v3442
        %4756 = vmatpush.bf16.msra.mxu0 %v3434
        %4757 = vmatpush.bf16.msra.mxu0 %v3426
        %4758 = vmatpush.bf16.msra.mxu0 %v3418
        %4759 = vmatmul.bf16.gmra.mxu0 %v1341
        %v4760 = vpop.f32.mrf.mxu0
        %v4761 = vadd.f32 %v1866, %v4760
        %v4762 = vpop.f32.mrf.mxu0
        %4763 = vdwg.mxu0
        %4764 = vmatpush.bf16.msra.mxu0 %v3538
        %4765 = vmatpush.bf16.msra.mxu0 %v3530
        %4766 = vmatpush.bf16.msra.mxu0 %v3522
        %4767 = vmatpush.bf16.msra.mxu0 %v3514
        %4768 = vmatpush.bf16.msra.mxu0 %v3506
        %4769 = vmatpush.bf16.msra.mxu0 %v3498
        %4770 = vmatpush.bf16.msra.mxu0 %v3490
        %4771 = vmatpush.bf16.msra.mxu0 %v3482
        %4772 = vmatmul.bf16.gmra.mxu0 %v1342
        %v4773 = vpop.f32.mrf.mxu0
        %v4774 = vadd.f32 %v4761, %v4773
        %v4775 = vpop.f32.mrf.mxu0
        %4776 = vdwg.mxu0
        %4777 = vmatpush.bf16.msra.mxu0 %v3602
        %4778 = vmatpush.bf16.msra.mxu0 %v3594
        %4779 = vmatpush.bf16.msra.mxu0 %v3586
        %4780 = vmatpush.bf16.msra.mxu0 %v3578
        %4781 = vmatpush.bf16.msra.mxu0 %v3570
        %4782 = vmatpush.bf16.msra.mxu0 %v3562
        %4783 = vmatpush.bf16.msra.mxu0 %v3554
        %4784 = vmatpush.bf16.msra.mxu0 %v3546
        %4785 = vmatmul.bf16.gmra.mxu0 %v1343
        %v4786 = vpop.f32.mrf.mxu0
        %v4787 = vadd.f32 %v4774, %v4786
        %v4788 = vpop.f32.mrf.mxu0
        %4789 = vdwg.mxu0
        %4790 = vmatpush.bf16.msra.mxu0 %v3666
        %4791 = vmatpush.bf16.msra.mxu0 %v3658
        %4792 = vmatpush.bf16.msra.mxu0 %v3650
        %4793 = vmatpush.bf16.msra.mxu0 %v3642
        %4794 = vmatpush.bf16.msra.mxu0 %v3634
        %4795 = vmatpush.bf16.msra.mxu0 %v3626
        %4796 = vmatpush.bf16.msra.mxu0 %v3618
        %4797 = vmatpush.bf16.msra.mxu0 %v3610
        %4798 = vmatmul.bf16.gmra.mxu0 %v1344
        %v4799 = vpop.f32.mrf.mxu0
        %v4800 = vadd.f32 %v4787, %v4799
        %v4801 = vpop.f32.mrf.mxu0
        %4802 = vdwg.mxu0
        %4803 = vmatpush.bf16.msra.mxu0 %v3730
        %4804 = vmatpush.bf16.msra.mxu0 %v3722
        %4805 = vmatpush.bf16.msra.mxu0 %v3714
        %4806 = vmatpush.bf16.msra.mxu0 %v3706
        %4807 = vmatpush.bf16.msra.mxu0 %v3698
        %4808 = vmatpush.bf16.msra.mxu0 %v3690
        %4809 = vmatpush.bf16.msra.mxu0 %v3682
        %4810 = vmatpush.bf16.msra.mxu0 %v3674
        %4811 = vmatmul.bf16.gmra.mxu0 %v1345
        %v4812 = vpop.f32.mrf.mxu0
        %v4813 = vadd.f32 %v4800, %v4812
        %v4814 = vpop.f32.mrf.mxu0
        %4815 = vdwg.mxu0
        %4816 = vmatpush.bf16.msra.mxu0 %v3794
        %4817 = vmatpush.bf16.msra.mxu0 %v3786
        %4818 = vmatpush.bf16.msra.mxu0 %v3778
        %4819 = vmatpush.bf16.msra.mxu0 %v3770
        %4820 = vmatpush.bf16.msra.mxu0 %v3762
        %4821 = vmatpush.bf16.msra.mxu0 %v3754
        %4822 = vmatpush.bf16.msra.mxu0 %v3746
        %4823 = vmatpush.bf16.msra.mxu0 %v3738
        %4824 = vmatmul.bf16.gmra.mxu0 %v1346
        %v4825 = vpop.f32.mrf.mxu0
        %v4826 = vadd.f32 %v4813, %v4825
        %v4827 = vpop.f32.mrf.mxu0
        %4828 = vdwg.mxu0
        %4829 = vmatpush.bf16.msra.mxu0 %v3858
        %4830 = vmatpush.bf16.msra.mxu0 %v3850
        %4831 = vmatpush.bf16.msra.mxu0 %v3842
        %4832 = vmatpush.bf16.msra.mxu0 %v3834
        %4833 = vmatpush.bf16.msra.mxu0 %v3826
        %4834 = vmatpush.bf16.msra.mxu0 %v3818
        %4835 = vmatpush.bf16.msra.mxu0 %v3810
        %4836 = vmatpush.bf16.msra.mxu0 %v3802
        %4837 = vmatmul.bf16.gmra.mxu0 %v1347
        %v4838 = vpop.f32.mrf.mxu0
        %v4839 = vadd.f32 %v4826, %v4838
        %v4840 = vpop.f32.mrf.mxu0
        %4841 = vdwg.mxu0
        %4842 = vmatpush.bf16.msra.mxu0 %v3922
        %4843 = vmatpush.bf16.msra.mxu0 %v3914
        %4844 = vmatpush.bf16.msra.mxu0 %v3906
        %4845 = vmatpush.bf16.msra.mxu0 %v3898
        %4846 = vmatpush.bf16.msra.mxu0 %v3890
        %4847 = vmatpush.bf16.msra.mxu0 %v3882
        %4848 = vmatpush.bf16.msra.mxu0 %v3874
        %4849 = vmatpush.bf16.msra.mxu0 %v3866
        %4850 = vmatmul.bf16.gmra.mxu0 %v1348
        %v4851 = vpop.f32.mrf.mxu0
        %v4852 = vadd.f32 %v4839, %v4851
        %v4853 = vpop.f32.mrf.mxu0
        %4854 = vdwg.mxu0
        %4855 = vmatpush.bf16.msra.mxu0 %v3475
        %4856 = vmatpush.bf16.msra.mxu0 %v3467
        %4857 = vmatpush.bf16.msra.mxu0 %v3459
        %4858 = vmatpush.bf16.msra.mxu0 %v3451
        %4859 = vmatpush.bf16.msra.mxu0 %v3443
        %4860 = vmatpush.bf16.msra.mxu0 %v3435
        %4861 = vmatpush.bf16.msra.mxu0 %v3427
        %4862 = vmatpush.bf16.msra.mxu0 %v3419
        %4863 = vmatmul.bf16.gmra.mxu0 %v1341
        %v4864 = vpop.f32.mrf.mxu0
        %v4865 = vadd.f32 %v1867, %v4864
        %v4866 = vpop.f32.mrf.mxu0
        %4867 = vdwg.mxu0
        %4868 = vmatpush.bf16.msra.mxu0 %v3539
        %4869 = vmatpush.bf16.msra.mxu0 %v3531
        %4870 = vmatpush.bf16.msra.mxu0 %v3523
        %4871 = vmatpush.bf16.msra.mxu0 %v3515
        %4872 = vmatpush.bf16.msra.mxu0 %v3507
        %4873 = vmatpush.bf16.msra.mxu0 %v3499
        %4874 = vmatpush.bf16.msra.mxu0 %v3491
        %4875 = vmatpush.bf16.msra.mxu0 %v3483
        %4876 = vmatmul.bf16.gmra.mxu0 %v1342
        %v4877 = vpop.f32.mrf.mxu0
        %v4878 = vadd.f32 %v4865, %v4877
        %v4879 = vpop.f32.mrf.mxu0
        %4880 = vdwg.mxu0
        %4881 = vmatpush.bf16.msra.mxu0 %v3603
        %4882 = vmatpush.bf16.msra.mxu0 %v3595
        %4883 = vmatpush.bf16.msra.mxu0 %v3587
        %4884 = vmatpush.bf16.msra.mxu0 %v3579
        %4885 = vmatpush.bf16.msra.mxu0 %v3571
        %4886 = vmatpush.bf16.msra.mxu0 %v3563
        %4887 = vmatpush.bf16.msra.mxu0 %v3555
        %4888 = vmatpush.bf16.msra.mxu0 %v3547
        %4889 = vmatmul.bf16.gmra.mxu0 %v1343
        %v4890 = vpop.f32.mrf.mxu0
        %v4891 = vadd.f32 %v4878, %v4890
        %v4892 = vpop.f32.mrf.mxu0
        %4893 = vdwg.mxu0
        %4894 = vmatpush.bf16.msra.mxu0 %v3667
        %4895 = vmatpush.bf16.msra.mxu0 %v3659
        %4896 = vmatpush.bf16.msra.mxu0 %v3651
        %4897 = vmatpush.bf16.msra.mxu0 %v3643
        %4898 = vmatpush.bf16.msra.mxu0 %v3635
        %4899 = vmatpush.bf16.msra.mxu0 %v3627
        %4900 = vmatpush.bf16.msra.mxu0 %v3619
        %4901 = vmatpush.bf16.msra.mxu0 %v3611
        %4902 = vmatmul.bf16.gmra.mxu0 %v1344
        %v4903 = vpop.f32.mrf.mxu0
        %v4904 = vadd.f32 %v4891, %v4903
        %v4905 = vpop.f32.mrf.mxu0
        %4906 = vdwg.mxu0
        %4907 = vmatpush.bf16.msra.mxu0 %v3731
        %4908 = vmatpush.bf16.msra.mxu0 %v3723
        %4909 = vmatpush.bf16.msra.mxu0 %v3715
        %4910 = vmatpush.bf16.msra.mxu0 %v3707
        %4911 = vmatpush.bf16.msra.mxu0 %v3699
        %4912 = vmatpush.bf16.msra.mxu0 %v3691
        %4913 = vmatpush.bf16.msra.mxu0 %v3683
        %4914 = vmatpush.bf16.msra.mxu0 %v3675
        %4915 = vmatmul.bf16.gmra.mxu0 %v1345
        %v4916 = vpop.f32.mrf.mxu0
        %v4917 = vadd.f32 %v4904, %v4916
        %v4918 = vpop.f32.mrf.mxu0
        %4919 = vdwg.mxu0
        %4920 = vmatpush.bf16.msra.mxu0 %v3795
        %4921 = vmatpush.bf16.msra.mxu0 %v3787
        %4922 = vmatpush.bf16.msra.mxu0 %v3779
        %4923 = vmatpush.bf16.msra.mxu0 %v3771
        %4924 = vmatpush.bf16.msra.mxu0 %v3763
        %4925 = vmatpush.bf16.msra.mxu0 %v3755
        %4926 = vmatpush.bf16.msra.mxu0 %v3747
        %4927 = vmatpush.bf16.msra.mxu0 %v3739
        %4928 = vmatmul.bf16.gmra.mxu0 %v1346
        %v4929 = vpop.f32.mrf.mxu0
        %v4930 = vadd.f32 %v4917, %v4929
        %v4931 = vpop.f32.mrf.mxu0
        %4932 = vdwg.mxu0
        %4933 = vmatpush.bf16.msra.mxu0 %v3859
        %4934 = vmatpush.bf16.msra.mxu0 %v3851
        %4935 = vmatpush.bf16.msra.mxu0 %v3843
        %4936 = vmatpush.bf16.msra.mxu0 %v3835
        %4937 = vmatpush.bf16.msra.mxu0 %v3827
        %4938 = vmatpush.bf16.msra.mxu0 %v3819
        %4939 = vmatpush.bf16.msra.mxu0 %v3811
        %4940 = vmatpush.bf16.msra.mxu0 %v3803
        %4941 = vmatmul.bf16.gmra.mxu0 %v1347
        %v4942 = vpop.f32.mrf.mxu0
        %v4943 = vadd.f32 %v4930, %v4942
        %v4944 = vpop.f32.mrf.mxu0
        %4945 = vdwg.mxu0
        %4946 = vmatpush.bf16.msra.mxu0 %v3923
        %4947 = vmatpush.bf16.msra.mxu0 %v3915
        %4948 = vmatpush.bf16.msra.mxu0 %v3907
        %4949 = vmatpush.bf16.msra.mxu0 %v3899
        %4950 = vmatpush.bf16.msra.mxu0 %v3891
        %4951 = vmatpush.bf16.msra.mxu0 %v3883
        %4952 = vmatpush.bf16.msra.mxu0 %v3875
        %4953 = vmatpush.bf16.msra.mxu0 %v3867
        %4954 = vmatmul.bf16.gmra.mxu0 %v1348
        %v4955 = vpop.f32.mrf.mxu0
        %v4956 = vadd.f32 %v4943, %v4955
        %v4957 = vpop.f32.mrf.mxu0
        %4958 = vdwg.mxu0
        %4959 = vmatpush.bf16.msra.mxu0 %v3476
        %4960 = vmatpush.bf16.msra.mxu0 %v3468
        %4961 = vmatpush.bf16.msra.mxu0 %v3460
        %4962 = vmatpush.bf16.msra.mxu0 %v3452
        %4963 = vmatpush.bf16.msra.mxu0 %v3444
        %4964 = vmatpush.bf16.msra.mxu0 %v3436
        %4965 = vmatpush.bf16.msra.mxu0 %v3428
        %4966 = vmatpush.bf16.msra.mxu0 %v3420
        %4967 = vmatmul.bf16.gmra.mxu0 %v1341
        %v4968 = vpop.f32.mrf.mxu0
        %v4969 = vadd.f32 %v1868, %v4968
        %v4970 = vpop.f32.mrf.mxu0
        %4971 = vdwg.mxu0
        %4972 = vmatpush.bf16.msra.mxu0 %v3540
        %4973 = vmatpush.bf16.msra.mxu0 %v3532
        %4974 = vmatpush.bf16.msra.mxu0 %v3524
        %4975 = vmatpush.bf16.msra.mxu0 %v3516
        %4976 = vmatpush.bf16.msra.mxu0 %v3508
        %4977 = vmatpush.bf16.msra.mxu0 %v3500
        %4978 = vmatpush.bf16.msra.mxu0 %v3492
        %4979 = vmatpush.bf16.msra.mxu0 %v3484
        %4980 = vmatmul.bf16.gmra.mxu0 %v1342
        %v4981 = vpop.f32.mrf.mxu0
        %v4982 = vadd.f32 %v4969, %v4981
        %v4983 = vpop.f32.mrf.mxu0
        %4984 = vdwg.mxu0
        %4985 = vmatpush.bf16.msra.mxu0 %v3604
        %4986 = vmatpush.bf16.msra.mxu0 %v3596
        %4987 = vmatpush.bf16.msra.mxu0 %v3588
        %4988 = vmatpush.bf16.msra.mxu0 %v3580
        %4989 = vmatpush.bf16.msra.mxu0 %v3572
        %4990 = vmatpush.bf16.msra.mxu0 %v3564
        %4991 = vmatpush.bf16.msra.mxu0 %v3556
        %4992 = vmatpush.bf16.msra.mxu0 %v3548
        %4993 = vmatmul.bf16.gmra.mxu0 %v1343
        %v4994 = vpop.f32.mrf.mxu0
        %v4995 = vadd.f32 %v4982, %v4994
        %v4996 = vpop.f32.mrf.mxu0
        %4997 = vdwg.mxu0
        %4998 = vmatpush.bf16.msra.mxu0 %v3668
        %4999 = vmatpush.bf16.msra.mxu0 %v3660
        %5000 = vmatpush.bf16.msra.mxu0 %v3652
        %5001 = vmatpush.bf16.msra.mxu0 %v3644
        %5002 = vmatpush.bf16.msra.mxu0 %v3636
        %5003 = vmatpush.bf16.msra.mxu0 %v3628
        %5004 = vmatpush.bf16.msra.mxu0 %v3620
        %5005 = vmatpush.bf16.msra.mxu0 %v3612
        %5006 = vmatmul.bf16.gmra.mxu0 %v1344
        %v5007 = vpop.f32.mrf.mxu0
        %v5008 = vadd.f32 %v4995, %v5007
        %v5009 = vpop.f32.mrf.mxu0
        %5010 = vdwg.mxu0
        %5011 = vmatpush.bf16.msra.mxu0 %v3732
        %5012 = vmatpush.bf16.msra.mxu0 %v3724
        %5013 = vmatpush.bf16.msra.mxu0 %v3716
        %5014 = vmatpush.bf16.msra.mxu0 %v3708
        %5015 = vmatpush.bf16.msra.mxu0 %v3700
        %5016 = vmatpush.bf16.msra.mxu0 %v3692
        %5017 = vmatpush.bf16.msra.mxu0 %v3684
        %5018 = vmatpush.bf16.msra.mxu0 %v3676
        %5019 = vmatmul.bf16.gmra.mxu0 %v1345
        %v5020 = vpop.f32.mrf.mxu0
        %v5021 = vadd.f32 %v5008, %v5020
        %v5022 = vpop.f32.mrf.mxu0
        %5023 = vdwg.mxu0
        %5024 = vmatpush.bf16.msra.mxu0 %v3796
        %5025 = vmatpush.bf16.msra.mxu0 %v3788
        %5026 = vmatpush.bf16.msra.mxu0 %v3780
        %5027 = vmatpush.bf16.msra.mxu0 %v3772
        %5028 = vmatpush.bf16.msra.mxu0 %v3764
        %5029 = vmatpush.bf16.msra.mxu0 %v3756
        %5030 = vmatpush.bf16.msra.mxu0 %v3748
        %5031 = vmatpush.bf16.msra.mxu0 %v3740
        %5032 = vmatmul.bf16.gmra.mxu0 %v1346
        %v5033 = vpop.f32.mrf.mxu0
        %v5034 = vadd.f32 %v5021, %v5033
        %v5035 = vpop.f32.mrf.mxu0
        %5036 = vdwg.mxu0
        %5037 = vmatpush.bf16.msra.mxu0 %v3860
        %5038 = vmatpush.bf16.msra.mxu0 %v3852
        %5039 = vmatpush.bf16.msra.mxu0 %v3844
        %5040 = vmatpush.bf16.msra.mxu0 %v3836
        %5041 = vmatpush.bf16.msra.mxu0 %v3828
        %5042 = vmatpush.bf16.msra.mxu0 %v3820
        %5043 = vmatpush.bf16.msra.mxu0 %v3812
        %5044 = vmatpush.bf16.msra.mxu0 %v3804
        %5045 = vmatmul.bf16.gmra.mxu0 %v1347
        %v5046 = vpop.f32.mrf.mxu0
        %v5047 = vadd.f32 %v5034, %v5046
        %v5048 = vpop.f32.mrf.mxu0
        %5049 = vdwg.mxu0
        %5050 = vmatpush.bf16.msra.mxu0 %v3924
        %5051 = vmatpush.bf16.msra.mxu0 %v3916
        %5052 = vmatpush.bf16.msra.mxu0 %v3908
        %5053 = vmatpush.bf16.msra.mxu0 %v3900
        %5054 = vmatpush.bf16.msra.mxu0 %v3892
        %5055 = vmatpush.bf16.msra.mxu0 %v3884
        %5056 = vmatpush.bf16.msra.mxu0 %v3876
        %5057 = vmatpush.bf16.msra.mxu0 %v3868
        %5058 = vmatmul.bf16.gmra.mxu0 %v1348
        %v5059 = vpop.f32.mrf.mxu0
        %v5060 = vadd.f32 %v5047, %v5059
        %v5061 = vpop.f32.mrf.mxu0
        %5062 = vdwg.mxu0
        %5063 = vmatpush.bf16.msra.mxu0 %v3477
        %5064 = vmatpush.bf16.msra.mxu0 %v3469
        %5065 = vmatpush.bf16.msra.mxu0 %v3461
        %5066 = vmatpush.bf16.msra.mxu0 %v3453
        %5067 = vmatpush.bf16.msra.mxu0 %v3445
        %5068 = vmatpush.bf16.msra.mxu0 %v3437
        %5069 = vmatpush.bf16.msra.mxu0 %v3429
        %5070 = vmatpush.bf16.msra.mxu0 %v3421
        %5071 = vmatmul.bf16.gmra.mxu0 %v1341
        %v5072 = vpop.f32.mrf.mxu0
        %v5073 = vadd.f32 %v1869, %v5072
        %v5074 = vpop.f32.mrf.mxu0
        %5075 = vdwg.mxu0
        %5076 = vmatpush.bf16.msra.mxu0 %v3541
        %5077 = vmatpush.bf16.msra.mxu0 %v3533
        %5078 = vmatpush.bf16.msra.mxu0 %v3525
        %5079 = vmatpush.bf16.msra.mxu0 %v3517
        %5080 = vmatpush.bf16.msra.mxu0 %v3509
        %5081 = vmatpush.bf16.msra.mxu0 %v3501
        %5082 = vmatpush.bf16.msra.mxu0 %v3493
        %5083 = vmatpush.bf16.msra.mxu0 %v3485
        %5084 = vmatmul.bf16.gmra.mxu0 %v1342
        %v5085 = vpop.f32.mrf.mxu0
        %v5086 = vadd.f32 %v5073, %v5085
        %v5087 = vpop.f32.mrf.mxu0
        %5088 = vdwg.mxu0
        %5089 = vmatpush.bf16.msra.mxu0 %v3605
        %5090 = vmatpush.bf16.msra.mxu0 %v3597
        %5091 = vmatpush.bf16.msra.mxu0 %v3589
        %5092 = vmatpush.bf16.msra.mxu0 %v3581
        %5093 = vmatpush.bf16.msra.mxu0 %v3573
        %5094 = vmatpush.bf16.msra.mxu0 %v3565
        %5095 = vmatpush.bf16.msra.mxu0 %v3557
        %5096 = vmatpush.bf16.msra.mxu0 %v3549
        %5097 = vmatmul.bf16.gmra.mxu0 %v1343
        %v5098 = vpop.f32.mrf.mxu0
        %v5099 = vadd.f32 %v5086, %v5098
        %v5100 = vpop.f32.mrf.mxu0
        %5101 = vdwg.mxu0
        %5102 = vmatpush.bf16.msra.mxu0 %v3669
        %5103 = vmatpush.bf16.msra.mxu0 %v3661
        %5104 = vmatpush.bf16.msra.mxu0 %v3653
        %5105 = vmatpush.bf16.msra.mxu0 %v3645
        %5106 = vmatpush.bf16.msra.mxu0 %v3637
        %5107 = vmatpush.bf16.msra.mxu0 %v3629
        %5108 = vmatpush.bf16.msra.mxu0 %v3621
        %5109 = vmatpush.bf16.msra.mxu0 %v3613
        %5110 = vmatmul.bf16.gmra.mxu0 %v1344
        %v5111 = vpop.f32.mrf.mxu0
        %v5112 = vadd.f32 %v5099, %v5111
        %v5113 = vpop.f32.mrf.mxu0
        %5114 = vdwg.mxu0
        %5115 = vmatpush.bf16.msra.mxu0 %v3733
        %5116 = vmatpush.bf16.msra.mxu0 %v3725
        %5117 = vmatpush.bf16.msra.mxu0 %v3717
        %5118 = vmatpush.bf16.msra.mxu0 %v3709
        %5119 = vmatpush.bf16.msra.mxu0 %v3701
        %5120 = vmatpush.bf16.msra.mxu0 %v3693
        %5121 = vmatpush.bf16.msra.mxu0 %v3685
        %5122 = vmatpush.bf16.msra.mxu0 %v3677
        %5123 = vmatmul.bf16.gmra.mxu0 %v1345
        %v5124 = vpop.f32.mrf.mxu0
        %v5125 = vadd.f32 %v5112, %v5124
        %v5126 = vpop.f32.mrf.mxu0
        %5127 = vdwg.mxu0
        %5128 = vmatpush.bf16.msra.mxu0 %v3797
        %5129 = vmatpush.bf16.msra.mxu0 %v3789
        %5130 = vmatpush.bf16.msra.mxu0 %v3781
        %5131 = vmatpush.bf16.msra.mxu0 %v3773
        %5132 = vmatpush.bf16.msra.mxu0 %v3765
        %5133 = vmatpush.bf16.msra.mxu0 %v3757
        %5134 = vmatpush.bf16.msra.mxu0 %v3749
        %5135 = vmatpush.bf16.msra.mxu0 %v3741
        %5136 = vmatmul.bf16.gmra.mxu0 %v1346
        %v5137 = vpop.f32.mrf.mxu0
        %v5138 = vadd.f32 %v5125, %v5137
        %v5139 = vpop.f32.mrf.mxu0
        %5140 = vdwg.mxu0
        %5141 = vmatpush.bf16.msra.mxu0 %v3861
        %5142 = vmatpush.bf16.msra.mxu0 %v3853
        %5143 = vmatpush.bf16.msra.mxu0 %v3845
        %5144 = vmatpush.bf16.msra.mxu0 %v3837
        %5145 = vmatpush.bf16.msra.mxu0 %v3829
        %5146 = vmatpush.bf16.msra.mxu0 %v3821
        %5147 = vmatpush.bf16.msra.mxu0 %v3813
        %5148 = vmatpush.bf16.msra.mxu0 %v3805
        %5149 = vmatmul.bf16.gmra.mxu0 %v1347
        %v5150 = vpop.f32.mrf.mxu0
        %v5151 = vadd.f32 %v5138, %v5150
        %v5152 = vpop.f32.mrf.mxu0
        %5153 = vdwg.mxu0
        %5154 = vmatpush.bf16.msra.mxu0 %v3925
        %5155 = vmatpush.bf16.msra.mxu0 %v3917
        %5156 = vmatpush.bf16.msra.mxu0 %v3909
        %5157 = vmatpush.bf16.msra.mxu0 %v3901
        %5158 = vmatpush.bf16.msra.mxu0 %v3893
        %5159 = vmatpush.bf16.msra.mxu0 %v3885
        %5160 = vmatpush.bf16.msra.mxu0 %v3877
        %5161 = vmatpush.bf16.msra.mxu0 %v3869
        %5162 = vmatmul.bf16.gmra.mxu0 %v1348
        %v5163 = vpop.f32.mrf.mxu0
        %v5164 = vadd.f32 %v5151, %v5163
        %v5165 = vpop.f32.mrf.mxu0
        %5166 = vdwg.mxu0
        %5167 = vmatpush.bf16.msra.mxu0 %v3478
        %5168 = vmatpush.bf16.msra.mxu0 %v3470
        %5169 = vmatpush.bf16.msra.mxu0 %v3462
        %5170 = vmatpush.bf16.msra.mxu0 %v3454
        %5171 = vmatpush.bf16.msra.mxu0 %v3446
        %5172 = vmatpush.bf16.msra.mxu0 %v3438
        %5173 = vmatpush.bf16.msra.mxu0 %v3430
        %5174 = vmatpush.bf16.msra.mxu0 %v3422
        %5175 = vmatmul.bf16.gmra.mxu0 %v1341
        %v5176 = vpop.f32.mrf.mxu0
        %v5177 = vadd.f32 %v1870, %v5176
        %v5178 = vpop.f32.mrf.mxu0
        %5179 = vdwg.mxu0
        %5180 = vmatpush.bf16.msra.mxu0 %v3542
        %5181 = vmatpush.bf16.msra.mxu0 %v3534
        %5182 = vmatpush.bf16.msra.mxu0 %v3526
        %5183 = vmatpush.bf16.msra.mxu0 %v3518
        %5184 = vmatpush.bf16.msra.mxu0 %v3510
        %5185 = vmatpush.bf16.msra.mxu0 %v3502
        %5186 = vmatpush.bf16.msra.mxu0 %v3494
        %5187 = vmatpush.bf16.msra.mxu0 %v3486
        %5188 = vmatmul.bf16.gmra.mxu0 %v1342
        %v5189 = vpop.f32.mrf.mxu0
        %v5190 = vadd.f32 %v5177, %v5189
        %v5191 = vpop.f32.mrf.mxu0
        %5192 = vdwg.mxu0
        %5193 = vmatpush.bf16.msra.mxu0 %v3606
        %5194 = vmatpush.bf16.msra.mxu0 %v3598
        %5195 = vmatpush.bf16.msra.mxu0 %v3590
        %5196 = vmatpush.bf16.msra.mxu0 %v3582
        %5197 = vmatpush.bf16.msra.mxu0 %v3574
        %5198 = vmatpush.bf16.msra.mxu0 %v3566
        %5199 = vmatpush.bf16.msra.mxu0 %v3558
        %5200 = vmatpush.bf16.msra.mxu0 %v3550
        %5201 = vmatmul.bf16.gmra.mxu0 %v1343
        %v5202 = vpop.f32.mrf.mxu0
        %v5203 = vadd.f32 %v5190, %v5202
        %v5204 = vpop.f32.mrf.mxu0
        %5205 = vdwg.mxu0
        %5206 = vmatpush.bf16.msra.mxu0 %v3670
        %5207 = vmatpush.bf16.msra.mxu0 %v3662
        %5208 = vmatpush.bf16.msra.mxu0 %v3654
        %5209 = vmatpush.bf16.msra.mxu0 %v3646
        %5210 = vmatpush.bf16.msra.mxu0 %v3638
        %5211 = vmatpush.bf16.msra.mxu0 %v3630
        %5212 = vmatpush.bf16.msra.mxu0 %v3622
        %5213 = vmatpush.bf16.msra.mxu0 %v3614
        %5214 = vmatmul.bf16.gmra.mxu0 %v1344
        %v5215 = vpop.f32.mrf.mxu0
        %v5216 = vadd.f32 %v5203, %v5215
        %v5217 = vpop.f32.mrf.mxu0
        %5218 = vdwg.mxu0
        %5219 = vmatpush.bf16.msra.mxu0 %v3734
        %5220 = vmatpush.bf16.msra.mxu0 %v3726
        %5221 = vmatpush.bf16.msra.mxu0 %v3718
        %5222 = vmatpush.bf16.msra.mxu0 %v3710
        %5223 = vmatpush.bf16.msra.mxu0 %v3702
        %5224 = vmatpush.bf16.msra.mxu0 %v3694
        %5225 = vmatpush.bf16.msra.mxu0 %v3686
        %5226 = vmatpush.bf16.msra.mxu0 %v3678
        %5227 = vmatmul.bf16.gmra.mxu0 %v1345
        %v5228 = vpop.f32.mrf.mxu0
        %v5229 = vadd.f32 %v5216, %v5228
        %v5230 = vpop.f32.mrf.mxu0
        %5231 = vdwg.mxu0
        %5232 = vmatpush.bf16.msra.mxu0 %v3798
        %5233 = vmatpush.bf16.msra.mxu0 %v3790
        %5234 = vmatpush.bf16.msra.mxu0 %v3782
        %5235 = vmatpush.bf16.msra.mxu0 %v3774
        %5236 = vmatpush.bf16.msra.mxu0 %v3766
        %5237 = vmatpush.bf16.msra.mxu0 %v3758
        %5238 = vmatpush.bf16.msra.mxu0 %v3750
        %5239 = vmatpush.bf16.msra.mxu0 %v3742
        %5240 = vmatmul.bf16.gmra.mxu0 %v1346
        %v5241 = vpop.f32.mrf.mxu0
        %v5242 = vadd.f32 %v5229, %v5241
        %v5243 = vpop.f32.mrf.mxu0
        %5244 = vdwg.mxu0
        %5245 = vmatpush.bf16.msra.mxu0 %v3862
        %5246 = vmatpush.bf16.msra.mxu0 %v3854
        %5247 = vmatpush.bf16.msra.mxu0 %v3846
        %5248 = vmatpush.bf16.msra.mxu0 %v3838
        %5249 = vmatpush.bf16.msra.mxu0 %v3830
        %5250 = vmatpush.bf16.msra.mxu0 %v3822
        %5251 = vmatpush.bf16.msra.mxu0 %v3814
        %5252 = vmatpush.bf16.msra.mxu0 %v3806
        %5253 = vmatmul.bf16.gmra.mxu0 %v1347
        %v5254 = vpop.f32.mrf.mxu0
        %v5255 = vadd.f32 %v5242, %v5254
        %v5256 = vpop.f32.mrf.mxu0
        %5257 = vdwg.mxu0
        %5258 = vmatpush.bf16.msra.mxu0 %v3926
        %5259 = vmatpush.bf16.msra.mxu0 %v3918
        %5260 = vmatpush.bf16.msra.mxu0 %v3910
        %5261 = vmatpush.bf16.msra.mxu0 %v3902
        %5262 = vmatpush.bf16.msra.mxu0 %v3894
        %5263 = vmatpush.bf16.msra.mxu0 %v3886
        %5264 = vmatpush.bf16.msra.mxu0 %v3878
        %5265 = vmatpush.bf16.msra.mxu0 %v3870
        %5266 = vmatmul.bf16.gmra.mxu0 %v1348
        %v5267 = vpop.f32.mrf.mxu0
        %v5268 = vadd.f32 %v5255, %v5267
        %v5269 = vpop.f32.mrf.mxu0
        %5270 = vdwg.mxu0
        %v5279 = vrot.slane %v4644, 6
        %v5280 = vrot.slane %v4748, 4
        %v5281 = vrot.slane %v4852, 2
        %v5282 = vrot.slane %v5060, 6
        %v5283 = vrot.slane %v5164, 4
        %v5284 = vrot.slane %v5268, 2
        %vm5285 = vcmask 1041408
        %v5286 = vsel %vm5285, %v4540, %v5279
        %vm5287 = vcmask 1045508
        %v5288 = vsel %vm5287, %v5280, %v5281
        %vm5289 = vcmask 1043456
        %v5290 = vsel %vm5289, %v5286, %v5288
        %v5291 = vsel %vm5285, %v4956, %v5282
        %v5292 = vsel %vm5287, %v5283, %v5284
        %v5293 = vsel %vm5289, %v5291, %v5292
        %5296 = vst [vmem:[%s326] sm:$0xff] %v5290
        %5297 = vst [vmem:[%s326 + $0x8] sm:$0xff] %v5293
        %s5298 = sand.u32 %s147, 1
        %s5299 = scalar_lea.sflag [#allocation4], %s5298
        %s5300 = sand.u32 %s147, 1
        %s5301 = smul.addr %s5300, 16
        %s5302 = scalar_lea.vmem [#allocation11], %s5301
        // Predicated region
        $region61: #{tpu_custom_call.1} parent=39 // pred_check
          %p5303 = pneg %p157
        $region62: #{tpu_custom_call.1} parent=39 // pred_check_branch
          %5305 = sbr.rel (%p5303) target = $region64
        $region63: #{tpu_custom_call.1} parent=39 // pred_region
          %s5306 = smul.u32 8, %s24
          %5308 = vsyncadd %s5299, 0
          %s5309 = smul.addr %s5306, 2
          %s5310 = scalar_lea.hbm %s5, %s5309
          %s5312 = sshll.u32 %s5302, 4
          %s5313 = int_to_ptr.vmem [resolvable:$true] %s5312
          %s5314 = sshll.u32 %s5310, 4
          %s5315 = int_to_ptr.hbm [resolvable:$true] %s5314
          %5317 = dma.vmem_to_hbm [thread:$0]  %s5313, 256, %s5315, %s5299
        $region64: #{tpu_custom_call.1} parent=39 // pred_fallthru
          _
      $region40: #{tpu_custom_call.1} parent=5 // pred_fallthru
        _
      %p5318 = scmp.le.s32.totalorder 2, %s19
      // Predicated region
      $region65: #{tpu_custom_call.1} parent=5 // pred_check
        %p5319 = pneg %p5318
      $region66: #{tpu_custom_call.1} parent=5 // pred_check_branch
        %5321 = sbr.rel (%p5319) target = $region68
      $region67: #{tpu_custom_call.1} parent=5 // pred_region
        %s5322 = ssub.s32 %s19, 2
        // Predicated region
        $region69: #{tpu_custom_call.1} parent=67 // pred_check
          %p5323 = pneg %p163
        $region70: #{tpu_custom_call.1} parent=67 // pred_check_branch
          %5325 = sbr.rel (%p5323) target = $region72
        $region71: #{tpu_custom_call.1} parent=67 // pred_region
          %s5326 = sand.u32 %s148, 1
          %s5327 = scalar_lea.sflag [#allocation4], %s5326
          %s5328 = sand.u32 %s148, 1
          %s5329 = smul.addr %s5328, 16
          %s5330 = scalar_lea.vmem [#allocation11], %s5329
          %5332 = dma.done %s5327, 256
        $region72: #{tpu_custom_call.1} parent=67 // pred_fallthru
          _
      $region68: #{tpu_custom_call.1} parent=5 // pred_fallthru
        _
    $region6: #{tpu_custom_call.1} parent=1 // loop_footer
      %s23 = sadd.s32 1, %s19
    $region7: #{tpu_custom_call.1} parent=1 // loop_footer_branch
      %18 = sbr.rel target = $region3
    $region8: #{tpu_custom_call.1} parent=1 // loop_exit
      _
    %5333 = vsyncpa [#allocation3], 1
    %s5334 = scalar_lea.sflag [#allocation3], 1
    %5335 = vsyncpa %s5334, 1
    %5336 = vsyncpa [#allocation6], 1
    %5337 = vsyncpa [#allocation9], 1
    %s5338 = scalar_lea.sflag [#allocation9], 1
    %5339 = vsyncpa %s5338, 1
    %5340 = vsyncpa [#allocation4], 1
    %s5341 = scalar_lea.sflag [#allocation4], 1
    %5342 = vsyncpa %s5341, 1

</llo_original>
